<compile_context>
chip_gen: v7x
topology: tpu7x:2x2x1
jax: 0.10.0
libtpu: 0.0.40
codegen_flags: <defaults>
</compile_context>

<pallas_src>
import functools

import jax
import jax.numpy as jnp
import numpy as np
from jax import lax
from jax.experimental import pallas as pl
from jax.experimental.pallas import tpu as pltpu


# ----------------------------------------------------------------------------
# Tiled linear: y = x @ w_t (+ b), with w_t stored as (Cin, Cout)
# ----------------------------------------------------------------------------
def _linear_kernel(x_ref, w_ref, o_ref, acc_ref):
    @pl.when(pl.program_id(2) == 0)
    def _():
        acc_ref[...] = jnp.zeros_like(acc_ref)

    acc_ref[...] += jnp.dot(x_ref[...], w_ref[...],
                            preferred_element_type=jnp.float32)

    @pl.when(pl.program_id(2) == pl.num_programs(2) - 1)
    def _():
        o_ref[...] = acc_ref[...].astype(o_ref.dtype)


def _linear_bias_kernel(x_ref, w_ref, b_ref, o_ref, acc_ref):
    @pl.when(pl.program_id(2) == 0)
    def _():
        acc_ref[...] = jnp.zeros_like(acc_ref)

    acc_ref[...] += jnp.dot(x_ref[...], w_ref[...],
                            preferred_element_type=jnp.float32)

    @pl.when(pl.program_id(2) == pl.num_programs(2) - 1)
    def _():
        # bias added exactly once, on the final K step
        o_ref[...] = (acc_ref[...] + b_ref[...].astype(jnp.float32)).astype(o_ref.dtype)


def _round_up(x, m):
    return ((x + m - 1) // m) * m


def _fit_tile(dim, target, align):
    """Pick (tile, padded_dim) for one axis.

    If dim <= target the whole axis is one full-extent block (always satisfies
    the (8,128) rule). Otherwise prefer the largest align-multiple tile <=
    target that divides dim (no padding); fall back to `target` + zero padding.
    """
    if dim <= target:
        return dim, dim
    for t in range(target, align - 1, -align):
        if dim % t == 0:
            return t, dim
    return target, _round_up(dim, target)


def pallas_linear(x, w_t, b=None, *, tm=256, tn=256, tk=512):
    """x: (M, K), w_t: (K, Cout) pre-transposed, b: (Cout,) or None -> (M, Cout)."""
    M, K = x.shape
    K2, N = w_t.shape
    assert K == K2, (K, K2)

    tm_, Mp = _fit_tile(M, tm, 8)
    tn_, Np = _fit_tile(N, tn, 128)
    tk_, Kp = _fit_tile(K, tk, 128)

    xp = x if (Mp == M and Kp == K) else jnp.pad(x, ((0, Mp - M), (0, Kp - K)))
    wp = w_t if (Kp == K and Np == N) else jnp.pad(w_t, ((0, Kp - K), (0, Np - N)))

    grid = (Mp // tm_, Np // tn_, Kp // tk_)
    x_spec = pl.BlockSpec((tm_, tk_), lambda i, j, k: (i, k))
    w_spec = pl.BlockSpec((tk_, tn_), lambda i, j, k: (k, j))
    o_spec = pl.BlockSpec((tm_, tn_), lambda i, j, k: (i, j))
    out_shape = jax.ShapeDtypeStruct((Mp, Np), x.dtype)
    scratch = [pltpu.VMEM((tm_, tn_), jnp.float32)]
    cparams = pltpu.CompilerParams(
        dimension_semantics=("parallel", "parallel", "arbitrary"))

    if b is None:
        out = pl.pallas_call(
            _linear_kernel, out_shape=out_shape, grid=grid,
            in_specs=[x_spec, w_spec], out_specs=o_spec,
            scratch_shapes=scratch, compiler_params=cparams,
        )(xp, wp)
    else:
        bp = b.reshape(1, N)
        if Np != N:
            bp = jnp.pad(bp, ((0, 0), (0, Np - N)))
        b_spec = pl.BlockSpec((1, tn_), lambda i, j, k: (0, j))
        out = pl.pallas_call(
            _linear_bias_kernel, out_shape=out_shape, grid=grid,
            in_specs=[x_spec, w_spec, b_spec], out_specs=o_spec,
            scratch_shapes=scratch, compiler_params=cparams,
        )(xp, wp, bp)

    if Mp != M or Np != N:
        out = out[:M, :N]
    return out


# ----------------------------------------------------------------------------
# XCA attention core: one grid step per batch element, all heads batched
# ----------------------------------------------------------------------------
def _xca_attn_kernel(q_ref, k_ref, v_ref, temp_ref, o_ref):
    # q/k/v/o blocks: (1, H, hd, N); temperature block: (H, 1, 1)
    q = q_ref[0].astype(jnp.float32)   # (H, hd, N)
    k = k_ref[0].astype(jnp.float32)
    v = v_ref[0]

    # L2-normalize over tokens (lane axis). Matches F.normalize(eps=1e-12):
    #   x / max(||x||, eps) == x * rsqrt(max(||x||^2, eps^2))
    eps2 = jnp.float32(1e-24)
    q_inv = lax.rsqrt(jnp.maximum(jnp.sum(q * q, axis=-1, keepdims=True), eps2))
    k_inv = lax.rsqrt(jnp.maximum(jnp.sum(k * k, axis=-1, keepdims=True), eps2))
    qn = q * q_inv
    kn = k * k_inv

    # Cross-covariance attention for all heads at once: (H, hd, hd)
    attn = jnp.einsum("hdn,hen->hde", qn, kn,
                      preferred_element_type=jnp.float32)
    attn = attn * temp_ref[...]                       # per-head temperature
    attn = attn - jnp.max(attn, axis=-1, keepdims=True)
    p = jnp.exp(attn)
    p = p / jnp.sum(p, axis=-1, keepdims=True)
    # attn_drop with p=0.0 is the identity.

    out = jnp.einsum("hde,hen->hdn", p.astype(v.dtype), v,
                     preferred_element_type=jnp.float32)
    o_ref[0] = out.astype(o_ref.dtype)


def xca_attention(q, k, v, temperature):
    """q, k, v: (B, H, hd, N); temperature: (H,) -> (B, H, hd, N)."""
    B, H, hd, N = q.shape
    blk = pl.BlockSpec((1, H, hd, N), lambda b: (b, 0, 0, 0))
    t_spec = pl.BlockSpec((H, 1, 1), lambda b: (0, 0, 0))
    # TODO(synk): for very long sequences, tile N inside this kernel (two-pass
    # accumulation over N-chunks) so per-step VMEM stays bounded on v7x (64 MiB).
    return pl.pallas_call(
        _xca_attn_kernel,
        out_shape=jax.ShapeDtypeStruct((B, H, hd, N), q.dtype),
        grid=(B,),
        in_specs=[blk, blk, blk, t_spec],
        out_specs=blk,
        compiler_params=pltpu.CompilerParams(dimension_semantics=("parallel",)),
    )(q, k, v, temperature.reshape(H, 1, 1))


# ----------------------------------------------------------------------------
# Full XCA forward
# ----------------------------------------------------------------------------
def xca_forward(x, params, num_heads):
    B, N, C = x.shape
    H = num_heads
    hd = C // H

    # qkv projection (qkv_bias=False, matching the module default)
    qkv = pallas_linear(x.reshape(B * N, C), params["qkv_wt"], None)   # (B*N, 3C)
    qkv = qkv.reshape(B, N, 3, H, hd)

    # (B, N, H, hd) -> (B, H, hd, N); XLA fuses each slice+transpose into one copy.
    # TODO(synk): fold these layout passes into the kernels (transposed-matmul
    # qkv/proj formulation) once N is guaranteed to be a multiple of 128.
    q = jnp.transpose(qkv[:, :, 0], (0, 2, 3, 1))
    k = jnp.transpose(qkv[:, :, 1], (0, 2, 3, 1))
    v = jnp.transpose(qkv[:, :, 2], (0, 2, 3, 1))

    out = xca_attention(q, k, v, params["temperature"])                # (B, H, hd, N)

    # permute(0, 3, 1, 2).reshape(B, N, C)
    out = jnp.transpose(out, (0, 3, 1, 2)).reshape(B * N, C)

    # output projection (proj_drop with p=0.0 is the identity)
    out = pallas_linear(out, params["proj_wt"], params["proj_b"])
    return out.reshape(B, N, C)


# ----------------------------------------------------------------------------
# Deterministic parameter init (mimics PyTorch nn.Linear default init ranges).
# Linear weights are stored pre-transposed as (Cin, Cout) for the MXU kernels.
# ----------------------------------------------------------------------------
def init_params(key, dim, num_heads):
    k1, k2, k3, k4 = jax.random.split(key, 4)
    bound = 1.0 / np.sqrt(dim)
    qkv_wt = jax.random.uniform(k1, (dim, 3 * dim), jnp.float32, -bound, bound)
    proj_wt = jax.random.uniform(k2, (dim, dim), jnp.float32, -bound, bound)
    proj_b = jax.random.uniform(k3, (dim,), jnp.float32, -bound, bound)
    # torch inits temperature to ones; randomized here so the test actually
    # exercises the per-head scaling path.
    temperature = jax.random.uniform(k4, (num_heads,), jnp.float32, 0.5, 1.5)
    return {
        "qkv_wt": qkv_wt,
        "proj_wt": proj_wt,
        "proj_b": proj_b,
        "temperature": temperature,
    }


# ----------------------------------------------------------------------------
# Pure-JAX reference (mirrors the PyTorch forward exactly) for a sanity check
# ----------------------------------------------------------------------------
def xca_reference(x, params, num_heads):
    B, N, C = x.shape
    hd = C // num_heads
    qkv = x @ params["qkv_wt"]
    qkv = qkv.reshape(B, N, 3, num_heads, hd).transpose(2, 0, 3, 1, 4)
    q, k, v = qkv[0], qkv[1], qkv[2]
    q = jnp.swapaxes(q, -2, -1)
    k = jnp.swapaxes(k, -2, -1)
    v = jnp.swapaxes(v, -2, -1)
    eps = 1e-12
    q = q / jnp.maximum(jnp.linalg.norm(q, axis=-1, keepdims=True), eps)
    k = k / jnp.maximum(jnp.linalg.norm(k, axis=-1, keepdims=True), eps)
    temp = params["temperature"].reshape(1, num_heads, 1, 1)
    attn = jax.nn.softmax(q @ jnp.swapaxes(k, -2, -1) * temp, axis=-1)
    out = (attn @ v).transpose(0, 3, 1, 2).reshape(B, N, C)
    return out @ params["proj_wt"] + params["proj_b"]


if __name__ == "__main__":
    # Small but TPU-friendly shapes: N multiple of 128 (lane-dense attention
    # output blocks), C multiple of 128 (lane-dense linear tiles).
    B, N, C, num_heads = 2, 128, 128, 8   # head_dim = 16

    key = jax.random.PRNGKey(0)
    kx, kp = jax.random.split(key)
    x = jax.random.normal(kx, (B, N, C), jnp.float32)
    params = init_params(kp, C, num_heads)

    fwd = jax.jit(functools.partial(xca_forward, num_heads=num_heads))
    out = jax.block_until_ready(fwd(x, params))

    ref = xca_reference(x, params, num_heads)
    np.testing.assert_allclose(np.asarray(out), np.asarray(ref), atol=2e-4, rtol=2e-4)

    print("KERNEL_OK")
</pallas_src>

<mosaic_0001>
module attributes {stable_mosaic.version = 11 : i64} {
  func.func @_linear_kernel(%arg0: i32, %arg1: i32, %arg2: i32, %arg3: memref<256x128xf32, #tpu.memory_space<vmem>>, %arg4: memref<128x128xf32, #tpu.memory_space<vmem>>, %arg5: memref<256x128xf32, #tpu.memory_space<vmem>>, %arg6: memref<256x128xf32, #tpu.memory_space<vmem>>) attributes {dimension_semantics = [#tpu.dimension_semantics<parallel>, #tpu.dimension_semantics<parallel>, #tpu.dimension_semantics<arbitrary>], iteration_bounds = array<i64: 1, 3, 1>, scalar_prefetch = 0 : i64, scratch_operands = 1 : i64, tpu.core_type = #tpu.core_type<tc>, window_params = [{transform_indices = @transform_0, window_bounds = array<i64: 256, 128>}, {transform_indices = @transform_1, window_bounds = array<i64: 128, 128>}, {transform_indices = @transform_2, window_bounds = array<i64: 256, 128>}]} {
    %c0_i32 = arith.constant 0 : i32
    %0 = arith.cmpi eq, %arg2, %c0_i32 : i32
    %1 = arith.extui %0 : i1 to i32
    %c0_i32_0 = arith.constant 0 : i32
    %2 = arith.cmpi ne, %1, %c0_i32_0 : i32
    scf.if %2 {
      %cst_10 = arith.constant 0.000000e+00 : f32
      %12 = vector.broadcast %cst_10 : f32 to vector<256x128xf32>
      %c0_11 = arith.constant 0 : index
      %c0_12 = arith.constant 0 : index
      %13 = vector.load %arg6[%c0_11, %c0_12] : memref<256x128xf32, #tpu.memory_space<vmem>>, vector<256x128xf32>
      tpu.vector_store %arg6[%c0_11, %c0_12], %12 {strides = array<i32>} : memref<256x128xf32, #tpu.memory_space<vmem>>, vector<256x128xf32>,
    } else {
    }
    %c0 = arith.constant 0 : index
    %c0_1 = arith.constant 0 : index
    %3 = vector.load %arg6[%c0, %c0_1] : memref<256x128xf32, #tpu.memory_space<vmem>>, vector<256x128xf32>
    %c0_2 = arith.constant 0 : index
    %c0_3 = arith.constant 0 : index
    %4 = vector.load %arg3[%c0_2, %c0_3] : memref<256x128xf32, #tpu.memory_space<vmem>>, vector<256x128xf32>
    %c0_4 = arith.constant 0 : index
    %c0_5 = arith.constant 0 : index
    %5 = vector.load %arg4[%c0_4, %c0_5] : memref<128x128xf32, #tpu.memory_space<vmem>>, vector<128x128xf32>
    %cst = arith.constant dense<0.000000e+00> : vector<256x128xf32>
    %6 = tpu.matmul %4, %5, %cst {dimension_numbers = #tpu.dot_dimension_numbers<[1], [0], [0], [1], [0, 0, 1, 1], [], []>} : vector<256x128xf32>, vector<128x128xf32>, vector<256x128xf32> -> vector<256x128xf32>
    %7 = arith.addf %3, %6 : vector<256x128xf32>
    %c0_6 = arith.constant 0 : index
    %c0_7 = arith.constant 0 : index
    %8 = vector.load %arg6[%c0_6, %c0_7] : memref<256x128xf32, #tpu.memory_space<vmem>>, vector<256x128xf32>
    tpu.vector_store %arg6[%c0_6, %c0_7], %7 {strides = array<i32>} : memref<256x128xf32, #tpu.memory_space<vmem>>, vector<256x128xf32>,
    %c0_i32_8 = arith.constant 0 : i32
    %9 = arith.cmpi eq, %arg2, %c0_i32_8 : i32
    %10 = arith.extui %9 : i1 to i32
    %c0_i32_9 = arith.constant 0 : i32
    %11 = arith.cmpi ne, %10, %c0_i32_9 : i32
    scf.if %11 {
      %c0_10 = arith.constant 0 : index
      %c0_11 = arith.constant 0 : index
      %12 = vector.load %arg6[%c0_10, %c0_11] : memref<256x128xf32, #tpu.memory_space<vmem>>, vector<256x128xf32>
      %c0_12 = arith.constant 0 : index
      %c0_13 = arith.constant 0 : index
      %13 = vector.load %arg5[%c0_12, %c0_13] : memref<256x128xf32, #tpu.memory_space<vmem>>, vector<256x128xf32>
      tpu.vector_store %arg5[%c0_12, %c0_13], %12 {strides = array<i32>} : memref<256x128xf32, #tpu.memory_space<vmem>>, vector<256x128xf32>,
    } else {
    }
    return
  }
  func.func @transform_0(%arg0: i32, %arg1: i32, %arg2: i32) -> (i32, i32) {
    %c0_i32 = arith.constant 0 : i32
    return %arg0, %arg2 : i32, i32
  }
  func.func @transform_1(%arg0: i32, %arg1: i32, %arg2: i32) -> (i32, i32) {
    %c0_i32 = arith.constant 0 : i32
    return %arg2, %arg1 : i32, i32
  }
  func.func @transform_2(%arg0: i32, %arg1: i32, %arg2: i32) -> (i32, i32) {
    %c0_i32 = arith.constant 0 : i32
    return %arg0, %arg1 : i32, i32
  }
}

module attributes {stable_mosaic.version = 11 : i64} {
  func.func @_xca_attn_kernel(%arg0: i32, %arg1: memref<1x8x16x128xf32, #tpu.memory_space<vmem>>, %arg2: memref<1x8x16x128xf32, #tpu.memory_space<vmem>>, %arg3: memref<1x8x16x128xf32, #tpu.memory_space<vmem>>, %arg4: memref<8x1x1xf32, #tpu.memory_space<vmem>>, %arg5: memref<1x8x16x128xf32, #tpu.memory_space<vmem>>) attributes {dimension_semantics = [#tpu.dimension_semantics<parallel>], iteration_bounds = array<i64: 2>, scalar_prefetch = 0 : i64, scratch_operands = 0 : i64, tpu.core_type = #tpu.core_type<tc>, window_params = [{transform_indices = @transform_0, window_bounds = array<i64: 1, 8, 16, 128>}, {transform_indices = @transform_1, window_bounds = array<i64: 1, 8, 16, 128>}, {transform_indices = @transform_2, window_bounds = array<i64: 1, 8, 16, 128>}, {pipeline_mode = #tpu.pipeline_mode<synchronous>, transform_indices = @transform_3, window_bounds = array<i64: 8, 1, 1>}, {transform_indices = @transform_4, window_bounds = array<i64: 1, 8, 16, 128>}]} {
    %c0 = arith.constant 0 : index
    %c0_0 = arith.constant 0 : index
    %c0_1 = arith.constant 0 : index
    %c0_2 = arith.constant 0 : index
    %0 = vector.load %arg1[%c0, %c0_0, %c0_1, %c0_2] : memref<1x8x16x128xf32, #tpu.memory_space<vmem>>, vector<1x8x16x128xf32>
    %1 = vector.shape_cast %0 : vector<1x8x16x128xf32> to vector<8x16x128xf32>
    %c0_3 = arith.constant 0 : index
    %c0_4 = arith.constant 0 : index
    %c0_5 = arith.constant 0 : index
    %c0_6 = arith.constant 0 : index
    %2 = vector.load %arg2[%c0_3, %c0_4, %c0_5, %c0_6] : memref<1x8x16x128xf32, #tpu.memory_space<vmem>>, vector<1x8x16x128xf32>
    %3 = vector.shape_cast %2 : vector<1x8x16x128xf32> to vector<8x16x128xf32>
    %c0_7 = arith.constant 0 : index
    %c0_8 = arith.constant 0 : index
    %c0_9 = arith.constant 0 : index
    %c0_10 = arith.constant 0 : index
    %4 = vector.load %arg3[%c0_7, %c0_8, %c0_9, %c0_10] : memref<1x8x16x128xf32, #tpu.memory_space<vmem>>, vector<1x8x16x128xf32>
    %5 = vector.shape_cast %4 : vector<1x8x16x128xf32> to vector<8x16x128xf32>
    %6 = arith.mulf %1, %1 : vector<8x16x128xf32>
    %cst = arith.constant dense<0.000000e+00> : vector<8x16xf32>
    %7 = vector.multi_reduction <add>, %6, %cst [2] : vector<8x16x128xf32> to vector<8x16xf32>
    %8 = vector.shape_cast %7 : vector<8x16xf32> to vector<8x16x1xf32>
    %cst_11 = arith.constant 1.000000e-24 : f32
    %9 = vector.broadcast %cst_11 : f32 to vector<8x16x1xf32>
    %10 = arith.maximumf %8, %9 : vector<8x16x1xf32>
    %11 = math.rsqrt %10 : vector<8x16x1xf32>
    %12 = arith.mulf %3, %3 : vector<8x16x128xf32>
    %cst_12 = arith.constant dense<0.000000e+00> : vector<8x16xf32>
    %13 = vector.multi_reduction <add>, %12, %cst_12 [2] : vector<8x16x128xf32> to vector<8x16xf32>
    %14 = vector.shape_cast %13 : vector<8x16xf32> to vector<8x16x1xf32>
    %cst_13 = arith.constant 1.000000e-24 : f32
    %15 = vector.broadcast %cst_13 : f32 to vector<8x16x1xf32>
    %16 = arith.maximumf %14, %15 : vector<8x16x1xf32>
    %17 = math.rsqrt %16 : vector<8x16x1xf32>
    %18 = vector.broadcast %11 : vector<8x16x1xf32> to vector<8x16x128xf32>
    %19 = arith.mulf %1, %18 : vector<8x16x128xf32>
    %20 = vector.broadcast %17 : vector<8x16x1xf32> to vector<8x16x128xf32>
    %21 = arith.mulf %3, %20 : vector<8x16x128xf32>
    "tpu.trace_start"() <{level = 10 : i32, message = "hdn,hen->hde"}> : () -> ()
    %cst_14 = arith.constant dense<0.000000e+00> : vector<8x16x16xf32>
    %22 = tpu.matmul %19, %21, %cst_14 {dimension_numbers = #tpu.dot_dimension_numbers<[2], [2], [1], [1], [0, 0, 0, 1, 1, 1], [0], [0]>} : vector<8x16x128xf32>, vector<8x16x128xf32>, vector<8x16x16xf32> -> vector<8x16x16xf32>
    "tpu.trace_stop"() : () -> ()
    %c0_15 = arith.constant 0 : index
    %c0_16 = arith.constant 0 : index
    %c0_17 = arith.constant 0 : index
    %23 = vector.load %arg4[%c0_15, %c0_16, %c0_17] : memref<8x1x1xf32, #tpu.memory_space<vmem>>, vector<8x1x1xf32>
    %24 = vector.broadcast %23 : vector<8x1x1xf32> to vector<8x16x16xf32>
    %25 = arith.mulf %22, %24 : vector<8x16x16xf32>
    %cst_18 = arith.constant dense<0xFF800000> : vector<8x16xf32>
    %26 = vector.multi_reduction <maximumf>, %25, %cst_18 [2] : vector<8x16x16xf32> to vector<8x16xf32>
    %27 = vector.shape_cast %26 : vector<8x16xf32> to vector<8x16x1xf32>
    %28 = vector.broadcast %27 : vector<8x16x1xf32> to vector<8x16x16xf32>
    %29 = arith.subf %25, %28 : vector<8x16x16xf32>
    %30 = math.exp %29 : vector<8x16x16xf32>
    %cst_19 = arith.constant dense<0.000000e+00> : vector<8x16xf32>
    %31 = vector.multi_reduction <add>, %30, %cst_19 [2] : vector<8x16x16xf32> to vector<8x16xf32>
    %32 = vector.shape_cast %31 : vector<8x16xf32> to vector<8x16x1xf32>
    %33 = vector.broadcast %32 : vector<8x16x1xf32> to vector<8x16x16xf32>
    %34 = arith.divf %30, %33 : vector<8x16x16xf32>
    "tpu.trace_start"() <{level = 10 : i32, message = "hde,hen->hdn"}> : () -> ()
    %cst_20 = arith.constant dense<0.000000e+00> : vector<8x16x128xf32>
    %35 = tpu.matmul %34, %5, %cst_20 {dimension_numbers = #tpu.dot_dimension_numbers<[2], [1], [1], [2], [0, 0, 0, 1, 1, 2], [0], [0]>} : vector<8x16x16xf32>, vector<8x16x128xf32>, vector<8x16x128xf32> -> vector<8x16x128xf32>
    "tpu.trace_stop"() : () -> ()
    %c0_21 = arith.constant 0 : index
    %c0_22 = arith.constant 0 : index
    %c0_23 = arith.constant 0 : index
    %c0_24 = arith.constant 0 : index
    %36 = vector.load %arg5[%c0_21, %c0_22, %c0_23, %c0_24] : memref<1x8x16x128xf32, #tpu.memory_space<vmem>>, vector<1x8x16x128xf32>
    %37 = vector.shape_cast %36 : vector<1x8x16x128xf32> to vector<8x16x128xf32>
    %38 = vector.shape_cast %35 : vector<8x16x128xf32> to vector<1x8x16x128xf32>
    tpu.vector_store %arg5[%c0_21, %c0_22, %c0_23, %c0_24], %38 {strides = array<i32>} : memref<1x8x16x128xf32, #tpu.memory_space<vmem>>, vector<1x8x16x128xf32>,
    return
  }
  func.func @transform_0(%arg0: i32) -> (i32, i32, i32, i32) {
    %c0_i32 = arith.constant 0 : i32
    %c0_i32_0 = arith.constant 0 : i32
    %c0_i32_1 = arith.constant 0 : i32
    %c0_i32_2 = arith.constant 0 : i32
    return %arg0, %c0_i32, %c0_i32_0, %c0_i32_1 : i32, i32, i32, i32
  }
  func.func @transform_1(%arg0: i32) -> (i32, i32, i32, i32) {
    %c0_i32 = arith.constant 0 : i32
    %c0_i32_0 = arith.constant 0 : i32
    %c0_i32_1 = arith.constant 0 : i32
    %c0_i32_2 = arith.constant 0 : i32
    return %arg0, %c0_i32, %c0_i32_0, %c0_i32_1 : i32, i32, i32, i32
  }
  func.func @transform_2(%arg0: i32) -> (i32, i32, i32, i32) {
    %c0_i32 = arith.constant 0 : i32
    %c0_i32_0 = arith.constant 0 : i32
    %c0_i32_1 = arith.constant 0 : i32
    %c0_i32_2 = arith.constant 0 : i32
    return %arg0, %c0_i32, %c0_i32_0, %c0_i32_1 : i32, i32, i32, i32
  }
  func.func @transform_3(%arg0: i32) -> (i32, i32, i32) {
    %c0_i32 = arith.constant 0 : i32
    %c0_i32_0 = arith.constant 0 : i32
    %c0_i32_1 = arith.constant 0 : i32
    %c0_i32_2 = arith.constant 0 : i32
    return %c0_i32, %c0_i32_0, %c0_i32_1 : i32, i32, i32
  }
  func.func @transform_4(%arg0: i32) -> (i32, i32, i32, i32) {
    %c0_i32 = arith.constant 0 : i32
    %c0_i32_0 = arith.constant 0 : i32
    %c0_i32_1 = arith.constant 0 : i32
    %c0_i32_2 = arith.constant 0 : i32
    return %arg0, %c0_i32, %c0_i32_0, %c0_i32_1 : i32, i32, i32, i32
  }
}

module attributes {stable_mosaic.version = 11 : i64} {
  func.func @_linear_bias_kernel(%arg0: i32, %arg1: i32, %arg2: i32, %arg3: memref<256x128xf32, #tpu.memory_space<vmem>>, %arg4: memref<128x128xf32, #tpu.memory_space<vmem>>, %arg5: memref<1x128xf32, #tpu.memory_space<vmem>>, %arg6: memref<256x128xf32, #tpu.memory_space<vmem>>, %arg7: memref<256x128xf32, #tpu.memory_space<vmem>>) attributes {dimension_semantics = [#tpu.dimension_semantics<parallel>, #tpu.dimension_semantics<parallel>, #tpu.dimension_semantics<arbitrary>], iteration_bounds = array<i64: 1, 1, 1>, scalar_prefetch = 0 : i64, scratch_operands = 1 : i64, tpu.core_type = #tpu.core_type<tc>, window_params = [{transform_indices = @transform_0, window_bounds = array<i64: 256, 128>}, {transform_indices = @transform_1, window_bounds = array<i64: 128, 128>}, {transform_indices = @transform_2, window_bounds = array<i64: 1, 128>}, {transform_indices = @transform_3, window_bounds = array<i64: 256, 128>}]} {
    %c0_i32 = arith.constant 0 : i32
    %0 = arith.cmpi eq, %arg2, %c0_i32 : i32
    %1 = arith.extui %0 : i1 to i32
    %c0_i32_0 = arith.constant 0 : i32
    %2 = arith.cmpi ne, %1, %c0_i32_0 : i32
    scf.if %2 {
      %cst_10 = arith.constant 0.000000e+00 : f32
      %12 = vector.broadcast %cst_10 : f32 to vector<256x128xf32>
      %c0_11 = arith.constant 0 : index
      %c0_12 = arith.constant 0 : index
      %13 = vector.load %arg7[%c0_11, %c0_12] : memref<256x128xf32, #tpu.memory_space<vmem>>, vector<256x128xf32>
      tpu.vector_store %arg7[%c0_11, %c0_12], %12 {strides = array<i32>} : memref<256x128xf32, #tpu.memory_space<vmem>>, vector<256x128xf32>,
    } else {
    }
    %c0 = arith.constant 0 : index
    %c0_1 = arith.constant 0 : index
    %3 = vector.load %arg7[%c0, %c0_1] : memref<256x128xf32, #tpu.memory_space<vmem>>, vector<256x128xf32>
    %c0_2 = arith.constant 0 : index
    %c0_3 = arith.constant 0 : index
    %4 = vector.load %arg3[%c0_2, %c0_3] : memref<256x128xf32, #tpu.memory_space<vmem>>, vector<256x128xf32>
    %c0_4 = arith.constant 0 : index
    %c0_5 = arith.constant 0 : index
    %5 = vector.load %arg4[%c0_4, %c0_5] : memref<128x128xf32, #tpu.memory_space<vmem>>, vector<128x128xf32>
    %cst = arith.constant dense<0.000000e+00> : vector<256x128xf32>
    %6 = tpu.matmul %4, %5, %cst {dimension_numbers = #tpu.dot_dimension_numbers<[1], [0], [0], [1], [0, 0, 1, 1], [], []>} : vector<256x128xf32>, vector<128x128xf32>, vector<256x128xf32> -> vector<256x128xf32>
    %7 = arith.addf %3, %6 : vector<256x128xf32>
    %c0_6 = arith.constant 0 : index
    %c0_7 = arith.constant 0 : index
    %8 = vector.load %arg7[%c0_6, %c0_7] : memref<256x128xf32, #tpu.memory_space<vmem>>, vector<256x128xf32>
    tpu.vector_store %arg7[%c0_6, %c0_7], %7 {strides = array<i32>} : memref<256x128xf32, #tpu.memory_space<vmem>>, vector<256x128xf32>,
    %c0_i32_8 = arith.constant 0 : i32
    %9 = arith.cmpi eq, %arg2, %c0_i32_8 : i32
    %10 = arith.extui %9 : i1 to i32
    %c0_i32_9 = arith.constant 0 : i32
    %11 = arith.cmpi ne, %10, %c0_i32_9 : i32
    scf.if %11 {
      %c0_10 = arith.constant 0 : index
      %c0_11 = arith.constant 0 : index
      %12 = vector.load %arg7[%c0_10, %c0_11] : memref<256x128xf32, #tpu.memory_space<vmem>>, vector<256x128xf32>
      %c0_12 = arith.constant 0 : index
      %c0_13 = arith.constant 0 : index
      %13 = vector.load %arg5[%c0_12, %c0_13] : memref<1x128xf32, #tpu.memory_space<vmem>>, vector<1x128xf32>
      %14 = vector.broadcast %13 : vector<1x128xf32> to vector<256x128xf32>
      %15 = arith.addf %12, %14 : vector<256x128xf32>
      %c0_14 = arith.constant 0 : index
      %c0_15 = arith.constant 0 : index
      %16 = vector.load %arg6[%c0_14, %c0_15] : memref<256x128xf32, #tpu.memory_space<vmem>>, vector<256x128xf32>
      tpu.vector_store %arg6[%c0_14, %c0_15], %15 {strides = array<i32>} : memref<256x128xf32, #tpu.memory_space<vmem>>, vector<256x128xf32>,
    } else {
    }
    return
  }
  func.func @transform_0(%arg0: i32, %arg1: i32, %arg2: i32) -> (i32, i32) {
    %c0_i32 = arith.constant 0 : i32
    return %arg0, %arg2 : i32, i32
  }
  func.func @transform_1(%arg0: i32, %arg1: i32, %arg2: i32) -> (i32, i32) {
    %c0_i32 = arith.constant 0 : i32
    return %arg2, %arg1 : i32, i32
  }
  func.func @transform_2(%arg0: i32, %arg1: i32, %arg2: i32) -> (i32, i32) {
    %c0_i32 = arith.constant 0 : i32
    %c0_i32_0 = arith.constant 0 : i32
    return %c0_i32, %arg1 : i32, i32
  }
  func.func @transform_3(%arg0: i32, %arg1: i32, %arg2: i32) -> (i32, i32) {
    %c0_i32 = arith.constant 0 : i32
    return %arg0, %arg1 : i32, i32
  }
}

</mosaic_0001>

<llo_original>
// kernel: xca_forward.3
$region0: #{xca_forward.3}
  #allocation0 [shape = 'u32[]', space=smem, size = 0x4, offset = 0x4, fixed_abs, tag = 'smem constant byte address 0x4 - core index']
  #allocation1 [shape = 'u32[144,128]{1,0:T(1,128)}', space=vmem, size = 0x12000, scoped, tag = 'internal scratch']
  #allocation2 [shape = 'f32[256,128]{1,0:T(8,128)}', space=vmem, size = 0x20000, scoped, tag = 'scratch operand']
  %s0 = inlined_call_operand.hbm [shape: f32[256,128], index: 0, kind: input, shape index: {}]
  %s1 = inlined_call_operand.hbm [shape: f32[128,384], index: 1, kind: input, shape index: {}]
  %s2 = inlined_call_operand.vmem [shape: f32[256,384], index: 2, kind: output, shape index: {}]
  %s3 = sld [smem:[#allocation0]]
  $region91: #{xca_forward.3} parent=0
    _
  %s5 = ssub.s32 1, %s3
  %s6 = scalar_select 0, %s5, %s3
  $region1: #{xca_forward.3} parent=0
    #allocation3 [shape = 'u8[131072]{0}', space=vmem, size = 0x20000, scoped, tag = 'input window, operand 0, single buffered']
    #allocation4 [shape = 's32[2]{0}', space=sflag, size = 0x8, scoped, tag = 'scoped memory for xca_forward.3']
    #allocation5 [shape = 'u8[131072]{0}', space=vmem, size = 0x20000, scoped, tag = 'input window, operand 1']
    #allocation6 [shape = 's32[2]{0}', space=sflag, size = 0x8, scoped, tag = 'scoped memory for xca_forward.3']
    #allocation7 [shape = 'u8[262144]{0}', space=vmem, size = 0x40000, scoped, tag = 'output window, operand 0']
    %7 = vsyncpa [#allocation4], 0
    %8 = vsyncpa [#allocation6], 0
    %s9 = scalar_lea.sflag [#allocation6], 1
    %10 = vsyncpa %s9, 0
    loop: start=0, step=1, limit=5
    $region2: #{xca_forward.3} parent=1 // loop_pre_header
      _
    $region3: #{xca_forward.3} parent=1 // loop_header
      %s12 = sphi 0, %s16
      %p13 = scmp.ge.s32.totalorder %s12, 5
      %s19 = sphi 0, %s38
      %s20 = sphi 0, %s34
      %s21 = sphi 0, %s30
      %s22 = sphi 0, %s19
      %s23 = sphi 0, %s20
      %s24 = sphi 0, %s21
      %s25 = sphi 0, %s22
      %s26 = sphi 0, %s23
      %s27 = sphi 0, %s24
      %s43 = sphi 0, %s45
      %s46 = sphi 0, %s43
      %s47 = sphi 0, %s46
      %s63 = sphi 0, %s47
      %s71 = sphi 0, %s73
      %s74 = sphi 0, %s71
      %s75 = sphi 0, %s74
      %s91 = sphi 0, %s75
      %s99 = sphi 0, %s101
      %s102 = sphi 0, %s99
      %s103 = sphi 0, %s102
      %s119 = sphi 0, %s103
    $region4: #{xca_forward.3} parent=1 // loop_header_branch
      %15 = sbr.rel (%p13) target = $region8
    $region5: #{xca_forward.3} parent=1 // loop_body
      %s17 = ssub.s32 %s12, 1
      %s18 = ssub.s32 %s12, 2
      %s28 = sadd.s32 1, %s21
      %p29 = scmp.ge.s32.totalorder %s28, 1
      %s30 = scalar_select %p29, 0, %s28
      %s31 = sadd.s32 1, %s20
      %s32 = scalar_select %p29, %s31, %s20
      %p33 = scmp.ge.s32.totalorder %s32, 3
      %s34 = scalar_select %p33, 0, %s32
      %s35 = sadd.s32 1, %s19
      %s36 = scalar_select %p33, %s35, %s19
      %p37 = scmp.ge.s32.totalorder %s36, 1
      %s38 = scalar_select %p37, 0, %s36
      %s39 = ssub.s32 %s19, %s38
      %s40 = ssub.s32 %s21, %s30
      %s41 = sor.u32 %s39, %s40
      %p42 = scmp.eq.s32.totalorder %s41, 0
      %s44 = sadd.s32 %s43, 1
      %s45 = scalar_select %p42, %s43, %s44
      %p48 = pneg %p42
      %p49 = scmp.eq.s32.totalorder %s12, 2
      %p50 = por %p48, %p49
      %p51 = scmp.ne.s32.totalorder %s43, %s46
      %p52 = scmp.eq.s32.totalorder %s12, 0
      %p53 = por %p51, %p52
      %p54 = scmp.ne.s32.totalorder %s43, %s46
      %p55 = scmp.eq.s32.totalorder %s17, 2
      %p56 = por %p54, %p55
      %p57 = scmp.ne.s32.totalorder %s46, %s47
      %p58 = scmp.eq.s32.totalorder %s17, 0
      %p59 = por %p57, %p58
      %p60 = scmp.ne.s32.totalorder %s46, %s47
      %p61 = scmp.eq.s32.totalorder %s18, 2
      %p62 = por %p60, %p61
      %p64 = scmp.ne.s32.totalorder %s47, %s63
      %p65 = scmp.eq.s32.totalorder %s18, 0
      %p66 = por %p64, %p65
      %s67 = ssub.s32 %s21, %s30
      %s68 = ssub.s32 %s20, %s34
      %s69 = sor.u32 %s67, %s68
      %p70 = scmp.eq.s32.totalorder %s69, 0
      %s72 = sadd.s32 %s71, 1
      %s73 = scalar_select %p70, %s71, %s72
      %p76 = pneg %p70
      %p77 = scmp.eq.s32.totalorder %s12, 2
      %p78 = por %p76, %p77
      %p79 = scmp.ne.s32.totalorder %s71, %s74
      %p80 = scmp.eq.s32.totalorder %s12, 0
      %p81 = por %p79, %p80
      %p82 = scmp.ne.s32.totalorder %s71, %s74
      %p83 = scmp.eq.s32.totalorder %s17, 2
      %p84 = por %p82, %p83
      %p85 = scmp.ne.s32.totalorder %s74, %s75
      %p86 = scmp.eq.s32.totalorder %s17, 0
      %p87 = por %p85, %p86
      %p88 = scmp.ne.s32.totalorder %s74, %s75
      %p89 = scmp.eq.s32.totalorder %s18, 2
      %p90 = por %p88, %p89
      %p92 = scmp.ne.s32.totalorder %s75, %s91
      %p93 = scmp.eq.s32.totalorder %s18, 0
      %p94 = por %p92, %p93
      %s95 = ssub.s32 %s19, %s38
      %s96 = ssub.s32 %s20, %s34
      %s97 = sor.u32 %s95, %s96
      %p98 = scmp.eq.s32.totalorder %s97, 0
      %s100 = sadd.s32 %s99, 1
      %s101 = scalar_select %p98, %s99, %s100
      %p104 = pneg %p98
      %p105 = scmp.eq.s32.totalorder %s12, 2
      %p106 = por %p104, %p105
      %p107 = scmp.ne.s32.totalorder %s99, %s102
      %p108 = scmp.eq.s32.totalorder %s12, 0
      %p109 = por %p107, %p108
      %p110 = scmp.ne.s32.totalorder %s99, %s102
      %p111 = scmp.eq.s32.totalorder %s17, 2
      %p112 = por %p110, %p111
      %p113 = scmp.ne.s32.totalorder %s102, %s103
      %p114 = scmp.eq.s32.totalorder %s17, 0
      %p115 = por %p113, %p114
      %p116 = scmp.ne.s32.totalorder %s102, %s103
      %p117 = scmp.eq.s32.totalorder %s18, 2
      %p118 = por %p116, %p117
      %p120 = scmp.ne.s32.totalorder %s103, %s119
      %p121 = scmp.eq.s32.totalorder %s18, 0
      %p122 = por %p120, %p121
      %p123 = scmp.le.s32.totalorder 1, %s12
      %p124 = scmp.lt.s32.totalorder %s12, 4
      %p125 = pnand %p123, %p124
      %p126 = pneg %p125
      // Predicated region
      $region9: #{xca_forward.3} parent=5 // pred_check
        _
      $region10: #{xca_forward.3} parent=5 // pred_check_branch
        %128 = sbr.rel (%p125) target = $region12
      $region11: #{xca_forward.3} parent=5 // pred_region
        %s129 = ssub.s32 %s12, 1
        // Predicated region
        $region13: #{xca_forward.3} parent=11 // pred_check
          %p130 = pneg %p59
        $region14: #{xca_forward.3} parent=11 // pred_check_branch
          %132 = sbr.rel (%p130) target = $region16
        $region15: #{xca_forward.3} parent=11 // pred_region
          %s133 = smul.u32 32, %s22
          %s135 = ssub.s32 4096, 4096
          %136 = vsyncadd [#allocation4], %s135
          %s137 = sadd.s32 %s24, %s133
          %s138 = smul.addr %s137, 128
          %s139 = scalar_lea.hbm %s0, %s138
          %s140 = sshll.u32 [#allocation3], 4
          %s141 = int_to_ptr.vmem [resolvable:$true] %s140
          %146 = dma.hbm_to_vmem [thread:$0]  %s139, 4096, %s141, [#allocation4], 128, 128, 8
        $region16: #{xca_forward.3} parent=11 // pred_fallthru
          _
      $region12: #{xca_forward.3} parent=5 // pred_fallthru
        _
      %p147 = scmp.lt.s32.totalorder %s12, 3
      // Predicated region
      $region17: #{xca_forward.3} parent=5 // pred_check
        %p148 = pneg %p147
      $region18: #{xca_forward.3} parent=5 // pred_check_branch
        %150 = sbr.rel (%p148) target = $region20
      $region19: #{xca_forward.3} parent=5 // pred_region
        // Predicated region
        $region21: #{xca_forward.3} parent=19 // pred_check
          %p151 = pneg %p81
        $region22: #{xca_forward.3} parent=19 // pred_check_branch
          %153 = sbr.rel (%p151) target = $region24
        $region23: #{xca_forward.3} parent=19 // pred_region
          %s154 = sand.u32 %s71, 1
          %s155 = scalar_lea.sflag [#allocation6], %s154
          %s156 = sand.u32 %s71, 1
          %s157 = smul.addr %s156, 128
          %s158 = scalar_lea.vmem [#allocation5], %s157
          %s159 = smul.u32 16, %s21
          %s161 = ssub.s32 2048, 2048
          %162 = vsyncadd %s155, %s161
          %s163 = smul.addr %s159, 3
          %s164 = sadd.s32 %s20, %s163
          %s165 = smul.addr %s164, 128
          %s166 = scalar_lea.hbm %s1, %s165
          %s167 = sshll.u32 %s158, 4
          %s168 = int_to_ptr.vmem [resolvable:$true] %s167
          %173 = dma.hbm_to_vmem [thread:$0]  %s166, 2048, %s168, %s155, 384, 128, 8
        $region24: #{xca_forward.3} parent=19 // pred_fallthru
          _
      $region20: #{xca_forward.3} parent=5 // pred_fallthru
        _
      %p174 = scmp.le.s32.totalorder 1, %s12
      %p175 = scmp.lt.s32.totalorder %s12, 4
      %p176 = pnand %p174, %p175
      %p177 = pneg %p176
      // Predicated region
      $region25: #{xca_forward.3} parent=5 // pred_check
        _
      $region26: #{xca_forward.3} parent=5 // pred_check_branch
        %179 = sbr.rel (%p176) target = $region28
      $region27: #{xca_forward.3} parent=5 // pred_region
        %s180 = ssub.s32 %s12, 1
        // Predicated region
        $region29: #{xca_forward.3} parent=27 // pred_check
          %p181 = pneg %p59
        $region30: #{xca_forward.3} parent=27 // pred_check_branch
          %183 = sbr.rel (%p181) target = $region32
        $region31: #{xca_forward.3} parent=27 // pred_region
          %184 = dma.done [#allocation4], 4096
        $region32: #{xca_forward.3} parent=27 // pred_fallthru
          _
        %s185 = sand.u32 %s74, 1
        %s186 = scalar_lea.sflag [#allocation6], %s185
        %s187 = sand.u32 %s74, 1
        %s188 = smul.addr %s187, 128
        %s189 = scalar_lea.vmem [#allocation5], %s188
        // Predicated region
        $region33: #{xca_forward.3} parent=27 // pred_check
          %p190 = pneg %p87
        $region34: #{xca_forward.3} parent=27 // pred_check_branch
          %192 = sbr.rel (%p190) target = $region36
        $region35: #{xca_forward.3} parent=27 // pred_region
          %193 = dma.done %s186, 2048
        $region36: #{xca_forward.3} parent=27 // pred_fallthru
          _
        %p194 = pneg %p59
        %p195 = pneg %p56
        %s196 = sand.u32 %s74, 1
        %s197 = scalar_lea.sflag [#allocation6], %s196
        %s198 = sand.u32 %s74, 1
        %s199 = smul.addr %s198, 128
        %s200 = scalar_lea.vmem [#allocation5], %s199
        %p201 = pneg %p87
        %p202 = pneg %p84
        %p203 = pneg %p115
        %p204 = pneg %p112
        %s205 = sand.u32 %s102, 1
        %s206 = sand.u32 %s102, 1
        %s207 = smul.addr %s206, 256
        %s208 = scalar_lea.vmem [#allocation7], %s207
        %s209 = smul.u32 32, %s22
        %s210 = smul.u32 16, %s24
        %s211 = smul.u32 32, %s22
        %p212 = scmp.eq.s32.totalorder %s24, 0
        // Predicated region
        $region37: #{xca_forward.3} parent=27 // pred_check
          %p213 = pneg %p212
        $region38: #{xca_forward.3} parent=27 // pred_check_branch
          %215 = sbr.rel (%p213) target = $region40
        $region39: #{xca_forward.3} parent=27 // pred_region
          %216 = vst [vmem:[#allocation2] sm:$0xff] 0.0
          %217 = vst [vmem:[#allocation2 + $0x8] sm:$0xff] 0.0
          %218 = vst [vmem:[#allocation2 + $0x10] sm:$0xff] 0.0
          %219 = vst [vmem:[#allocation2 + $0x18] sm:$0xff] 0.0
          %220 = vst [vmem:[#allocation2 + $0x20] sm:$0xff] 0.0
          %221 = vst [vmem:[#allocation2 + $0x28] sm:$0xff] 0.0
          %222 = vst [vmem:[#allocation2 + $0x30] sm:$0xff] 0.0
          %223 = vst [vmem:[#allocation2 + $0x38] sm:$0xff] 0.0
          %224 = vst [vmem:[#allocation2 + $0x40] sm:$0xff] 0.0
          %225 = vst [vmem:[#allocation2 + $0x48] sm:$0xff] 0.0
          %226 = vst [vmem:[#allocation2 + $0x50] sm:$0xff] 0.0
          %227 = vst [vmem:[#allocation2 + $0x58] sm:$0xff] 0.0
          %228 = vst [vmem:[#allocation2 + $0x60] sm:$0xff] 0.0
          %229 = vst [vmem:[#allocation2 + $0x68] sm:$0xff] 0.0
          %230 = vst [vmem:[#allocation2 + $0x70] sm:$0xff] 0.0
          %231 = vst [vmem:[#allocation2 + $0x78] sm:$0xff] 0.0
          %232 = vst [vmem:[#allocation2 + $0x80] sm:$0xff] 0.0
          %233 = vst [vmem:[#allocation2 + $0x88] sm:$0xff] 0.0
          %234 = vst [vmem:[#allocation2 + $0x90] sm:$0xff] 0.0
          %235 = vst [vmem:[#allocation2 + $0x98] sm:$0xff] 0.0
          %236 = vst [vmem:[#allocation2 + $0xa0] sm:$0xff] 0.0
          %237 = vst [vmem:[#allocation2 + $0xa8] sm:$0xff] 0.0
          %238 = vst [vmem:[#allocation2 + $0xb0] sm:$0xff] 0.0
          %239 = vst [vmem:[#allocation2 + $0xb8] sm:$0xff] 0.0
          %240 = vst [vmem:[#allocation2 + $0xc0] sm:$0xff] 0.0
          %241 = vst [vmem:[#allocation2 + $0xc8] sm:$0xff] 0.0
          %242 = vst [vmem:[#allocation2 + $0xd0] sm:$0xff] 0.0
          %243 = vst [vmem:[#allocation2 + $0xd8] sm:$0xff] 0.0
          %244 = vst [vmem:[#allocation2 + $0xe0] sm:$0xff] 0.0
          %245 = vst [vmem:[#allocation2 + $0xe8] sm:$0xff] 0.0
          %246 = vst [vmem:[#allocation2 + $0xf0] sm:$0xff] 0.0
          %247 = vst [vmem:[#allocation2 + $0xf8] sm:$0xff] 0.0
        $region40: #{xca_forward.3} parent=27 // pred_fallthru
          _
        %v248 = vld [vmem:[#allocation2] sm:$0xff]
        %v249 = vld [vmem:[#allocation2 + $0x8] sm:$0xff]
        %v250 = vld [vmem:[#allocation2 + $0x10] sm:$0xff]
        %v251 = vld [vmem:[#allocation2 + $0x18] sm:$0xff]
        %v252 = vld [vmem:[#allocation2 + $0x20] sm:$0xff]
        %v253 = vld [vmem:[#allocation2 + $0x28] sm:$0xff]
        %v254 = vld [vmem:[#allocation2 + $0x30] sm:$0xff]
        %v255 = vld [vmem:[#allocation2 + $0x38] sm:$0xff]
        %v256 = vld [vmem:[#allocation2 + $0x40] sm:$0xff]
        %v257 = vld [vmem:[#allocation2 + $0x48] sm:$0xff]
        %v258 = vld [vmem:[#allocation2 + $0x50] sm:$0xff]
        %v259 = vld [vmem:[#allocation2 + $0x58] sm:$0xff]
        %v260 = vld [vmem:[#allocation2 + $0x60] sm:$0xff]
        %v261 = vld [vmem:[#allocation2 + $0x68] sm:$0xff]
        %v262 = vld [vmem:[#allocation2 + $0x70] sm:$0xff]
        %v263 = vld [vmem:[#allocation2 + $0x78] sm:$0xff]
        %v264 = vld [vmem:[#allocation2 + $0x80] sm:$0xff]
        %v265 = vld [vmem:[#allocation2 + $0x88] sm:$0xff]
        %v266 = vld [vmem:[#allocation2 + $0x90] sm:$0xff]
        %v267 = vld [vmem:[#allocation2 + $0x98] sm:$0xff]
        %v268 = vld [vmem:[#allocation2 + $0xa0] sm:$0xff]
        %v269 = vld [vmem:[#allocation2 + $0xa8] sm:$0xff]
        %v270 = vld [vmem:[#allocation2 + $0xb0] sm:$0xff]
        %v271 = vld [vmem:[#allocation2 + $0xb8] sm:$0xff]
        %v272 = vld [vmem:[#allocation2 + $0xc0] sm:$0xff]
        %v273 = vld [vmem:[#allocation2 + $0xc8] sm:$0xff]
        %v274 = vld [vmem:[#allocation2 + $0xd0] sm:$0xff]
        %v275 = vld [vmem:[#allocation2 + $0xd8] sm:$0xff]
        %v276 = vld [vmem:[#allocation2 + $0xe0] sm:$0xff]
        %v277 = vld [vmem:[#allocation2 + $0xe8] sm:$0xff]
        %v278 = vld [vmem:[#allocation2 + $0xf0] sm:$0xff]
        %v279 = vld [vmem:[#allocation2 + $0xf8] sm:$0xff]
        %v280 = vld [vmem:[#allocation3] sm:$0xff]
        %v281 = vld [vmem:[#allocation3 + $0x8] sm:$0xff]
        %v282 = vld [vmem:[#allocation3 + $0x10] sm:$0xff]
        %v283 = vld [vmem:[#allocation3 + $0x18] sm:$0xff]
        %v284 = vld [vmem:[#allocation3 + $0x20] sm:$0xff]
        %v285 = vld [vmem:[#allocation3 + $0x28] sm:$0xff]
        %v286 = vld [vmem:[#allocation3 + $0x30] sm:$0xff]
        %v287 = vld [vmem:[#allocation3 + $0x38] sm:$0xff]
        %v288 = vld [vmem:[#allocation3 + $0x40] sm:$0xff]
        %v289 = vld [vmem:[#allocation3 + $0x48] sm:$0xff]
        %v290 = vld [vmem:[#allocation3 + $0x50] sm:$0xff]
        %v291 = vld [vmem:[#allocation3 + $0x58] sm:$0xff]
        %v292 = vld [vmem:[#allocation3 + $0x60] sm:$0xff]
        %v293 = vld [vmem:[#allocation3 + $0x68] sm:$0xff]
        %v294 = vld [vmem:[#allocation3 + $0x70] sm:$0xff]
        %v295 = vld [vmem:[#allocation3 + $0x78] sm:$0xff]
        %v296 = vld [vmem:[#allocation3 + $0x80] sm:$0xff]
        %v297 = vld [vmem:[#allocation3 + $0x88] sm:$0xff]
        %v298 = vld [vmem:[#allocation3 + $0x90] sm:$0xff]
        %v299 = vld [vmem:[#allocation3 + $0x98] sm:$0xff]
        %v300 = vld [vmem:[#allocation3 + $0xa0] sm:$0xff]
        %v301 = vld [vmem:[#allocation3 + $0xa8] sm:$0xff]
        %v302 = vld [vmem:[#allocation3 + $0xb0] sm:$0xff]
        %v303 = vld [vmem:[#allocation3 + $0xb8] sm:$0xff]
        %v304 = vld [vmem:[#allocation3 + $0xc0] sm:$0xff]
        %v305 = vld [vmem:[#allocation3 + $0xc8] sm:$0xff]
        %v306 = vld [vmem:[#allocation3 + $0xd0] sm:$0xff]
        %v307 = vld [vmem:[#allocation3 + $0xd8] sm:$0xff]
        %v308 = vld [vmem:[#allocation3 + $0xe0] sm:$0xff]
        %v309 = vld [vmem:[#allocation3 + $0xe8] sm:$0xff]
        %v310 = vld [vmem:[#allocation3 + $0xf0] sm:$0xff]
        %v311 = vld [vmem:[#allocation3 + $0xf8] sm:$0xff]
        %v312 = vld [vmem:[%s189] sm:$0xff]
        %v313 = vld [vmem:[%s189 + $0x8] sm:$0xff]
        %v314 = vld [vmem:[%s189 + $0x10] sm:$0xff]
        %v315 = vld [vmem:[%s189 + $0x18] sm:$0xff]
        %v316 = vld [vmem:[%s189 + $0x20] sm:$0xff]
        %v317 = vld [vmem:[%s189 + $0x28] sm:$0xff]
        %v318 = vld [vmem:[%s189 + $0x30] sm:$0xff]
        %v319 = vld [vmem:[%s189 + $0x38] sm:$0xff]
        %v320 = vld [vmem:[%s189 + $0x40] sm:$0xff]
        %v321 = vld [vmem:[%s189 + $0x48] sm:$0xff]
        %v322 = vld [vmem:[%s189 + $0x50] sm:$0xff]
        %v323 = vld [vmem:[%s189 + $0x58] sm:$0xff]
        %v324 = vld [vmem:[%s189 + $0x60] sm:$0xff]
        %v325 = vld [vmem:[%s189 + $0x68] sm:$0xff]
        %v326 = vld [vmem:[%s189 + $0x70] sm:$0xff]
        %v327 = vld [vmem:[%s189 + $0x78] sm:$0xff]
        %328 = vmatprep.subr.mxu0 0.0
        %329 = vmatpush1.msra.mxu0 %v312
        %330 = vmatprep.subr.mxu0 0.0
        %331 = vmatpush1.msra.mxu0 %v313
        %332 = vmatprep.subr.mxu0 0.0
        %333 = vmatpush1.msra.mxu0 %v314
        %334 = vmatprep.subr.mxu0 0.0
        %335 = vmatpush1.msra.mxu0 %v315
        %336 = vmatprep.subr.mxu0 0.0
        %337 = vmatpush1.msra.mxu0 %v316
        %338 = vmatprep.subr.mxu0 0.0
        %339 = vmatpush1.msra.mxu0 %v317
        %340 = vmatprep.subr.mxu0 0.0
        %341 = vmatpush1.msra.mxu0 %v318
        %342 = vmatprep.subr.mxu0 0.0
        %343 = vmatpush1.msra.mxu0 %v319
        %344 = vmatprep.subr.mxu0 0.0
        %345 = vmatpush1.msra.mxu0 %v320
        %346 = vmatprep.subr.mxu0 0.0
        %347 = vmatpush1.msra.mxu0 %v321
        %348 = vmatprep.subr.mxu0 0.0
        %349 = vmatpush1.msra.mxu0 %v322
        %350 = vmatprep.subr.mxu0 0.0
        %351 = vmatpush1.msra.mxu0 %v323
        %352 = vmatprep.subr.mxu0 0.0
        %353 = vmatpush1.msra.mxu0 %v324
        %354 = vmatprep.subr.mxu0 0.0
        %355 = vmatpush1.msra.mxu0 %v325
        %356 = vmatprep.subr.mxu0 0.0
        %357 = vmatpush1.msra.mxu0 %v326
        %358 = vmatprep.subr.mxu0 0.0
        %359 = vmatpush1.msra.mxu0 %v327
        %360 = vmatprep.subr.mxu0 0.0
        %361 = vmatpush1.msra.mxu0 0.0
        %362 = vmatprep.subr.mxu0 0.0
        %363 = vmatpush1.msra.mxu0 0.0
        %364 = vmatprep.subr.mxu0 0.0
        %365 = vmatpush1.msra.mxu0 0.0
        %366 = vmatprep.subr.mxu0 0.0
        %367 = vmatpush1.msra.mxu0 0.0
        %368 = vmatprep.subr.mxu0 0.0
        %369 = vmatpush1.msra.mxu0 0.0
        %370 = vmatprep.subr.mxu0 0.0
        %371 = vmatpush1.msra.mxu0 0.0
        %372 = vmatprep.subr.mxu0 0.0
        %373 = vmatpush1.msra.mxu0 0.0
        %374 = vmatprep.subr.mxu0 0.0
        %375 = vmatpush1.msra.mxu0 0.0
        %376 = vmatprep.subr.mxu0 0.0
        %377 = vmatpush1.msra.mxu0 0.0
        %378 = vmatprep.subr.mxu0 0.0
        %379 = vmatpush1.msra.mxu0 0.0
        %380 = vmatprep.subr.mxu0 0.0
        %381 = vmatpush1.msra.mxu0 0.0
        %382 = vmatprep.subr.mxu0 0.0
        %383 = vmatpush1.msra.mxu0 0.0
        %384 = vmatprep.subr.mxu0 0.0
        %385 = vmatpush1.msra.mxu0 0.0
        %386 = vmatprep.subr.mxu0 0.0
        %387 = vmatpush1.msra.mxu0 0.0
        %388 = vmatprep.subr.mxu0 0.0
        %389 = vmatpush1.msra.mxu0 0.0
        %390 = vmatprep.subr.mxu0 0.0
        %391 = vmatpush1.msra.mxu0 0.0
        %392 = vmatprep.mubr.f32.mxu0 0.0
        %393 = vmatmul.mubr.f32.gmra.mrb[0].mxu0 %v280
        %v394 = vpop.f32.mrb[0].mxu0
        %v395 = vadd.f32 0.0, %v394
        %v396 = vpop.f32.mrb[0].mxu0
        %397 = vmatprep.mubr.f32.mxu0 0.0
        %398 = vmatmul.mubr.f32.gmra.mrb[0].mxu0 %v281
        %v399 = vpop.f32.mrb[0].mxu0
        %v400 = vadd.f32 0.0, %v399
        %v401 = vpop.f32.mrb[0].mxu0
        %402 = vmatprep.mubr.f32.mxu0 0.0
        %403 = vmatmul.mubr.f32.gmra.mrb[0].mxu0 %v282
        %v404 = vpop.f32.mrb[0].mxu0
        %v405 = vadd.f32 0.0, %v404
        %v406 = vpop.f32.mrb[0].mxu0
        %407 = vmatprep.mubr.f32.mxu0 0.0
        %408 = vmatmul.mubr.f32.gmra.mrb[0].mxu0 %v283
        %v409 = vpop.f32.mrb[0].mxu0
        %v410 = vadd.f32 0.0, %v409
        %v411 = vpop.f32.mrb[0].mxu0
        %412 = vmatprep.mubr.f32.mxu0 0.0
        %413 = vmatmul.mubr.f32.gmra.mrb[0].mxu0 %v284
        %v414 = vpop.f32.mrb[0].mxu0
        %v415 = vadd.f32 0.0, %v414
        %v416 = vpop.f32.mrb[0].mxu0
        %417 = vmatprep.mubr.f32.mxu0 0.0
        %418 = vmatmul.mubr.f32.gmra.mrb[0].mxu0 %v285
        %v419 = vpop.f32.mrb[0].mxu0
        %v420 = vadd.f32 0.0, %v419
        %v421 = vpop.f32.mrb[0].mxu0
        %422 = vmatprep.mubr.f32.mxu0 0.0
        %423 = vmatmul.mubr.f32.gmra.mrb[0].mxu0 %v286
        %v424 = vpop.f32.mrb[0].mxu0
        %v425 = vadd.f32 0.0, %v424
        %v426 = vpop.f32.mrb[0].mxu0
        %427 = vmatprep.mubr.f32.mxu0 0.0
        %428 = vmatmul.mubr.f32.gmra.mrb[0].mxu0 %v287
        %v429 = vpop.f32.mrb[0].mxu0
        %v430 = vadd.f32 0.0, %v429
        %v431 = vpop.f32.mrb[0].mxu0
        %432 = vmatprep.mubr.f32.mxu0 0.0
        %433 = vmatmul.mubr.f32.gmra.mrb[0].mxu0 %v288
        %v434 = vpop.f32.mrb[0].mxu0
        %v435 = vadd.f32 0.0, %v434
        %v436 = vpop.f32.mrb[0].mxu0
        %437 = vmatprep.mubr.f32.mxu0 0.0
        %438 = vmatmul.mubr.f32.gmra.mrb[0].mxu0 %v289
        %v439 = vpop.f32.mrb[0].mxu0
        %v440 = vadd.f32 0.0, %v439
        %v441 = vpop.f32.mrb[0].mxu0
        %442 = vmatprep.mubr.f32.mxu0 0.0
        %443 = vmatmul.mubr.f32.gmra.mrb[0].mxu0 %v290
        %v444 = vpop.f32.mrb[0].mxu0
        %v445 = vadd.f32 0.0, %v444
        %v446 = vpop.f32.mrb[0].mxu0
        %447 = vmatprep.mubr.f32.mxu0 0.0
        %448 = vmatmul.mubr.f32.gmra.mrb[0].mxu0 %v291
        %v449 = vpop.f32.mrb[0].mxu0
        %v450 = vadd.f32 0.0, %v449
        %v451 = vpop.f32.mrb[0].mxu0
        %452 = vmatprep.mubr.f32.mxu0 0.0
        %453 = vmatmul.mubr.f32.gmra.mrb[0].mxu0 %v292
        %v454 = vpop.f32.mrb[0].mxu0
        %v455 = vadd.f32 0.0, %v454
        %v456 = vpop.f32.mrb[0].mxu0
        %457 = vmatprep.mubr.f32.mxu0 0.0
        %458 = vmatmul.mubr.f32.gmra.mrb[0].mxu0 %v293
        %v459 = vpop.f32.mrb[0].mxu0
        %v460 = vadd.f32 0.0, %v459
        %v461 = vpop.f32.mrb[0].mxu0
        %462 = vmatprep.mubr.f32.mxu0 0.0
        %463 = vmatmul.mubr.f32.gmra.mrb[0].mxu0 %v294
        %v464 = vpop.f32.mrb[0].mxu0
        %v465 = vadd.f32 0.0, %v464
        %v466 = vpop.f32.mrb[0].mxu0
        %467 = vmatprep.mubr.f32.mxu0 0.0
        %468 = vmatmul.mubr.f32.gmra.mrb[0].mxu0 %v295
        %v469 = vpop.f32.mrb[0].mxu0
        %v470 = vadd.f32 0.0, %v469
        %v471 = vpop.f32.mrb[0].mxu0
        %472 = vmatprep.mubr.f32.mxu0 0.0
        %473 = vmatmul.mubr.f32.gmra.mrb[0].mxu0 %v296
        %v474 = vpop.f32.mrb[0].mxu0
        %v475 = vadd.f32 0.0, %v474
        %v476 = vpop.f32.mrb[0].mxu0
        %477 = vmatprep.mubr.f32.mxu0 0.0
        %478 = vmatmul.mubr.f32.gmra.mrb[0].mxu0 %v297
        %v479 = vpop.f32.mrb[0].mxu0
        %v480 = vadd.f32 0.0, %v479
        %v481 = vpop.f32.mrb[0].mxu0
        %482 = vmatprep.mubr.f32.mxu0 0.0
        %483 = vmatmul.mubr.f32.gmra.mrb[0].mxu0 %v298
        %v484 = vpop.f32.mrb[0].mxu0
        %v485 = vadd.f32 0.0, %v484
        %v486 = vpop.f32.mrb[0].mxu0
        %487 = vmatprep.mubr.f32.mxu0 0.0
        %488 = vmatmul.mubr.f32.gmra.mrb[0].mxu0 %v299
        %v489 = vpop.f32.mrb[0].mxu0
        %v490 = vadd.f32 0.0, %v489
        %v491 = vpop.f32.mrb[0].mxu0
        %492 = vmatprep.mubr.f32.mxu0 0.0
        %493 = vmatmul.mubr.f32.gmra.mrb[0].mxu0 %v300
        %v494 = vpop.f32.mrb[0].mxu0
        %v495 = vadd.f32 0.0, %v494
        %v496 = vpop.f32.mrb[0].mxu0
        %497 = vmatprep.mubr.f32.mxu0 0.0
        %498 = vmatmul.mubr.f32.gmra.mrb[0].mxu0 %v301
        %v499 = vpop.f32.mrb[0].mxu0
        %v500 = vadd.f32 0.0, %v499
        %v501 = vpop.f32.mrb[0].mxu0
        %502 = vmatprep.mubr.f32.mxu0 0.0
        %503 = vmatmul.mubr.f32.gmra.mrb[0].mxu0 %v302
        %v504 = vpop.f32.mrb[0].mxu0
        %v505 = vadd.f32 0.0, %v504
        %v506 = vpop.f32.mrb[0].mxu0
        %507 = vmatprep.mubr.f32.mxu0 0.0
        %508 = vmatmul.mubr.f32.gmra.mrb[0].mxu0 %v303
        %v509 = vpop.f32.mrb[0].mxu0
        %v510 = vadd.f32 0.0, %v509
        %v511 = vpop.f32.mrb[0].mxu0
        %512 = vmatprep.mubr.f32.mxu0 0.0
        %513 = vmatmul.mubr.f32.gmra.mrb[0].mxu0 %v304
        %v514 = vpop.f32.mrb[0].mxu0
        %v515 = vadd.f32 0.0, %v514
        %v516 = vpop.f32.mrb[0].mxu0
        %517 = vmatprep.mubr.f32.mxu0 0.0
        %518 = vmatmul.mubr.f32.gmra.mrb[0].mxu0 %v305
        %v519 = vpop.f32.mrb[0].mxu0
        %v520 = vadd.f32 0.0, %v519
        %v521 = vpop.f32.mrb[0].mxu0
        %522 = vmatprep.mubr.f32.mxu0 0.0
        %523 = vmatmul.mubr.f32.gmra.mrb[0].mxu0 %v306
        %v524 = vpop.f32.mrb[0].mxu0
        %v525 = vadd.f32 0.0, %v524
        %v526 = vpop.f32.mrb[0].mxu0
        %527 = vmatprep.mubr.f32.mxu0 0.0
        %528 = vmatmul.mubr.f32.gmra.mrb[0].mxu0 %v307
        %v529 = vpop.f32.mrb[0].mxu0
        %v530 = vadd.f32 0.0, %v529
        %v531 = vpop.f32.mrb[0].mxu0
        %532 = vmatprep.mubr.f32.mxu0 0.0
        %533 = vmatmul.mubr.f32.gmra.mrb[0].mxu0 %v308
        %v534 = vpop.f32.mrb[0].mxu0
        %v535 = vadd.f32 0.0, %v534
        %v536 = vpop.f32.mrb[0].mxu0
        %537 = vmatprep.mubr.f32.mxu0 0.0
        %538 = vmatmul.mubr.f32.gmra.mrb[0].mxu0 %v309
        %v539 = vpop.f32.mrb[0].mxu0
        %v540 = vadd.f32 0.0, %v539
        %v541 = vpop.f32.mrb[0].mxu0
        %542 = vmatprep.mubr.f32.mxu0 0.0
        %543 = vmatmul.mubr.f32.gmra.mrb[0].mxu0 %v310
        %v544 = vpop.f32.mrb[0].mxu0
        %v545 = vadd.f32 0.0, %v544
        %v546 = vpop.f32.mrb[0].mxu0
        %547 = vmatprep.mubr.f32.mxu0 0.0
        %548 = vmatmul.mubr.f32.gmra.mrb[0].mxu0 %v311
        %v549 = vpop.f32.mrb[0].mxu0
        %v550 = vadd.f32 0.0, %v549
        %v551 = vpop.f32.mrb[0].mxu0
        %552 = vdwg.mxu0
        %v553 = vadd.f32 %v248, %v395
        %v554 = vadd.f32 %v249, %v400
        %v555 = vadd.f32 %v250, %v405
        %v556 = vadd.f32 %v251, %v410
        %v557 = vadd.f32 %v252, %v415
        %v558 = vadd.f32 %v253, %v420
        %v559 = vadd.f32 %v254, %v425
        %v560 = vadd.f32 %v255, %v430
        %v561 = vadd.f32 %v256, %v435
        %v562 = vadd.f32 %v257, %v440
        %v563 = vadd.f32 %v258, %v445
        %v564 = vadd.f32 %v259, %v450
        %v565 = vadd.f32 %v260, %v455
        %v566 = vadd.f32 %v261, %v460
        %v567 = vadd.f32 %v262, %v465
        %v568 = vadd.f32 %v263, %v470
        %v569 = vadd.f32 %v264, %v475
        %v570 = vadd.f32 %v265, %v480
        %v571 = vadd.f32 %v266, %v485
        %v572 = vadd.f32 %v267, %v490
        %v573 = vadd.f32 %v268, %v495
        %v574 = vadd.f32 %v269, %v500
        %v575 = vadd.f32 %v270, %v505
        %v576 = vadd.f32 %v271, %v510
        %v577 = vadd.f32 %v272, %v515
        %v578 = vadd.f32 %v273, %v520
        %v579 = vadd.f32 %v274, %v525
        %v580 = vadd.f32 %v275, %v530
        %v581 = vadd.f32 %v276, %v535
        %v582 = vadd.f32 %v277, %v540
        %v583 = vadd.f32 %v278, %v545
        %v584 = vadd.f32 %v279, %v550
        %585 = vst [vmem:[#allocation2] sm:$0xff] %v553
        %586 = vst [vmem:[#allocation2 + $0x8] sm:$0xff] %v554
        %587 = vst [vmem:[#allocation2 + $0x10] sm:$0xff] %v555
        %588 = vst [vmem:[#allocation2 + $0x18] sm:$0xff] %v556
        %589 = vst [vmem:[#allocation2 + $0x20] sm:$0xff] %v557
        %590 = vst [vmem:[#allocation2 + $0x28] sm:$0xff] %v558
        %591 = vst [vmem:[#allocation2 + $0x30] sm:$0xff] %v559
        %592 = vst [vmem:[#allocation2 + $0x38] sm:$0xff] %v560
        %593 = vst [vmem:[#allocation2 + $0x40] sm:$0xff] %v561
        %594 = vst [vmem:[#allocation2 + $0x48] sm:$0xff] %v562
        %595 = vst [vmem:[#allocation2 + $0x50] sm:$0xff] %v563
        %596 = vst [vmem:[#allocation2 + $0x58] sm:$0xff] %v564
        %597 = vst [vmem:[#allocation2 + $0x60] sm:$0xff] %v565
        %598 = vst [vmem:[#allocation2 + $0x68] sm:$0xff] %v566
        %599 = vst [vmem:[#allocation2 + $0x70] sm:$0xff] %v567
        %600 = vst [vmem:[#allocation2 + $0x78] sm:$0xff] %v568
        %601 = vst [vmem:[#allocation2 + $0x80] sm:$0xff] %v569
        %602 = vst [vmem:[#allocation2 + $0x88] sm:$0xff] %v570
        %603 = vst [vmem:[#allocation2 + $0x90] sm:$0xff] %v571
        %604 = vst [vmem:[#allocation2 + $0x98] sm:$0xff] %v572
        %605 = vst [vmem:[#allocation2 + $0xa0] sm:$0xff] %v573
        %606 = vst [vmem:[#allocation2 + $0xa8] sm:$0xff] %v574
        %607 = vst [vmem:[#allocation2 + $0xb0] sm:$0xff] %v575
        %608 = vst [vmem:[#allocation2 + $0xb8] sm:$0xff] %v576
        %609 = vst [vmem:[#allocation2 + $0xc0] sm:$0xff] %v577
        %610 = vst [vmem:[#allocation2 + $0xc8] sm:$0xff] %v578
        %611 = vst [vmem:[#allocation2 + $0xd0] sm:$0xff] %v579
        %612 = vst [vmem:[#allocation2 + $0xd8] sm:$0xff] %v580
        %613 = vst [vmem:[#allocation2 + $0xe0] sm:$0xff] %v581
        %614 = vst [vmem:[#allocation2 + $0xe8] sm:$0xff] %v582
        %615 = vst [vmem:[#allocation2 + $0xf0] sm:$0xff] %v583
        %616 = vst [vmem:[#allocation2 + $0xf8] sm:$0xff] %v584
        // Predicated region
        $region41: #{xca_forward.3} parent=27 // pred_check
          %p617 = pneg %p212
        $region42: #{xca_forward.3} parent=27 // pred_check_branch
          %619 = sbr.rel (%p617) target = $region44
        $region43: #{xca_forward.3} parent=27 // pred_region
          %v620 = vld [vmem:[#allocation2] sm:$0xff]
          %v621 = vld [vmem:[#allocation2 + $0x8] sm:$0xff]
          %v622 = vld [vmem:[#allocation2 + $0x10] sm:$0xff]
          %v623 = vld [vmem:[#allocation2 + $0x18] sm:$0xff]
          %v624 = vld [vmem:[#allocation2 + $0x20] sm:$0xff]
          %v625 = vld [vmem:[#allocation2 + $0x28] sm:$0xff]
          %v626 = vld [vmem:[#allocation2 + $0x30] sm:$0xff]
          %v627 = vld [vmem:[#allocation2 + $0x38] sm:$0xff]
          %v628 = vld [vmem:[#allocation2 + $0x40] sm:$0xff]
          %v629 = vld [vmem:[#allocation2 + $0x48] sm:$0xff]
          %v630 = vld [vmem:[#allocation2 + $0x50] sm:$0xff]
          %v631 = vld [vmem:[#allocation2 + $0x58] sm:$0xff]
          %v632 = vld [vmem:[#allocation2 + $0x60] sm:$0xff]
          %v633 = vld [vmem:[#allocation2 + $0x68] sm:$0xff]
          %v634 = vld [vmem:[#allocation2 + $0x70] sm:$0xff]
          %v635 = vld [vmem:[#allocation2 + $0x78] sm:$0xff]
          %v636 = vld [vmem:[#allocation2 + $0x80] sm:$0xff]
          %v637 = vld [vmem:[#allocation2 + $0x88] sm:$0xff]
          %v638 = vld [vmem:[#allocation2 + $0x90] sm:$0xff]
          %v639 = vld [vmem:[#allocation2 + $0x98] sm:$0xff]
          %v640 = vld [vmem:[#allocation2 + $0xa0] sm:$0xff]
          %v641 = vld [vmem:[#allocation2 + $0xa8] sm:$0xff]
          %v642 = vld [vmem:[#allocation2 + $0xb0] sm:$0xff]
          %v643 = vld [vmem:[#allocation2 + $0xb8] sm:$0xff]
          %v644 = vld [vmem:[#allocation2 + $0xc0] sm:$0xff]
          %v645 = vld [vmem:[#allocation2 + $0xc8] sm:$0xff]
          %v646 = vld [vmem:[#allocation2 + $0xd0] sm:$0xff]
          %v647 = vld [vmem:[#allocation2 + $0xd8] sm:$0xff]
          %v648 = vld [vmem:[#allocation2 + $0xe0] sm:$0xff]
          %v649 = vld [vmem:[#allocation2 + $0xe8] sm:$0xff]
          %v650 = vld [vmem:[#allocation2 + $0xf0] sm:$0xff]
          %v651 = vld [vmem:[#allocation2 + $0xf8] sm:$0xff]
          %652 = vst [vmem:[%s208] sm:$0xff] %v620
          %653 = vst [vmem:[%s208 + $0x8] sm:$0xff] %v621
          %654 = vst [vmem:[%s208 + $0x10] sm:$0xff] %v622
          %655 = vst [vmem:[%s208 + $0x18] sm:$0xff] %v623
          %656 = vst [vmem:[%s208 + $0x20] sm:$0xff] %v624
          %657 = vst [vmem:[%s208 + $0x28] sm:$0xff] %v625
          %658 = vst [vmem:[%s208 + $0x30] sm:$0xff] %v626
          %659 = vst [vmem:[%s208 + $0x38] sm:$0xff] %v627
          %660 = vst [vmem:[%s208 + $0x40] sm:$0xff] %v628
          %661 = vst [vmem:[%s208 + $0x48] sm:$0xff] %v629
          %662 = vst [vmem:[%s208 + $0x50] sm:$0xff] %v630
          %663 = vst [vmem:[%s208 + $0x58] sm:$0xff] %v631
          %664 = vst [vmem:[%s208 + $0x60] sm:$0xff] %v632
          %665 = vst [vmem:[%s208 + $0x68] sm:$0xff] %v633
          %666 = vst [vmem:[%s208 + $0x70] sm:$0xff] %v634
          %667 = vst [vmem:[%s208 + $0x78] sm:$0xff] %v635
          %668 = vst [vmem:[%s208 + $0x80] sm:$0xff] %v636
          %669 = vst [vmem:[%s208 + $0x88] sm:$0xff] %v637
          %670 = vst [vmem:[%s208 + $0x90] sm:$0xff] %v638
          %671 = vst [vmem:[%s208 + $0x98] sm:$0xff] %v639
          %672 = vst [vmem:[%s208 + $0xa0] sm:$0xff] %v640
          %673 = vst [vmem:[%s208 + $0xa8] sm:$0xff] %v641
          %674 = vst [vmem:[%s208 + $0xb0] sm:$0xff] %v642
          %675 = vst [vmem:[%s208 + $0xb8] sm:$0xff] %v643
          %676 = vst [vmem:[%s208 + $0xc0] sm:$0xff] %v644
          %677 = vst [vmem:[%s208 + $0xc8] sm:$0xff] %v645
          %678 = vst [vmem:[%s208 + $0xd0] sm:$0xff] %v646
          %679 = vst [vmem:[%s208 + $0xd8] sm:$0xff] %v647
          %680 = vst [vmem:[%s208 + $0xe0] sm:$0xff] %v648
          %681 = vst [vmem:[%s208 + $0xe8] sm:$0xff] %v649
          %682 = vst [vmem:[%s208 + $0xf0] sm:$0xff] %v650
          %683 = vst [vmem:[%s208 + $0xf8] sm:$0xff] %v651
        $region44: #{xca_forward.3} parent=27 // pred_fallthru
          _
        %s684 = sand.u32 %s102, 1
        %s685 = sand.u32 %s102, 1
        %s686 = smul.addr %s685, 256
        %s687 = scalar_lea.vmem [#allocation7], %s686
        // Predicated region
        $region45: #{xca_forward.3} parent=27 // pred_check
          %p688 = pneg %p112
        $region46: #{xca_forward.3} parent=27 // pred_check_branch
          %690 = sbr.rel (%p688) target = $region48
        $region47: #{xca_forward.3} parent=27 // pred_region
          %s691 = smul.u32 32, %s22
          %s692 = smul.addr %s691, 3
          %s693 = sadd.s32 %s23, %s692
          %s694 = smul.addr %s693, 8
          %s695 = scalar_lea.vmem %s2, %s694
          // Predicated region
          $region49: #{xca_forward.3} parent=47 // pred_check
            _
          $region50: #{xca_forward.3} parent=47 // pred_check_branch
            %697 = sbr.rel (0) target = $region52
          $region51: #{xca_forward.3} parent=47 // pred_region
            // Predicated region
            $region53: #{xca_forward.3} parent=51 // pred_check
              _
            $region54: #{xca_forward.3} parent=51 // pred_check_branch
              %699 = sbr.rel (0) target = $region56
            $region55: #{xca_forward.3} parent=51 // pred_region
              // Predicated region
              $region68: #{xca_forward.3} parent=55 // pred_check
                _
              $region69: #{xca_forward.3} parent=55 // pred_check_branch
                %776 = sbr.rel (0) target = $region71
              $region70: #{xca_forward.3} parent=55 // pred_region
                loop: start=0, step=1, limit=1
                $region72: #{xca_forward.3} parent=70 // loop_pre_header
                  _
                $region73: #{xca_forward.3} parent=70 // loop_header
                  %s778 = sphi 0, %s782
                  %p779 = scmp.ge.s32.totalorder %s778, 1
                  %s783 = sphi %s687, %s687
                  %s784 = sphi %s695, %s695
                $region74: #{xca_forward.3} parent=70 // loop_header_branch
                  %781 = sbr.rel (%p779) target = $region78
                $region75: #{xca_forward.3} parent=70 // loop_body
                  %v785 = vld [vmem:[%s783] sm:$0xff]
                  %786 = vst [vmem:[%s784] sm:$0xff] %v785
                  %v787 = vld [vmem:[%s783 + $0x8] sm:$0xff]
                  %788 = vst [vmem:[%s784 + $0x18] sm:$0xff] %v787
                  %v789 = vld [vmem:[%s783 + $0x10] sm:$0xff]
                  %790 = vst [vmem:[%s784 + $0x30] sm:$0xff] %v789
                  %v791 = vld [vmem:[%s783 + $0x18] sm:$0xff]
                  %792 = vst [vmem:[%s784 + $0x48] sm:$0xff] %v791
                  %v793 = vld [vmem:[%s783 + $0x20] sm:$0xff]
                  %794 = vst [vmem:[%s784 + $0x60] sm:$0xff] %v793
                  %v795 = vld [vmem:[%s783 + $0x28] sm:$0xff]
                  %796 = vst [vmem:[%s784 + $0x78] sm:$0xff] %v795
                  %v797 = vld [vmem:[%s783 + $0x30] sm:$0xff]
                  %798 = vst [vmem:[%s784 + $0x90] sm:$0xff] %v797
                  %v799 = vld [vmem:[%s783 + $0x38] sm:$0xff]
                  %800 = vst [vmem:[%s784 + $0xa8] sm:$0xff] %v799
                  %v801 = vld [vmem:[%s783 + $0x40] sm:$0xff]
                  %802 = vst [vmem:[%s784 + $0xc0] sm:$0xff] %v801
                  %v803 = vld [vmem:[%s783 + $0x48] sm:$0xff]
                  %804 = vst [vmem:[%s784 + $0xd8] sm:$0xff] %v803
                  %v805 = vld [vmem:[%s783 + $0x50] sm:$0xff]
                  %806 = vst [vmem:[%s784 + $0xf0] sm:$0xff] %v805
                  %v807 = vld [vmem:[%s783 + $0x58] sm:$0xff]
                  %808 = vst [vmem:[%s784 + $0x108] sm:$0xff] %v807
                  %v809 = vld [vmem:[%s783 + $0x60] sm:$0xff]
                  %810 = vst [vmem:[%s784 + $0x120] sm:$0xff] %v809
                  %v811 = vld [vmem:[%s783 + $0x68] sm:$0xff]
                  %812 = vst [vmem:[%s784 + $0x138] sm:$0xff] %v811
                  %v813 = vld [vmem:[%s783 + $0x70] sm:$0xff]
                  %814 = vst [vmem:[%s784 + $0x150] sm:$0xff] %v813
                  %v815 = vld [vmem:[%s783 + $0x78] sm:$0xff]
                  %816 = vst [vmem:[%s784 + $0x168] sm:$0xff] %v815
                  %v817 = vld [vmem:[%s783 + $0x80] sm:$0xff]
                  %818 = vst [vmem:[%s784 + $0x180] sm:$0xff] %v817
                  %v819 = vld [vmem:[%s783 + $0x88] sm:$0xff]
                  %820 = vst [vmem:[%s784 + $0x198] sm:$0xff] %v819
                  %v821 = vld [vmem:[%s783 + $0x90] sm:$0xff]
                  %822 = vst [vmem:[%s784 + $0x1b0] sm:$0xff] %v821
                  %v823 = vld [vmem:[%s783 + $0x98] sm:$0xff]
                  %824 = vst [vmem:[%s784 + $0x1c8] sm:$0xff] %v823
                  %v825 = vld [vmem:[%s783 + $0xa0] sm:$0xff]
                  %826 = vst [vmem:[%s784 + $0x1e0] sm:$0xff] %v825
                  %v827 = vld [vmem:[%s783 + $0xa8] sm:$0xff]
                  %828 = vst [vmem:[%s784 + $0x1f8] sm:$0xff] %v827
                  %v829 = vld [vmem:[%s783 + $0xb0] sm:$0xff]
                  %830 = vst [vmem:[%s784 + $0x210] sm:$0xff] %v829
                  %v831 = vld [vmem:[%s783 + $0xb8] sm:$0xff]
                  %832 = vst [vmem:[%s784 + $0x228] sm:$0xff] %v831
                  %v833 = vld [vmem:[%s783 + $0xc0] sm:$0xff]
                  %834 = vst [vmem:[%s784 + $0x240] sm:$0xff] %v833
                  %v835 = vld [vmem:[%s783 + $0xc8] sm:$0xff]
                  %836 = vst [vmem:[%s784 + $0x258] sm:$0xff] %v835
                  %v837 = vld [vmem:[%s783 + $0xd0] sm:$0xff]
                  %838 = vst [vmem:[%s784 + $0x270] sm:$0xff] %v837
                  %v839 = vld [vmem:[%s783 + $0xd8] sm:$0xff]
                  %840 = vst [vmem:[%s784 + $0x288] sm:$0xff] %v839
                  %v841 = vld [vmem:[%s783 + $0xe0] sm:$0xff]
                  %842 = vst [vmem:[%s784 + $0x2a0] sm:$0xff] %v841
                  %v843 = vld [vmem:[%s783 + $0xe8] sm:$0xff]
                  %844 = vst [vmem:[%s784 + $0x2b8] sm:$0xff] %v843
                  %v845 = vld [vmem:[%s783 + $0xf0] sm:$0xff]
                  %846 = vst [vmem:[%s784 + $0x2d0] sm:$0xff] %v845
                  %v847 = vld [vmem:[%s783 + $0xf8] sm:$0xff]
                  %848 = vst [vmem:[%s784 + $0x2e8] sm:$0xff] %v847
                $region76: #{xca_forward.3} parent=70 // loop_footer
                  %s782 = sadd.s32 1, %s778
                $region77: #{xca_forward.3} parent=70 // loop_footer_branch
                  %777 = sbr.rel target = $region73
                $region78: #{xca_forward.3} parent=70 // loop_exit
                  _
              $region71: #{xca_forward.3} parent=55 // pred_fallthru
                _
              // Predicated region
              $region79: #{xca_forward.3} parent=55 // pred_check
                _
              $region80: #{xca_forward.3} parent=55 // pred_check_branch
                %850 = sbr.rel target = $region82
              $region81: #{xca_forward.3} parent=55 // pred_region
                _
              $region82: #{xca_forward.3} parent=55 // pred_fallthru
                _
            $region56: #{xca_forward.3} parent=51 // pred_fallthru
              _
            // Predicated region
            $region57: #{xca_forward.3} parent=51 // pred_check
              _
            $region58: #{xca_forward.3} parent=51 // pred_check_branch
              %701 = sbr.rel target = $region60
            $region59: #{xca_forward.3} parent=51 // pred_region
              loop: start=0, step=1, limit=1
              $region61: #{xca_forward.3} parent=59 // loop_pre_header
                _
              $region62: #{xca_forward.3} parent=59 // loop_header
                %s704 = sphi 0, %s708
                %p705 = scmp.ge.s32.totalorder %s704, 1
                %s709 = sphi %s687, %s687
                %s710 = sphi %s695, %s695
              $region63: #{xca_forward.3} parent=59 // loop_header_branch
                %707 = sbr.rel (%p705) target = $region67
              $region64: #{xca_forward.3} parent=59 // loop_body
                %v711 = vld [vmem:[%s709] sm:$0xff]
                %712 = vst [vmem:[%s710] sm:$0xff] %v711
                %v713 = vld [vmem:[%s709 + $0x8] sm:$0xff]
                %714 = vst [vmem:[%s710 + $0x18] sm:$0xff] %v713
                %v715 = vld [vmem:[%s709 + $0x10] sm:$0xff]
                %716 = vst [vmem:[%s710 + $0x30] sm:$0xff] %v715
                %v717 = vld [vmem:[%s709 + $0x18] sm:$0xff]
                %718 = vst [vmem:[%s710 + $0x48] sm:$0xff] %v717
                %v719 = vld [vmem:[%s709 + $0x20] sm:$0xff]
                %720 = vst [vmem:[%s710 + $0x60] sm:$0xff] %v719
                %v721 = vld [vmem:[%s709 + $0x28] sm:$0xff]
                %722 = vst [vmem:[%s710 + $0x78] sm:$0xff] %v721
                %v723 = vld [vmem:[%s709 + $0x30] sm:$0xff]
                %724 = vst [vmem:[%s710 + $0x90] sm:$0xff] %v723
                %v725 = vld [vmem:[%s709 + $0x38] sm:$0xff]
                %726 = vst [vmem:[%s710 + $0xa8] sm:$0xff] %v725
                %v727 = vld [vmem:[%s709 + $0x40] sm:$0xff]
                %728 = vst [vmem:[%s710 + $0xc0] sm:$0xff] %v727
                %v729 = vld [vmem:[%s709 + $0x48] sm:$0xff]
                %730 = vst [vmem:[%s710 + $0xd8] sm:$0xff] %v729
                %v731 = vld [vmem:[%s709 + $0x50] sm:$0xff]
                %732 = vst [vmem:[%s710 + $0xf0] sm:$0xff] %v731
                %v733 = vld [vmem:[%s709 + $0x58] sm:$0xff]
                %734 = vst [vmem:[%s710 + $0x108] sm:$0xff] %v733
                %v735 = vld [vmem:[%s709 + $0x60] sm:$0xff]
                %736 = vst [vmem:[%s710 + $0x120] sm:$0xff] %v735
                %v737 = vld [vmem:[%s709 + $0x68] sm:$0xff]
                %738 = vst [vmem:[%s710 + $0x138] sm:$0xff] %v737
                %v739 = vld [vmem:[%s709 + $0x70] sm:$0xff]
                %740 = vst [vmem:[%s710 + $0x150] sm:$0xff] %v739
                %v741 = vld [vmem:[%s709 + $0x78] sm:$0xff]
                %742 = vst [vmem:[%s710 + $0x168] sm:$0xff] %v741
                %v743 = vld [vmem:[%s709 + $0x80] sm:$0xff]
                %744 = vst [vmem:[%s710 + $0x180] sm:$0xff] %v743
                %v745 = vld [vmem:[%s709 + $0x88] sm:$0xff]
                %746 = vst [vmem:[%s710 + $0x198] sm:$0xff] %v745
                %v747 = vld [vmem:[%s709 + $0x90] sm:$0xff]
                %748 = vst [vmem:[%s710 + $0x1b0] sm:$0xff] %v747
                %v749 = vld [vmem:[%s709 + $0x98] sm:$0xff]
                %750 = vst [vmem:[%s710 + $0x1c8] sm:$0xff] %v749
                %v751 = vld [vmem:[%s709 + $0xa0] sm:$0xff]
                %752 = vst [vmem:[%s710 + $0x1e0] sm:$0xff] %v751
                %v753 = vld [vmem:[%s709 + $0xa8] sm:$0xff]
                %754 = vst [vmem:[%s710 + $0x1f8] sm:$0xff] %v753
                %v755 = vld [vmem:[%s709 + $0xb0] sm:$0xff]
                %756 = vst [vmem:[%s710 + $0x210] sm:$0xff] %v755
                %v757 = vld [vmem:[%s709 + $0xb8] sm:$0xff]
                %758 = vst [vmem:[%s710 + $0x228] sm:$0xff] %v757
                %v759 = vld [vmem:[%s709 + $0xc0] sm:$0xff]
                %760 = vst [vmem:[%s710 + $0x240] sm:$0xff] %v759
                %v761 = vld [vmem:[%s709 + $0xc8] sm:$0xff]
                %762 = vst [vmem:[%s710 + $0x258] sm:$0xff] %v761
                %v763 = vld [vmem:[%s709 + $0xd0] sm:$0xff]
                %764 = vst [vmem:[%s710 + $0x270] sm:$0xff] %v763
                %v765 = vld [vmem:[%s709 + $0xd8] sm:$0xff]
                %766 = vst [vmem:[%s710 + $0x288] sm:$0xff] %v765
                %v767 = vld [vmem:[%s709 + $0xe0] sm:$0xff]
                %768 = vst [vmem:[%s710 + $0x2a0] sm:$0xff] %v767
                %v769 = vld [vmem:[%s709 + $0xe8] sm:$0xff]
                %770 = vst [vmem:[%s710 + $0x2b8] sm:$0xff] %v769
                %v771 = vld [vmem:[%s709 + $0xf0] sm:$0xff]
                %772 = vst [vmem:[%s710 + $0x2d0] sm:$0xff] %v771
                %v773 = vld [vmem:[%s709 + $0xf8] sm:$0xff]
                %774 = vst [vmem:[%s710 + $0x2e8] sm:$0xff] %v773
              $region65: #{xca_forward.3} parent=59 // loop_footer
                %s708 = sadd.s32 1, %s704
              $region66: #{xca_forward.3} parent=59 // loop_footer_branch
                %703 = sbr.rel target = $region62
              $region67: #{xca_forward.3} parent=59 // loop_exit
                _
            $region60: #{xca_forward.3} parent=51 // pred_fallthru
              _
          $region52: #{xca_forward.3} parent=47 // pred_fallthru
            _
          %851 = vnop
        $region48: #{xca_forward.3} parent=27 // pred_fallthru
          _
      $region28: #{xca_forward.3} parent=5 // pred_fallthru
        _
      %p852 = scmp.le.s32.totalorder 2, %s12
      // Predicated region
      $region83: #{xca_forward.3} parent=5 // pred_check
        %p853 = pneg %p852
      $region84: #{xca_forward.3} parent=5 // pred_check_branch
        %855 = sbr.rel (%p853) target = $region86
      $region85: #{xca_forward.3} parent=5 // pred_region
        %s856 = ssub.s32 %s12, 2
        // Predicated region
        $region87: #{xca_forward.3} parent=85 // pred_check
          %p857 = pneg %p118
        $region88: #{xca_forward.3} parent=85 // pred_check_branch
          %859 = sbr.rel (%p857) target = $region90
        $region89: #{xca_forward.3} parent=85 // pred_region
          %s860 = sand.u32 %s103, 1
          %s861 = sand.u32 %s103, 1
          %s862 = smul.addr %s861, 256
          %s863 = scalar_lea.vmem [#allocation7], %s862
        $region90: #{xca_forward.3} parent=85 // pred_fallthru
          _
      $region86: #{xca_forward.3} parent=5 // pred_fallthru
        _
    $region6: #{xca_forward.3} parent=1 // loop_footer
      %s16 = sadd.s32 1, %s12
    $region7: #{xca_forward.3} parent=1 // loop_footer_branch
      %11 = sbr.rel target = $region3
    $region8: #{xca_forward.3} parent=1 // loop_exit
      _
    %864 = vsyncpa [#allocation4], 1
    %s865 = scalar_lea.sflag [#allocation4], 1
    %866 = vsyncpa %s865, 1
    %867 = vsyncpa [#allocation6], 1
    %s868 = scalar_lea.sflag [#allocation6], 1
    %869 = vsyncpa %s868, 1

// kernel: xca_forward.4
$region0: #{xca_forward.4}
  #allocation0 [shape = 'u32[]', space=smem, size = 0x4, offset = 0x4, fixed_abs, tag = 'smem constant byte address 0x4 - core index']
  #allocation1 [shape = 'u32[144,128]{1,0:T(1,128)}', space=vmem, size = 0x12000, scoped, tag = 'internal scratch']
  %s0 = inlined_call_operand.vmem [shape: f32[2,8,16,128], index: 0, kind: input, shape index: {}]
  %s1 = inlined_call_operand.vmem [shape: f32[2,8,16,128], index: 1, kind: input, shape index: {}]
  %s2 = inlined_call_operand.vmem [shape: f32[2,8,16,128], index: 2, kind: input, shape index: {}]
  %s3 = inlined_call_operand.vmem [shape: f32[8,1,1], index: 3, kind: input, shape index: {}]
  %s4 = inlined_call_operand.vmem [shape: f32[2,8,16,128], index: 4, kind: output, shape index: {}]
  %s5 = sld [smem:[#allocation0]]
  $region49: #{xca_forward.4} parent=0
    _
  %s7 = ssub.s32 1, %s5
  %s8 = scalar_select 0, %s7, %s5
  loop: start=0, step=1, limit=4
  $region2: #{xca_forward.4} parent=0 // loop_pre_header
    _
  $region3: #{xca_forward.4} parent=0 // loop_header
    %s10 = sphi 0, %s14
    %p11 = scmp.ge.s32.totalorder %s10, 4
    %s20 = sphi 0, %s22
    %s23 = sphi 0, %s20
    %s24 = sphi 0, %s23
    %s40 = sphi 0, %s24
    %s46 = sphi 0, %s48
    %s49 = sphi 0, %s46
    %s50 = sphi 0, %s49
    %s66 = sphi 0, %s50
    %s72 = sphi 0, %s74
    %s75 = sphi 0, %s72
    %s76 = sphi 0, %s75
    %s92 = sphi 0, %s76
    %s96 = sphi 0, %s96
    %s98 = sphi 0, %s96
    %s99 = sphi 0, %s98
    %s113 = sphi 0, %s99
    %s119 = sphi 0, %s121
    %s122 = sphi 0, %s119
    %s123 = sphi 0, %s122
    %s139 = sphi 0, %s123
  $region4: #{xca_forward.4} parent=0 // loop_header_branch
    %13 = sbr.rel (%p11) target = $region8
  $region5: #{xca_forward.4} parent=0 // loop_body
    %s15 = ssub.s32 %s10, 1
    %s16 = ssub.s32 %s10, 2
    %s17 = sadd.s32 %s10, 1
    %s18 = ssub.s32 %s10, %s17
    %p19 = scmp.eq.s32.totalorder %s18, 0
    %s21 = sadd.s32 %s20, 1
    %s22 = scalar_select %p19, %s20, %s21
    %p25 = pneg %p19
    %p26 = scmp.eq.s32.totalorder %s10, 1
    %p27 = por %p25, %p26
    %p28 = scmp.ne.s32.totalorder %s20, %s23
    %p29 = scmp.eq.s32.totalorder %s10, 0
    %p30 = por %p28, %p29
    %p31 = scmp.ne.s32.totalorder %s20, %s23
    %p32 = scmp.eq.s32.totalorder %s15, 1
    %p33 = por %p31, %p32
    %p34 = scmp.ne.s32.totalorder %s23, %s24
    %p35 = scmp.eq.s32.totalorder %s15, 0
    %p36 = por %p34, %p35
    %p37 = scmp.ne.s32.totalorder %s23, %s24
    %p38 = scmp.eq.s32.totalorder %s16, 1
    %p39 = por %p37, %p38
    %p41 = scmp.ne.s32.totalorder %s24, %s40
    %p42 = scmp.eq.s32.totalorder %s16, 0
    %p43 = por %p41, %p42
    %s44 = ssub.s32 %s10, %s17
    %p45 = scmp.eq.s32.totalorder %s44, 0
    %s47 = sadd.s32 %s46, 1
    %s48 = scalar_select %p45, %s46, %s47
    %p51 = pneg %p45
    %p52 = scmp.eq.s32.totalorder %s10, 1
    %p53 = por %p51, %p52
    %p54 = scmp.ne.s32.totalorder %s46, %s49
    %p55 = scmp.eq.s32.totalorder %s10, 0
    %p56 = por %p54, %p55
    %p57 = scmp.ne.s32.totalorder %s46, %s49
    %p58 = scmp.eq.s32.totalorder %s15, 1
    %p59 = por %p57, %p58
    %p60 = scmp.ne.s32.totalorder %s49, %s50
    %p61 = scmp.eq.s32.totalorder %s15, 0
    %p62 = por %p60, %p61
    %p63 = scmp.ne.s32.totalorder %s49, %s50
    %p64 = scmp.eq.s32.totalorder %s16, 1
    %p65 = por %p63, %p64
    %p67 = scmp.ne.s32.totalorder %s50, %s66
    %p68 = scmp.eq.s32.totalorder %s16, 0
    %p69 = por %p67, %p68
    %s70 = ssub.s32 %s10, %s17
    %p71 = scmp.eq.s32.totalorder %s70, 0
    %s73 = sadd.s32 %s72, 1
    %s74 = scalar_select %p71, %s72, %s73
    %p77 = pneg %p71
    %p78 = scmp.eq.s32.totalorder %s10, 1
    %p79 = por %p77, %p78
    %p80 = scmp.ne.s32.totalorder %s72, %s75
    %p81 = scmp.eq.s32.totalorder %s10, 0
    %p82 = por %p80, %p81
    %p83 = scmp.ne.s32.totalorder %s72, %s75
    %p84 = scmp.eq.s32.totalorder %s15, 1
    %p85 = por %p83, %p84
    %p86 = scmp.ne.s32.totalorder %s75, %s76
    %p87 = scmp.eq.s32.totalorder %s15, 0
    %p88 = por %p86, %p87
    %p89 = scmp.ne.s32.totalorder %s75, %s76
    %p90 = scmp.eq.s32.totalorder %s16, 1
    %p91 = por %p89, %p90
    %p93 = scmp.ne.s32.totalorder %s76, %s92
    %p94 = scmp.eq.s32.totalorder %s16, 0
    %p95 = por %p93, %p94
    %s97 = sadd.s32 %s96, 1
    %p100 = scmp.eq.s32.totalorder %s10, 1
    %p101 = scmp.ne.s32.totalorder %s96, %s98
    %p102 = scmp.eq.s32.totalorder %s10, 0
    %p103 = por %p101, %p102
    %p104 = scmp.ne.s32.totalorder %s96, %s98
    %p105 = scmp.eq.s32.totalorder %s15, 1
    %p106 = por %p104, %p105
    %p107 = scmp.ne.s32.totalorder %s98, %s99
    %p108 = scmp.eq.s32.totalorder %s15, 0
    %p109 = por %p107, %p108
    %p110 = scmp.ne.s32.totalorder %s98, %s99
    %p111 = scmp.eq.s32.totalorder %s16, 1
    %p112 = por %p110, %p111
    %p114 = scmp.ne.s32.totalorder %s99, %s113
    %p115 = scmp.eq.s32.totalorder %s16, 0
    %p116 = por %p114, %p115
    %s117 = ssub.s32 %s10, %s17
    %p118 = scmp.eq.s32.totalorder %s117, 0
    %s120 = sadd.s32 %s119, 1
    %s121 = scalar_select %p118, %s119, %s120
    %p124 = pneg %p118
    %p125 = scmp.eq.s32.totalorder %s10, 1
    %p126 = por %p124, %p125
    %p127 = scmp.ne.s32.totalorder %s119, %s122
    %p128 = scmp.eq.s32.totalorder %s10, 0
    %p129 = por %p127, %p128
    %p130 = scmp.ne.s32.totalorder %s119, %s122
    %p131 = scmp.eq.s32.totalorder %s15, 1
    %p132 = por %p130, %p131
    %p133 = scmp.ne.s32.totalorder %s122, %s123
    %p134 = scmp.eq.s32.totalorder %s15, 0
    %p135 = por %p133, %p134
    %p136 = scmp.ne.s32.totalorder %s122, %s123
    %p137 = scmp.eq.s32.totalorder %s16, 1
    %p138 = por %p136, %p137
    %p140 = scmp.ne.s32.totalorder %s123, %s139
    %p141 = scmp.eq.s32.totalorder %s16, 0
    %p142 = por %p140, %p141
    %p143 = scmp.le.s32.totalorder 1, %s10
    %p144 = scmp.lt.s32.totalorder %s10, 3
    %p145 = pnand %p143, %p144
    %p146 = pneg %p145
    // Predicated region
    $region9: #{xca_forward.4} parent=5 // pred_check
      _
    $region10: #{xca_forward.4} parent=5 // pred_check_branch
      %148 = sbr.rel (%p145) target = $region12
    $region11: #{xca_forward.4} parent=5 // pred_region
      %s149 = ssub.s32 %s10, 1
      // Predicated region
      $region13: #{xca_forward.4} parent=11 // pred_check
        %p150 = pneg %p109
      $region14: #{xca_forward.4} parent=11 // pred_check_branch
        %152 = sbr.rel (%p150) target = $region16
      $region15: #{xca_forward.4} parent=11 // pred_region
        _
      $region16: #{xca_forward.4} parent=11 // pred_fallthru
        _
    $region12: #{xca_forward.4} parent=5 // pred_fallthru
      _
    %p153 = scmp.lt.s32.totalorder %s10, 2
    // Predicated region
    $region17: #{xca_forward.4} parent=5 // pred_check
      %p154 = pneg %p153
    $region18: #{xca_forward.4} parent=5 // pred_check_branch
      %156 = sbr.rel (%p154) target = $region20
    $region19: #{xca_forward.4} parent=5 // pred_region
      // Predicated region
      $region21: #{xca_forward.4} parent=19 // pred_check
        %p157 = pneg %p30
      $region22: #{xca_forward.4} parent=19 // pred_check_branch
        %159 = sbr.rel (%p157) target = $region24
      $region23: #{xca_forward.4} parent=19 // pred_region
        %p160 = scmp.lt.s32.totalorder %s10, 1
        %s161 = scalar_select %p160, %s10, 1
        %s162 = smul.addr %s161, 16
        %s163 = smul.addr %s162, 8
        %s164 = scalar_lea.vmem %s0, %s163
      $region24: #{xca_forward.4} parent=19 // pred_fallthru
        _
      // Predicated region
      $region25: #{xca_forward.4} parent=19 // pred_check
        %p165 = pneg %p56
      $region26: #{xca_forward.4} parent=19 // pred_check_branch
        %167 = sbr.rel (%p165) target = $region28
      $region27: #{xca_forward.4} parent=19 // pred_region
        %p168 = scmp.lt.s32.totalorder %s10, 1
        %s169 = scalar_select %p168, %s10, 1
        %s170 = smul.addr %s169, 16
        %s171 = smul.addr %s170, 8
        %s172 = scalar_lea.vmem %s1, %s171
      $region28: #{xca_forward.4} parent=19 // pred_fallthru
        _
      // Predicated region
      $region29: #{xca_forward.4} parent=19 // pred_check
        %p173 = pneg %p82
      $region30: #{xca_forward.4} parent=19 // pred_check_branch
        %175 = sbr.rel (%p173) target = $region32
      $region31: #{xca_forward.4} parent=19 // pred_region
        %p176 = scmp.lt.s32.totalorder %s10, 1
        %s177 = scalar_select %p176, %s10, 1
        %s178 = smul.addr %s177, 16
        %s179 = smul.addr %s178, 8
        %s180 = scalar_lea.vmem %s2, %s179
      $region32: #{xca_forward.4} parent=19 // pred_fallthru
        _
    $region20: #{xca_forward.4} parent=5 // pred_fallthru
      _
    %p181 = scmp.le.s32.totalorder 1, %s10
    %p182 = scmp.lt.s32.totalorder %s10, 3
    %p183 = pnand %p181, %p182
    %p184 = pneg %p183
    // Predicated region
    $region33: #{xca_forward.4} parent=5 // pred_check
      _
    $region34: #{xca_forward.4} parent=5 // pred_check_branch
      %186 = sbr.rel (%p183) target = $region36
    $region35: #{xca_forward.4} parent=5 // pred_region
      %s187 = ssub.s32 %s10, 1
      %p188 = scmp.lt.s32.totalorder %s15, 1
      %s189 = scalar_select %p188, %s15, 1
      %s190 = smul.addr %s189, 16
      %s191 = smul.addr %s190, 8
      %s192 = scalar_lea.vmem %s0, %s191
      %p193 = pneg %p36
      %p194 = pneg %p33
      %p195 = scmp.lt.s32.totalorder %s15, 1
      %s196 = scalar_select %p195, %s15, 1
      %s197 = smul.addr %s196, 16
      %s198 = smul.addr %s197, 8
      %s199 = scalar_lea.vmem %s1, %s198
      %p200 = pneg %p62
      %p201 = pneg %p59
      %p202 = scmp.lt.s32.totalorder %s15, 1
      %s203 = scalar_select %p202, %s15, 1
      %s204 = smul.addr %s203, 16
      %s205 = smul.addr %s204, 8
      %s206 = scalar_lea.vmem %s2, %s205
      %p207 = pneg %p88
      %p208 = pneg %p85
      %p209 = pneg %p109
      %p210 = pneg %p106
      %p211 = pneg %p135
      %p212 = pneg %p132
      %p213 = scmp.lt.s32.totalorder %s15, 1
      %s214 = scalar_select %p213, %s15, 1
      %s215 = smul.addr %s214, 16
      %s216 = smul.addr %s215, 8
      %s217 = scalar_lea.vmem %s4, %s216
      %p218 = scmp.lt.s32.totalorder %s15, 1
      %s219 = scalar_select %p218, %s15, 1
      %s220 = smul.addr %s219, 16
      %s221 = smul.addr %s220, 8
      %s222 = scalar_lea.vmem %s0, %s221
      %p223 = scmp.lt.s32.totalorder %s15, 1
      %s224 = scalar_select %p223, %s15, 1
      %s225 = smul.addr %s224, 16
      %s226 = smul.addr %s225, 8
      %s227 = scalar_lea.vmem %s1, %s226
      %p228 = scmp.lt.s32.totalorder %s15, 1
      %s229 = scalar_select %p228, %s15, 1
      %s230 = smul.addr %s229, 16
      %s231 = smul.addr %s230, 8
      %s232 = scalar_lea.vmem %s2, %s231
      %p233 = scmp.lt.s32.totalorder %s15, 1
      %s234 = scalar_select %p233, %s15, 1
      %s235 = smul.addr %s234, 16
      %s236 = smul.addr %s235, 8
      %s237 = scalar_lea.vmem %s4, %s236
      %v238 = vld [vmem:[%s222] sm:$0xff]
      %v239 = vld [vmem:[%s222 + $0x8] sm:$0xff]
      %v240 = vld [vmem:[%s222 + $0x10] sm:$0xff]
      %v241 = vld [vmem:[%s222 + $0x18] sm:$0xff]
      %v242 = vld [vmem:[%s222 + $0x20] sm:$0xff]
      %v243 = vld [vmem:[%s222 + $0x28] sm:$0xff]
      %v244 = vld [vmem:[%s222 + $0x30] sm:$0xff]
      %v245 = vld [vmem:[%s222 + $0x38] sm:$0xff]
      %v246 = vld [vmem:[%s222 + $0x40] sm:$0xff]
      %v247 = vld [vmem:[%s222 + $0x48] sm:$0xff]
      %v248 = vld [vmem:[%s222 + $0x50] sm:$0xff]
      %v249 = vld [vmem:[%s222 + $0x58] sm:$0xff]
      %v250 = vld [vmem:[%s222 + $0x60] sm:$0xff]
      %v251 = vld [vmem:[%s222 + $0x68] sm:$0xff]
      %v252 = vld [vmem:[%s222 + $0x70] sm:$0xff]
      %v253 = vld [vmem:[%s222 + $0x78] sm:$0xff]
      %v254 = vld [vmem:[%s227] sm:$0xff]
      %v255 = vld [vmem:[%s227 + $0x8] sm:$0xff]
      %v256 = vld [vmem:[%s227 + $0x10] sm:$0xff]
      %v257 = vld [vmem:[%s227 + $0x18] sm:$0xff]
      %v258 = vld [vmem:[%s227 + $0x20] sm:$0xff]
      %v259 = vld [vmem:[%s227 + $0x28] sm:$0xff]
      %v260 = vld [vmem:[%s227 + $0x30] sm:$0xff]
      %v261 = vld [vmem:[%s227 + $0x38] sm:$0xff]
      %v262 = vld [vmem:[%s227 + $0x40] sm:$0xff]
      %v263 = vld [vmem:[%s227 + $0x48] sm:$0xff]
      %v264 = vld [vmem:[%s227 + $0x50] sm:$0xff]
      %v265 = vld [vmem:[%s227 + $0x58] sm:$0xff]
      %v266 = vld [vmem:[%s227 + $0x60] sm:$0xff]
      %v267 = vld [vmem:[%s227 + $0x68] sm:$0xff]
      %v268 = vld [vmem:[%s227 + $0x70] sm:$0xff]
      %v269 = vld [vmem:[%s227 + $0x78] sm:$0xff]
      %v270 = vld [vmem:[%s232] sm:$0xff]
      %v271 = vld [vmem:[%s232 + $0x8] sm:$0xff]
      %v272 = vld [vmem:[%s232 + $0x10] sm:$0xff]
      %v273 = vld [vmem:[%s232 + $0x18] sm:$0xff]
      %v274 = vld [vmem:[%s232 + $0x20] sm:$0xff]
      %v275 = vld [vmem:[%s232 + $0x28] sm:$0xff]
      %v276 = vld [vmem:[%s232 + $0x30] sm:$0xff]
      %v277 = vld [vmem:[%s232 + $0x38] sm:$0xff]
      %v278 = vld [vmem:[%s232 + $0x40] sm:$0xff]
      %v279 = vld [vmem:[%s232 + $0x48] sm:$0xff]
      %v280 = vld [vmem:[%s232 + $0x50] sm:$0xff]
      %v281 = vld [vmem:[%s232 + $0x58] sm:$0xff]
      %v282 = vld [vmem:[%s232 + $0x60] sm:$0xff]
      %v283 = vld [vmem:[%s232 + $0x68] sm:$0xff]
      %v284 = vld [vmem:[%s232 + $0x70] sm:$0xff]
      %v285 = vld [vmem:[%s232 + $0x78] sm:$0xff]
      %v286 = vmul.f32 %v238, %v238
      %v287 = vmul.f32 %v239, %v239
      %v288 = vmul.f32 %v240, %v240
      %v289 = vmul.f32 %v241, %v241
      %v290 = vmul.f32 %v242, %v242
      %v291 = vmul.f32 %v243, %v243
      %v292 = vmul.f32 %v244, %v244
      %v293 = vmul.f32 %v245, %v245
      %v294 = vmul.f32 %v246, %v246
      %v295 = vmul.f32 %v247, %v247
      %v296 = vmul.f32 %v248, %v248
      %v297 = vmul.f32 %v249, %v249
      %v298 = vmul.f32 %v250, %v250
      %v299 = vmul.f32 %v251, %v251
      %v300 = vmul.f32 %v252, %v252
      %v301 = vmul.f32 %v253, %v253
      %302 = vadd.xlane.f32.xlu0 %v286
      %v303 = vpop.xlane.xlu0 %302
      %304 = vadd.xlane.f32.xlu0 %v287
      %v305 = vpop.xlane.xlu0 %304
      %306 = vadd.xlane.f32.xlu0 %v288
      %v307 = vpop.xlane.xlu0 %306
      %308 = vadd.xlane.f32.xlu0 %v289
      %v309 = vpop.xlane.xlu0 %308
      %310 = vadd.xlane.f32.xlu0 %v290
      %v311 = vpop.xlane.xlu0 %310
      %312 = vadd.xlane.f32.xlu0 %v291
      %v313 = vpop.xlane.xlu0 %312
      %314 = vadd.xlane.f32.xlu0 %v292
      %v315 = vpop.xlane.xlu0 %314
      %316 = vadd.xlane.f32.xlu0 %v293
      %v317 = vpop.xlane.xlu0 %316
      %318 = vadd.xlane.f32.xlu0 %v294
      %v319 = vpop.xlane.xlu0 %318
      %320 = vadd.xlane.f32.xlu0 %v295
      %v321 = vpop.xlane.xlu0 %320
      %322 = vadd.xlane.f32.xlu0 %v296
      %v323 = vpop.xlane.xlu0 %322
      %324 = vadd.xlane.f32.xlu0 %v297
      %v325 = vpop.xlane.xlu0 %324
      %326 = vadd.xlane.f32.xlu0 %v298
      %v327 = vpop.xlane.xlu0 %326
      %328 = vadd.xlane.f32.xlu0 %v299
      %v329 = vpop.xlane.xlu0 %328
      %330 = vadd.xlane.f32.xlu0 %v300
      %v331 = vpop.xlane.xlu0 %330
      %332 = vadd.xlane.f32.xlu0 %v301
      %v333 = vpop.xlane.xlu0 %332
      %v334 = vmax.f32 %v303, 1e-24
      %v335 = vmax.f32 %v305, 1e-24
      %v336 = vmax.f32 %v307, 1e-24
      %v337 = vmax.f32 %v309, 1e-24
      %v338 = vmax.f32 %v311, 1e-24
      %v339 = vmax.f32 %v313, 1e-24
      %v340 = vmax.f32 %v315, 1e-24
      %v341 = vmax.f32 %v317, 1e-24
      %v342 = vmax.f32 %v319, 1e-24
      %v343 = vmax.f32 %v321, 1e-24
      %v344 = vmax.f32 %v323, 1e-24
      %v345 = vmax.f32 %v325, 1e-24
      %v346 = vmax.f32 %v327, 1e-24
      %v347 = vmax.f32 %v329, 1e-24
      %v348 = vmax.f32 %v331, 1e-24
      %v349 = vmax.f32 %v333, 1e-24
      %v350 = vrsqrt.pop %v334
      %v351 = vrsqrt.pop %v335
      %v352 = vrsqrt.pop %v336
      %v353 = vrsqrt.pop %v337
      %v354 = vrsqrt.pop %v338
      %v355 = vrsqrt.pop %v339
      %v356 = vrsqrt.pop %v340
      %v357 = vrsqrt.pop %v341
      %v358 = vrsqrt.pop %v342
      %v359 = vrsqrt.pop %v343
      %v360 = vrsqrt.pop %v344
      %v361 = vrsqrt.pop %v345
      %v362 = vrsqrt.pop %v346
      %v363 = vrsqrt.pop %v347
      %v364 = vrsqrt.pop %v348
      %v365 = vrsqrt.pop %v349
      %v366 = vmul.f32 %v254, %v254
      %v367 = vmul.f32 %v255, %v255
      %v368 = vmul.f32 %v256, %v256
      %v369 = vmul.f32 %v257, %v257
      %v370 = vmul.f32 %v258, %v258
      %v371 = vmul.f32 %v259, %v259
      %v372 = vmul.f32 %v260, %v260
      %v373 = vmul.f32 %v261, %v261
      %v374 = vmul.f32 %v262, %v262
      %v375 = vmul.f32 %v263, %v263
      %v376 = vmul.f32 %v264, %v264
      %v377 = vmul.f32 %v265, %v265
      %v378 = vmul.f32 %v266, %v266
      %v379 = vmul.f32 %v267, %v267
      %v380 = vmul.f32 %v268, %v268
      %v381 = vmul.f32 %v269, %v269
      %382 = vadd.xlane.f32.xlu0 %v366
      %v383 = vpop.xlane.xlu0 %382
      %384 = vadd.xlane.f32.xlu0 %v367
      %v385 = vpop.xlane.xlu0 %384
      %386 = vadd.xlane.f32.xlu0 %v368
      %v387 = vpop.xlane.xlu0 %386
      %388 = vadd.xlane.f32.xlu0 %v369
      %v389 = vpop.xlane.xlu0 %388
      %390 = vadd.xlane.f32.xlu0 %v370
      %v391 = vpop.xlane.xlu0 %390
      %392 = vadd.xlane.f32.xlu0 %v371
      %v393 = vpop.xlane.xlu0 %392
      %394 = vadd.xlane.f32.xlu0 %v372
      %v395 = vpop.xlane.xlu0 %394
      %396 = vadd.xlane.f32.xlu0 %v373
      %v397 = vpop.xlane.xlu0 %396
      %398 = vadd.xlane.f32.xlu0 %v374
      %v399 = vpop.xlane.xlu0 %398
      %400 = vadd.xlane.f32.xlu0 %v375
      %v401 = vpop.xlane.xlu0 %400
      %402 = vadd.xlane.f32.xlu0 %v376
      %v403 = vpop.xlane.xlu0 %402
      %404 = vadd.xlane.f32.xlu0 %v377
      %v405 = vpop.xlane.xlu0 %404
      %406 = vadd.xlane.f32.xlu0 %v378
      %v407 = vpop.xlane.xlu0 %406
      %408 = vadd.xlane.f32.xlu0 %v379
      %v409 = vpop.xlane.xlu0 %408
      %410 = vadd.xlane.f32.xlu0 %v380
      %v411 = vpop.xlane.xlu0 %410
      %412 = vadd.xlane.f32.xlu0 %v381
      %v413 = vpop.xlane.xlu0 %412
      %v414 = vmax.f32 %v383, 1e-24
      %v415 = vmax.f32 %v385, 1e-24
      %v416 = vmax.f32 %v387, 1e-24
      %v417 = vmax.f32 %v389, 1e-24
      %v418 = vmax.f32 %v391, 1e-24
      %v419 = vmax.f32 %v393, 1e-24
      %v420 = vmax.f32 %v395, 1e-24
      %v421 = vmax.f32 %v397, 1e-24
      %v422 = vmax.f32 %v399, 1e-24
      %v423 = vmax.f32 %v401, 1e-24
      %v424 = vmax.f32 %v403, 1e-24
      %v425 = vmax.f32 %v405, 1e-24
      %v426 = vmax.f32 %v407, 1e-24
      %v427 = vmax.f32 %v409, 1e-24
      %v428 = vmax.f32 %v411, 1e-24
      %v429 = vmax.f32 %v413, 1e-24
      %v430 = vrsqrt.pop %v414
      %v431 = vrsqrt.pop %v415
      %v432 = vrsqrt.pop %v416
      %v433 = vrsqrt.pop %v417
      %v434 = vrsqrt.pop %v418
      %v435 = vrsqrt.pop %v419
      %v436 = vrsqrt.pop %v420
      %v437 = vrsqrt.pop %v421
      %v438 = vrsqrt.pop %v422
      %v439 = vrsqrt.pop %v423
      %v440 = vrsqrt.pop %v424
      %v441 = vrsqrt.pop %v425
      %v442 = vrsqrt.pop %v426
      %v443 = vrsqrt.pop %v427
      %v444 = vrsqrt.pop %v428
      %v445 = vrsqrt.pop %v429
      %v446 = vmul.f32 %v238, %v350
      %v447 = vmul.f32 %v239, %v351
      %v448 = vmul.f32 %v240, %v352
      %v449 = vmul.f32 %v241, %v353
      %v450 = vmul.f32 %v242, %v354
      %v451 = vmul.f32 %v243, %v355
      %v452 = vmul.f32 %v244, %v356
      %v453 = vmul.f32 %v245, %v357
      %v454 = vmul.f32 %v246, %v358
      %v455 = vmul.f32 %v247, %v359
      %v456 = vmul.f32 %v248, %v360
      %v457 = vmul.f32 %v249, %v361
      %v458 = vmul.f32 %v250, %v362
      %v459 = vmul.f32 %v251, %v363
      %v460 = vmul.f32 %v252, %v364
      %v461 = vmul.f32 %v253, %v365
      %v462 = vmul.f32 %v254, %v430
      %v463 = vmul.f32 %v255, %v431
      %v464 = vmul.f32 %v256, %v432
      %v465 = vmul.f32 %v257, %v433
      %v466 = vmul.f32 %v258, %v434
      %v467 = vmul.f32 %v259, %v435
      %v468 = vmul.f32 %v260, %v436
      %v469 = vmul.f32 %v261, %v437
      %v470 = vmul.f32 %v262, %v438
      %v471 = vmul.f32 %v263, %v439
      %v472 = vmul.f32 %v264, %v440
      %v473 = vmul.f32 %v265, %v441
      %v474 = vmul.f32 %v266, %v442
      %v475 = vmul.f32 %v267, %v443
      %v476 = vmul.f32 %v268, %v444
      %v477 = vmul.f32 %v269, %v445
      %478 = vmatprep.subr.mxu0 0.0
      %479 = vmatpush1.xpose.msra.mxu0 %v462
      %480 = vmatprep.subr.mxu0 0.0
      %481 = vmatpush1.xpose.msra.mxu0 %v463
      %482 = vmatprep.subr.mxu0 0.0
      %483 = vmatpush1.xpose.msra.mxu0 0.0
      %484 = vmatprep.subr.mxu0 0.0
      %485 = vmatpush1.xpose.msra.mxu0 0.0
      %486 = vmatprep.subr.mxu0 0.0
      %487 = vmatpush1.xpose.msra.mxu0 0.0
      %488 = vmatprep.subr.mxu0 0.0
      %489 = vmatpush1.xpose.msra.mxu0 0.0
      %490 = vmatprep.subr.mxu0 0.0
      %491 = vmatpush1.xpose.msra.mxu0 0.0
      %492 = vmatprep.subr.mxu0 0.0
      %493 = vmatpush1.xpose.msra.mxu0 0.0
      %494 = vmatprep.subr.mxu0 0.0
      %495 = vmatpush1.xpose.msra.mxu0 0.0
      %496 = vmatprep.subr.mxu0 0.0
      %497 = vmatpush1.xpose.msra.mxu0 0.0
      %498 = vmatprep.subr.mxu0 0.0
      %499 = vmatpush1.xpose.msra.mxu0 0.0
      %500 = vmatprep.subr.mxu0 0.0
      %501 = vmatpush1.xpose.msra.mxu0 0.0
      %502 = vmatprep.subr.mxu0 0.0
      %503 = vmatpush1.xpose.msra.mxu0 0.0
      %504 = vmatprep.subr.mxu0 0.0
      %505 = vmatpush1.xpose.msra.mxu0 0.0
      %506 = vmatprep.subr.mxu0 0.0
      %507 = vmatpush1.xpose.msra.mxu0 0.0
      %508 = vmatprep.subr.mxu0 0.0
      %509 = vmatpush1.xpose.msra.mxu0 0.0
      %510 = vmatprep.subr.mxu0 0.0
      %511 = vmatpush1.xpose.msra.mxu0 0.0
      %512 = vmatprep.subr.mxu0 0.0
      %513 = vmatpush1.xpose.msra.mxu0 0.0
      %514 = vmatprep.subr.mxu0 0.0
      %515 = vmatpush1.xpose.msra.mxu0 0.0
      %516 = vmatprep.subr.mxu0 0.0
      %517 = vmatpush1.xpose.msra.mxu0 0.0
      %518 = vmatprep.subr.mxu0 0.0
      %519 = vmatpush1.xpose.msra.mxu0 0.0
      %520 = vmatprep.subr.mxu0 0.0
      %521 = vmatpush1.xpose.msra.mxu0 0.0
      %522 = vmatprep.subr.mxu0 0.0
      %523 = vmatpush1.xpose.msra.mxu0 0.0
      %524 = vmatprep.subr.mxu0 0.0
      %525 = vmatpush1.xpose.msra.mxu0 0.0
      %526 = vmatprep.subr.mxu0 0.0
      %527 = vmatpush1.xpose.msra.mxu0 0.0
      %528 = vmatprep.subr.mxu0 0.0
      %529 = vmatpush1.xpose.msra.mxu0 0.0
      %530 = vmatprep.subr.mxu0 0.0
      %531 = vmatpush1.xpose.msra.mxu0 0.0
      %532 = vmatprep.subr.mxu0 0.0
      %533 = vmatpush1.xpose.msra.mxu0 0.0
      %534 = vmatprep.subr.mxu0 0.0
      %535 = vmatpush1.xpose.msra.mxu0 0.0
      %536 = vmatprep.subr.mxu0 0.0
      %537 = vmatpush1.xpose.msra.mxu0 0.0
      %538 = vmatprep.subr.mxu0 0.0
      %539 = vmatpush1.xpose.msra.mxu0 0.0
      %540 = vmatprep.subr.mxu0 0.0
      %541 = vmatpush1.xpose.msra.mxu0 0.0
      %542 = vmatprep.mubr.f32.mxu0 0.0
      %543 = vmatmul.mubr.f32.gmra.mrb[0].mxu0 %v446
      %v544 = vpop.f32.mrb[0].mxu0
      %v545 = vadd.f32 0.0, %v544
      %v546 = vpop.f32.mrb[0].mxu0
      %547 = vmatprep.mubr.f32.mxu0 0.0
      %548 = vmatmul.mubr.f32.gmra.mrb[0].mxu0 %v447
      %v549 = vpop.f32.mrb[0].mxu0
      %v550 = vadd.f32 0.0, %v549
      %v551 = vpop.f32.mrb[0].mxu0
      %552 = vdwg.mxu0
      %553 = vmatprep.subr.mxu0 0.0
      %554 = vmatpush1.xpose.msra.mxu0 %v464
      %555 = vmatprep.subr.mxu0 0.0
      %556 = vmatpush1.xpose.msra.mxu0 %v465
      %557 = vmatprep.subr.mxu0 0.0
      %558 = vmatpush1.xpose.msra.mxu0 0.0
      %559 = vmatprep.subr.mxu0 0.0
      %560 = vmatpush1.xpose.msra.mxu0 0.0
      %561 = vmatprep.subr.mxu0 0.0
      %562 = vmatpush1.xpose.msra.mxu0 0.0
      %563 = vmatprep.subr.mxu0 0.0
      %564 = vmatpush1.xpose.msra.mxu0 0.0
      %565 = vmatprep.subr.mxu0 0.0
      %566 = vmatpush1.xpose.msra.mxu0 0.0
      %567 = vmatprep.subr.mxu0 0.0
      %568 = vmatpush1.xpose.msra.mxu0 0.0
      %569 = vmatprep.subr.mxu0 0.0
      %570 = vmatpush1.xpose.msra.mxu0 0.0
      %571 = vmatprep.subr.mxu0 0.0
      %572 = vmatpush1.xpose.msra.mxu0 0.0
      %573 = vmatprep.subr.mxu0 0.0
      %574 = vmatpush1.xpose.msra.mxu0 0.0
      %575 = vmatprep.subr.mxu0 0.0
      %576 = vmatpush1.xpose.msra.mxu0 0.0
      %577 = vmatprep.subr.mxu0 0.0
      %578 = vmatpush1.xpose.msra.mxu0 0.0
      %579 = vmatprep.subr.mxu0 0.0
      %580 = vmatpush1.xpose.msra.mxu0 0.0
      %581 = vmatprep.subr.mxu0 0.0
      %582 = vmatpush1.xpose.msra.mxu0 0.0
      %583 = vmatprep.subr.mxu0 0.0
      %584 = vmatpush1.xpose.msra.mxu0 0.0
      %585 = vmatprep.subr.mxu0 0.0
      %586 = vmatpush1.xpose.msra.mxu0 0.0
      %587 = vmatprep.subr.mxu0 0.0
      %588 = vmatpush1.xpose.msra.mxu0 0.0
      %589 = vmatprep.subr.mxu0 0.0
      %590 = vmatpush1.xpose.msra.mxu0 0.0
      %591 = vmatprep.subr.mxu0 0.0
      %592 = vmatpush1.xpose.msra.mxu0 0.0
      %593 = vmatprep.subr.mxu0 0.0
      %594 = vmatpush1.xpose.msra.mxu0 0.0
      %595 = vmatprep.subr.mxu0 0.0
      %596 = vmatpush1.xpose.msra.mxu0 0.0
      %597 = vmatprep.subr.mxu0 0.0
      %598 = vmatpush1.xpose.msra.mxu0 0.0
      %599 = vmatprep.subr.mxu0 0.0
      %600 = vmatpush1.xpose.msra.mxu0 0.0
      %601 = vmatprep.subr.mxu0 0.0
      %602 = vmatpush1.xpose.msra.mxu0 0.0
      %603 = vmatprep.subr.mxu0 0.0
      %604 = vmatpush1.xpose.msra.mxu0 0.0
      %605 = vmatprep.subr.mxu0 0.0
      %606 = vmatpush1.xpose.msra.mxu0 0.0
      %607 = vmatprep.subr.mxu0 0.0
      %608 = vmatpush1.xpose.msra.mxu0 0.0
      %609 = vmatprep.subr.mxu0 0.0
      %610 = vmatpush1.xpose.msra.mxu0 0.0
      %611 = vmatprep.subr.mxu0 0.0
      %612 = vmatpush1.xpose.msra.mxu0 0.0
      %613 = vmatprep.subr.mxu0 0.0
      %614 = vmatpush1.xpose.msra.mxu0 0.0
      %615 = vmatprep.subr.mxu0 0.0
      %616 = vmatpush1.xpose.msra.mxu0 0.0
      %617 = vmatprep.mubr.f32.mxu0 0.0
      %618 = vmatmul.mubr.f32.gmra.mrb[0].mxu0 %v448
      %v619 = vpop.f32.mrb[0].mxu0
      %v620 = vadd.f32 0.0, %v619
      %v621 = vpop.f32.mrb[0].mxu0
      %622 = vmatprep.mubr.f32.mxu0 0.0
      %623 = vmatmul.mubr.f32.gmra.mrb[0].mxu0 %v449
      %v624 = vpop.f32.mrb[0].mxu0
      %v625 = vadd.f32 0.0, %v624
      %v626 = vpop.f32.mrb[0].mxu0
      %627 = vdwg.mxu0
      %628 = vmatprep.subr.mxu0 0.0
      %629 = vmatpush1.xpose.msra.mxu0 %v466
      %630 = vmatprep.subr.mxu0 0.0
      %631 = vmatpush1.xpose.msra.mxu0 %v467
      %632 = vmatprep.subr.mxu0 0.0
      %633 = vmatpush1.xpose.msra.mxu0 0.0
      %634 = vmatprep.subr.mxu0 0.0
      %635 = vmatpush1.xpose.msra.mxu0 0.0
      %636 = vmatprep.subr.mxu0 0.0
      %637 = vmatpush1.xpose.msra.mxu0 0.0
      %638 = vmatprep.subr.mxu0 0.0
      %639 = vmatpush1.xpose.msra.mxu0 0.0
      %640 = vmatprep.subr.mxu0 0.0
      %641 = vmatpush1.xpose.msra.mxu0 0.0
      %642 = vmatprep.subr.mxu0 0.0
      %643 = vmatpush1.xpose.msra.mxu0 0.0
      %644 = vmatprep.subr.mxu0 0.0
      %645 = vmatpush1.xpose.msra.mxu0 0.0
      %646 = vmatprep.subr.mxu0 0.0
      %647 = vmatpush1.xpose.msra.mxu0 0.0
      %648 = vmatprep.subr.mxu0 0.0
      %649 = vmatpush1.xpose.msra.mxu0 0.0
      %650 = vmatprep.subr.mxu0 0.0
      %651 = vmatpush1.xpose.msra.mxu0 0.0
      %652 = vmatprep.subr.mxu0 0.0
      %653 = vmatpush1.xpose.msra.mxu0 0.0
      %654 = vmatprep.subr.mxu0 0.0
      %655 = vmatpush1.xpose.msra.mxu0 0.0
      %656 = vmatprep.subr.mxu0 0.0
      %657 = vmatpush1.xpose.msra.mxu0 0.0
      %658 = vmatprep.subr.mxu0 0.0
      %659 = vmatpush1.xpose.msra.mxu0 0.0
      %660 = vmatprep.subr.mxu0 0.0
      %661 = vmatpush1.xpose.msra.mxu0 0.0
      %662 = vmatprep.subr.mxu0 0.0
      %663 = vmatpush1.xpose.msra.mxu0 0.0
      %664 = vmatprep.subr.mxu0 0.0
      %665 = vmatpush1.xpose.msra.mxu0 0.0
      %666 = vmatprep.subr.mxu0 0.0
      %667 = vmatpush1.xpose.msra.mxu0 0.0
      %668 = vmatprep.subr.mxu0 0.0
      %669 = vmatpush1.xpose.msra.mxu0 0.0
      %670 = vmatprep.subr.mxu0 0.0
      %671 = vmatpush1.xpose.msra.mxu0 0.0
      %672 = vmatprep.subr.mxu0 0.0
      %673 = vmatpush1.xpose.msra.mxu0 0.0
      %674 = vmatprep.subr.mxu0 0.0
      %675 = vmatpush1.xpose.msra.mxu0 0.0
      %676 = vmatprep.subr.mxu0 0.0
      %677 = vmatpush1.xpose.msra.mxu0 0.0
      %678 = vmatprep.subr.mxu0 0.0
      %679 = vmatpush1.xpose.msra.mxu0 0.0
      %680 = vmatprep.subr.mxu0 0.0
      %681 = vmatpush1.xpose.msra.mxu0 0.0
      %682 = vmatprep.subr.mxu0 0.0
      %683 = vmatpush1.xpose.msra.mxu0 0.0
      %684 = vmatprep.subr.mxu0 0.0
      %685 = vmatpush1.xpose.msra.mxu0 0.0
      %686 = vmatprep.subr.mxu0 0.0
      %687 = vmatpush1.xpose.msra.mxu0 0.0
      %688 = vmatprep.subr.mxu0 0.0
      %689 = vmatpush1.xpose.msra.mxu0 0.0
      %690 = vmatprep.subr.mxu0 0.0
      %691 = vmatpush1.xpose.msra.mxu0 0.0
      %692 = vmatprep.mubr.f32.mxu0 0.0
      %693 = vmatmul.mubr.f32.gmra.mrb[0].mxu0 %v450
      %v694 = vpop.f32.mrb[0].mxu0
      %v695 = vadd.f32 0.0, %v694
      %v696 = vpop.f32.mrb[0].mxu0
      %697 = vmatprep.mubr.f32.mxu0 0.0
      %698 = vmatmul.mubr.f32.gmra.mrb[0].mxu0 %v451
      %v699 = vpop.f32.mrb[0].mxu0
      %v700 = vadd.f32 0.0, %v699
      %v701 = vpop.f32.mrb[0].mxu0
      %702 = vdwg.mxu0
      %703 = vmatprep.subr.mxu0 0.0
      %704 = vmatpush1.xpose.msra.mxu0 %v468
      %705 = vmatprep.subr.mxu0 0.0
      %706 = vmatpush1.xpose.msra.mxu0 %v469
      %707 = vmatprep.subr.mxu0 0.0
      %708 = vmatpush1.xpose.msra.mxu0 0.0
      %709 = vmatprep.subr.mxu0 0.0
      %710 = vmatpush1.xpose.msra.mxu0 0.0
      %711 = vmatprep.subr.mxu0 0.0
      %712 = vmatpush1.xpose.msra.mxu0 0.0
      %713 = vmatprep.subr.mxu0 0.0
      %714 = vmatpush1.xpose.msra.mxu0 0.0
      %715 = vmatprep.subr.mxu0 0.0
      %716 = vmatpush1.xpose.msra.mxu0 0.0
      %717 = vmatprep.subr.mxu0 0.0
      %718 = vmatpush1.xpose.msra.mxu0 0.0
      %719 = vmatprep.subr.mxu0 0.0
      %720 = vmatpush1.xpose.msra.mxu0 0.0
      %721 = vmatprep.subr.mxu0 0.0
      %722 = vmatpush1.xpose.msra.mxu0 0.0
      %723 = vmatprep.subr.mxu0 0.0
      %724 = vmatpush1.xpose.msra.mxu0 0.0
      %725 = vmatprep.subr.mxu0 0.0
      %726 = vmatpush1.xpose.msra.mxu0 0.0
      %727 = vmatprep.subr.mxu0 0.0
      %728 = vmatpush1.xpose.msra.mxu0 0.0
      %729 = vmatprep.subr.mxu0 0.0
      %730 = vmatpush1.xpose.msra.mxu0 0.0
      %731 = vmatprep.subr.mxu0 0.0
      %732 = vmatpush1.xpose.msra.mxu0 0.0
      %733 = vmatprep.subr.mxu0 0.0
      %734 = vmatpush1.xpose.msra.mxu0 0.0
      %735 = vmatprep.subr.mxu0 0.0
      %736 = vmatpush1.xpose.msra.mxu0 0.0
      %737 = vmatprep.subr.mxu0 0.0
      %738 = vmatpush1.xpose.msra.mxu0 0.0
      %739 = vmatprep.subr.mxu0 0.0
      %740 = vmatpush1.xpose.msra.mxu0 0.0
      %741 = vmatprep.subr.mxu0 0.0
      %742 = vmatpush1.xpose.msra.mxu0 0.0
      %743 = vmatprep.subr.mxu0 0.0
      %744 = vmatpush1.xpose.msra.mxu0 0.0
      %745 = vmatprep.subr.mxu0 0.0
      %746 = vmatpush1.xpose.msra.mxu0 0.0
      %747 = vmatprep.subr.mxu0 0.0
      %748 = vmatpush1.xpose.msra.mxu0 0.0
      %749 = vmatprep.subr.mxu0 0.0
      %750 = vmatpush1.xpose.msra.mxu0 0.0
      %751 = vmatprep.subr.mxu0 0.0
      %752 = vmatpush1.xpose.msra.mxu0 0.0
      %753 = vmatprep.subr.mxu0 0.0
      %754 = vmatpush1.xpose.msra.mxu0 0.0
      %755 = vmatprep.subr.mxu0 0.0
      %756 = vmatpush1.xpose.msra.mxu0 0.0
      %757 = vmatprep.subr.mxu0 0.0
      %758 = vmatpush1.xpose.msra.mxu0 0.0
      %759 = vmatprep.subr.mxu0 0.0
      %760 = vmatpush1.xpose.msra.mxu0 0.0
      %761 = vmatprep.subr.mxu0 0.0
      %762 = vmatpush1.xpose.msra.mxu0 0.0
      %763 = vmatprep.subr.mxu0 0.0
      %764 = vmatpush1.xpose.msra.mxu0 0.0
      %765 = vmatprep.subr.mxu0 0.0
      %766 = vmatpush1.xpose.msra.mxu0 0.0
      %767 = vmatprep.mubr.f32.mxu0 0.0
      %768 = vmatmul.mubr.f32.gmra.mrb[0].mxu0 %v452
      %v769 = vpop.f32.mrb[0].mxu0
      %v770 = vadd.f32 0.0, %v769
      %v771 = vpop.f32.mrb[0].mxu0
      %772 = vmatprep.mubr.f32.mxu0 0.0
      %773 = vmatmul.mubr.f32.gmra.mrb[0].mxu0 %v453
      %v774 = vpop.f32.mrb[0].mxu0
      %v775 = vadd.f32 0.0, %v774
      %v776 = vpop.f32.mrb[0].mxu0
      %777 = vdwg.mxu0
      %778 = vmatprep.subr.mxu0 0.0
      %779 = vmatpush1.xpose.msra.mxu0 %v470
      %780 = vmatprep.subr.mxu0 0.0
      %781 = vmatpush1.xpose.msra.mxu0 %v471
      %782 = vmatprep.subr.mxu0 0.0
      %783 = vmatpush1.xpose.msra.mxu0 0.0
      %784 = vmatprep.subr.mxu0 0.0
      %785 = vmatpush1.xpose.msra.mxu0 0.0
      %786 = vmatprep.subr.mxu0 0.0
      %787 = vmatpush1.xpose.msra.mxu0 0.0
      %788 = vmatprep.subr.mxu0 0.0
      %789 = vmatpush1.xpose.msra.mxu0 0.0
      %790 = vmatprep.subr.mxu0 0.0
      %791 = vmatpush1.xpose.msra.mxu0 0.0
      %792 = vmatprep.subr.mxu0 0.0
      %793 = vmatpush1.xpose.msra.mxu0 0.0
      %794 = vmatprep.subr.mxu0 0.0
      %795 = vmatpush1.xpose.msra.mxu0 0.0
      %796 = vmatprep.subr.mxu0 0.0
      %797 = vmatpush1.xpose.msra.mxu0 0.0
      %798 = vmatprep.subr.mxu0 0.0
      %799 = vmatpush1.xpose.msra.mxu0 0.0
      %800 = vmatprep.subr.mxu0 0.0
      %801 = vmatpush1.xpose.msra.mxu0 0.0
      %802 = vmatprep.subr.mxu0 0.0
      %803 = vmatpush1.xpose.msra.mxu0 0.0
      %804 = vmatprep.subr.mxu0 0.0
      %805 = vmatpush1.xpose.msra.mxu0 0.0
      %806 = vmatprep.subr.mxu0 0.0
      %807 = vmatpush1.xpose.msra.mxu0 0.0
      %808 = vmatprep.subr.mxu0 0.0
      %809 = vmatpush1.xpose.msra.mxu0 0.0
      %810 = vmatprep.subr.mxu0 0.0
      %811 = vmatpush1.xpose.msra.mxu0 0.0
      %812 = vmatprep.subr.mxu0 0.0
      %813 = vmatpush1.xpose.msra.mxu0 0.0
      %814 = vmatprep.subr.mxu0 0.0
      %815 = vmatpush1.xpose.msra.mxu0 0.0
      %816 = vmatprep.subr.mxu0 0.0
      %817 = vmatpush1.xpose.msra.mxu0 0.0
      %818 = vmatprep.subr.mxu0 0.0
      %819 = vmatpush1.xpose.msra.mxu0 0.0
      %820 = vmatprep.subr.mxu0 0.0
      %821 = vmatpush1.xpose.msra.mxu0 0.0
      %822 = vmatprep.subr.mxu0 0.0
      %823 = vmatpush1.xpose.msra.mxu0 0.0
      %824 = vmatprep.subr.mxu0 0.0
      %825 = vmatpush1.xpose.msra.mxu0 0.0
      %826 = vmatprep.subr.mxu0 0.0
      %827 = vmatpush1.xpose.msra.mxu0 0.0
      %828 = vmatprep.subr.mxu0 0.0
      %829 = vmatpush1.xpose.msra.mxu0 0.0
      %830 = vmatprep.subr.mxu0 0.0
      %831 = vmatpush1.xpose.msra.mxu0 0.0
      %832 = vmatprep.subr.mxu0 0.0
      %833 = vmatpush1.xpose.msra.mxu0 0.0
      %834 = vmatprep.subr.mxu0 0.0
      %835 = vmatpush1.xpose.msra.mxu0 0.0
      %836 = vmatprep.subr.mxu0 0.0
      %837 = vmatpush1.xpose.msra.mxu0 0.0
      %838 = vmatprep.subr.mxu0 0.0
      %839 = vmatpush1.xpose.msra.mxu0 0.0
      %840 = vmatprep.subr.mxu0 0.0
      %841 = vmatpush1.xpose.msra.mxu0 0.0
      %842 = vmatprep.mubr.f32.mxu0 0.0
      %843 = vmatmul.mubr.f32.gmra.mrb[0].mxu0 %v454
      %v844 = vpop.f32.mrb[0].mxu0
      %v845 = vadd.f32 0.0, %v844
      %v846 = vpop.f32.mrb[0].mxu0
      %847 = vmatprep.mubr.f32.mxu0 0.0
      %848 = vmatmul.mubr.f32.gmra.mrb[0].mxu0 %v455
      %v849 = vpop.f32.mrb[0].mxu0
      %v850 = vadd.f32 0.0, %v849
      %v851 = vpop.f32.mrb[0].mxu0
      %852 = vdwg.mxu0
      %853 = vmatprep.subr.mxu0 0.0
      %854 = vmatpush1.xpose.msra.mxu0 %v472
      %855 = vmatprep.subr.mxu0 0.0
      %856 = vmatpush1.xpose.msra.mxu0 %v473
      %857 = vmatprep.subr.mxu0 0.0
      %858 = vmatpush1.xpose.msra.mxu0 0.0
      %859 = vmatprep.subr.mxu0 0.0
      %860 = vmatpush1.xpose.msra.mxu0 0.0
      %861 = vmatprep.subr.mxu0 0.0
      %862 = vmatpush1.xpose.msra.mxu0 0.0
      %863 = vmatprep.subr.mxu0 0.0
      %864 = vmatpush1.xpose.msra.mxu0 0.0
      %865 = vmatprep.subr.mxu0 0.0
      %866 = vmatpush1.xpose.msra.mxu0 0.0
      %867 = vmatprep.subr.mxu0 0.0
      %868 = vmatpush1.xpose.msra.mxu0 0.0
      %869 = vmatprep.subr.mxu0 0.0
      %870 = vmatpush1.xpose.msra.mxu0 0.0
      %871 = vmatprep.subr.mxu0 0.0
      %872 = vmatpush1.xpose.msra.mxu0 0.0
      %873 = vmatprep.subr.mxu0 0.0
      %874 = vmatpush1.xpose.msra.mxu0 0.0
      %875 = vmatprep.subr.mxu0 0.0
      %876 = vmatpush1.xpose.msra.mxu0 0.0
      %877 = vmatprep.subr.mxu0 0.0
      %878 = vmatpush1.xpose.msra.mxu0 0.0
      %879 = vmatprep.subr.mxu0 0.0
      %880 = vmatpush1.xpose.msra.mxu0 0.0
      %881 = vmatprep.subr.mxu0 0.0
      %882 = vmatpush1.xpose.msra.mxu0 0.0
      %883 = vmatprep.subr.mxu0 0.0
      %884 = vmatpush1.xpose.msra.mxu0 0.0
      %885 = vmatprep.subr.mxu0 0.0
      %886 = vmatpush1.xpose.msra.mxu0 0.0
      %887 = vmatprep.subr.mxu0 0.0
      %888 = vmatpush1.xpose.msra.mxu0 0.0
      %889 = vmatprep.subr.mxu0 0.0
      %890 = vmatpush1.xpose.msra.mxu0 0.0
      %891 = vmatprep.subr.mxu0 0.0
      %892 = vmatpush1.xpose.msra.mxu0 0.0
      %893 = vmatprep.subr.mxu0 0.0
      %894 = vmatpush1.xpose.msra.mxu0 0.0
      %895 = vmatprep.subr.mxu0 0.0
      %896 = vmatpush1.xpose.msra.mxu0 0.0
      %897 = vmatprep.subr.mxu0 0.0
      %898 = vmatpush1.xpose.msra.mxu0 0.0
      %899 = vmatprep.subr.mxu0 0.0
      %900 = vmatpush1.xpose.msra.mxu0 0.0
      %901 = vmatprep.subr.mxu0 0.0
      %902 = vmatpush1.xpose.msra.mxu0 0.0
      %903 = vmatprep.subr.mxu0 0.0
      %904 = vmatpush1.xpose.msra.mxu0 0.0
      %905 = vmatprep.subr.mxu0 0.0
      %906 = vmatpush1.xpose.msra.mxu0 0.0
      %907 = vmatprep.subr.mxu0 0.0
      %908 = vmatpush1.xpose.msra.mxu0 0.0
      %909 = vmatprep.subr.mxu0 0.0
      %910 = vmatpush1.xpose.msra.mxu0 0.0
      %911 = vmatprep.subr.mxu0 0.0
      %912 = vmatpush1.xpose.msra.mxu0 0.0
      %913 = vmatprep.subr.mxu0 0.0
      %914 = vmatpush1.xpose.msra.mxu0 0.0
      %915 = vmatprep.subr.mxu0 0.0
      %916 = vmatpush1.xpose.msra.mxu0 0.0
      %917 = vmatprep.mubr.f32.mxu0 0.0
      %918 = vmatmul.mubr.f32.gmra.mrb[0].mxu0 %v456
      %v919 = vpop.f32.mrb[0].mxu0
      %v920 = vadd.f32 0.0, %v919
      %v921 = vpop.f32.mrb[0].mxu0
      %922 = vmatprep.mubr.f32.mxu0 0.0
      %923 = vmatmul.mubr.f32.gmra.mrb[0].mxu0 %v457
      %v924 = vpop.f32.mrb[0].mxu0
      %v925 = vadd.f32 0.0, %v924
      %v926 = vpop.f32.mrb[0].mxu0
      %927 = vdwg.mxu0
      %928 = vmatprep.subr.mxu0 0.0
      %929 = vmatpush1.xpose.msra.mxu0 %v474
      %930 = vmatprep.subr.mxu0 0.0
      %931 = vmatpush1.xpose.msra.mxu0 %v475
      %932 = vmatprep.subr.mxu0 0.0
      %933 = vmatpush1.xpose.msra.mxu0 0.0
      %934 = vmatprep.subr.mxu0 0.0
      %935 = vmatpush1.xpose.msra.mxu0 0.0
      %936 = vmatprep.subr.mxu0 0.0
      %937 = vmatpush1.xpose.msra.mxu0 0.0
      %938 = vmatprep.subr.mxu0 0.0
      %939 = vmatpush1.xpose.msra.mxu0 0.0
      %940 = vmatprep.subr.mxu0 0.0
      %941 = vmatpush1.xpose.msra.mxu0 0.0
      %942 = vmatprep.subr.mxu0 0.0
      %943 = vmatpush1.xpose.msra.mxu0 0.0
      %944 = vmatprep.subr.mxu0 0.0
      %945 = vmatpush1.xpose.msra.mxu0 0.0
      %946 = vmatprep.subr.mxu0 0.0
      %947 = vmatpush1.xpose.msra.mxu0 0.0
      %948 = vmatprep.subr.mxu0 0.0
      %949 = vmatpush1.xpose.msra.mxu0 0.0
      %950 = vmatprep.subr.mxu0 0.0
      %951 = vmatpush1.xpose.msra.mxu0 0.0
      %952 = vmatprep.subr.mxu0 0.0
      %953 = vmatpush1.xpose.msra.mxu0 0.0
      %954 = vmatprep.subr.mxu0 0.0
      %955 = vmatpush1.xpose.msra.mxu0 0.0
      %956 = vmatprep.subr.mxu0 0.0
      %957 = vmatpush1.xpose.msra.mxu0 0.0
      %958 = vmatprep.subr.mxu0 0.0
      %959 = vmatpush1.xpose.msra.mxu0 0.0
      %960 = vmatprep.subr.mxu0 0.0
      %961 = vmatpush1.xpose.msra.mxu0 0.0
      %962 = vmatprep.subr.mxu0 0.0
      %963 = vmatpush1.xpose.msra.mxu0 0.0
      %964 = vmatprep.subr.mxu0 0.0
      %965 = vmatpush1.xpose.msra.mxu0 0.0
      %966 = vmatprep.subr.mxu0 0.0
      %967 = vmatpush1.xpose.msra.mxu0 0.0
      %968 = vmatprep.subr.mxu0 0.0
      %969 = vmatpush1.xpose.msra.mxu0 0.0
      %970 = vmatprep.subr.mxu0 0.0
      %971 = vmatpush1.xpose.msra.mxu0 0.0
      %972 = vmatprep.subr.mxu0 0.0
      %973 = vmatpush1.xpose.msra.mxu0 0.0
      %974 = vmatprep.subr.mxu0 0.0
      %975 = vmatpush1.xpose.msra.mxu0 0.0
      %976 = vmatprep.subr.mxu0 0.0
      %977 = vmatpush1.xpose.msra.mxu0 0.0
      %978 = vmatprep.subr.mxu0 0.0
      %979 = vmatpush1.xpose.msra.mxu0 0.0
      %980 = vmatprep.subr.mxu0 0.0
      %981 = vmatpush1.xpose.msra.mxu0 0.0
      %982 = vmatprep.subr.mxu0 0.0
      %983 = vmatpush1.xpose.msra.mxu0 0.0
      %984 = vmatprep.subr.mxu0 0.0
      %985 = vmatpush1.xpose.msra.mxu0 0.0
      %986 = vmatprep.subr.mxu0 0.0
      %987 = vmatpush1.xpose.msra.mxu0 0.0
      %988 = vmatprep.subr.mxu0 0.0
      %989 = vmatpush1.xpose.msra.mxu0 0.0
      %990 = vmatprep.subr.mxu0 0.0
      %991 = vmatpush1.xpose.msra.mxu0 0.0
      %992 = vmatprep.mubr.f32.mxu0 0.0
      %993 = vmatmul.mubr.f32.gmra.mrb[0].mxu0 %v458
      %v994 = vpop.f32.mrb[0].mxu0
      %v995 = vadd.f32 0.0, %v994
      %v996 = vpop.f32.mrb[0].mxu0
      %997 = vmatprep.mubr.f32.mxu0 0.0
      %998 = vmatmul.mubr.f32.gmra.mrb[0].mxu0 %v459
      %v999 = vpop.f32.mrb[0].mxu0
      %v1000 = vadd.f32 0.0, %v999
      %v1001 = vpop.f32.mrb[0].mxu0
      %1002 = vdwg.mxu0
      %1003 = vmatprep.subr.mxu0 0.0
      %1004 = vmatpush1.xpose.msra.mxu0 %v476
      %1005 = vmatprep.subr.mxu0 0.0
      %1006 = vmatpush1.xpose.msra.mxu0 %v477
      %1007 = vmatprep.subr.mxu0 0.0
      %1008 = vmatpush1.xpose.msra.mxu0 0.0
      %1009 = vmatprep.subr.mxu0 0.0
      %1010 = vmatpush1.xpose.msra.mxu0 0.0
      %1011 = vmatprep.subr.mxu0 0.0
      %1012 = vmatpush1.xpose.msra.mxu0 0.0
      %1013 = vmatprep.subr.mxu0 0.0
      %1014 = vmatpush1.xpose.msra.mxu0 0.0
      %1015 = vmatprep.subr.mxu0 0.0
      %1016 = vmatpush1.xpose.msra.mxu0 0.0
      %1017 = vmatprep.subr.mxu0 0.0
      %1018 = vmatpush1.xpose.msra.mxu0 0.0
      %1019 = vmatprep.subr.mxu0 0.0
      %1020 = vmatpush1.xpose.msra.mxu0 0.0
      %1021 = vmatprep.subr.mxu0 0.0
      %1022 = vmatpush1.xpose.msra.mxu0 0.0
      %1023 = vmatprep.subr.mxu0 0.0
      %1024 = vmatpush1.xpose.msra.mxu0 0.0
      %1025 = vmatprep.subr.mxu0 0.0
      %1026 = vmatpush1.xpose.msra.mxu0 0.0
      %1027 = vmatprep.subr.mxu0 0.0
      %1028 = vmatpush1.xpose.msra.mxu0 0.0
      %1029 = vmatprep.subr.mxu0 0.0
      %1030 = vmatpush1.xpose.msra.mxu0 0.0
      %1031 = vmatprep.subr.mxu0 0.0
      %1032 = vmatpush1.xpose.msra.mxu0 0.0
      %1033 = vmatprep.subr.mxu0 0.0
      %1034 = vmatpush1.xpose.msra.mxu0 0.0
      %1035 = vmatprep.subr.mxu0 0.0
      %1036 = vmatpush1.xpose.msra.mxu0 0.0
      %1037 = vmatprep.subr.mxu0 0.0
      %1038 = vmatpush1.xpose.msra.mxu0 0.0
      %1039 = vmatprep.subr.mxu0 0.0
      %1040 = vmatpush1.xpose.msra.mxu0 0.0
      %1041 = vmatprep.subr.mxu0 0.0
      %1042 = vmatpush1.xpose.msra.mxu0 0.0
      %1043 = vmatprep.subr.mxu0 0.0
      %1044 = vmatpush1.xpose.msra.mxu0 0.0
      %1045 = vmatprep.subr.mxu0 0.0
      %1046 = vmatpush1.xpose.msra.mxu0 0.0
      %1047 = vmatprep.subr.mxu0 0.0
      %1048 = vmatpush1.xpose.msra.mxu0 0.0
      %1049 = vmatprep.subr.mxu0 0.0
      %1050 = vmatpush1.xpose.msra.mxu0 0.0
      %1051 = vmatprep.subr.mxu0 0.0
      %1052 = vmatpush1.xpose.msra.mxu0 0.0
      %1053 = vmatprep.subr.mxu0 0.0
      %1054 = vmatpush1.xpose.msra.mxu0 0.0
      %1055 = vmatprep.subr.mxu0 0.0
      %1056 = vmatpush1.xpose.msra.mxu0 0.0
      %1057 = vmatprep.subr.mxu0 0.0
      %1058 = vmatpush1.xpose.msra.mxu0 0.0
      %1059 = vmatprep.subr.mxu0 0.0
      %1060 = vmatpush1.xpose.msra.mxu0 0.0
      %1061 = vmatprep.subr.mxu0 0.0
      %1062 = vmatpush1.xpose.msra.mxu0 0.0
      %1063 = vmatprep.subr.mxu0 0.0
      %1064 = vmatpush1.xpose.msra.mxu0 0.0
      %1065 = vmatprep.subr.mxu0 0.0
      %1066 = vmatpush1.xpose.msra.mxu0 0.0
      %1067 = vmatprep.mubr.f32.mxu0 0.0
      %1068 = vmatmul.mubr.f32.gmra.mrb[0].mxu0 %v460
      %v1069 = vpop.f32.mrb[0].mxu0
      %v1070 = vadd.f32 0.0, %v1069
      %v1071 = vpop.f32.mrb[0].mxu0
      %1072 = vmatprep.mubr.f32.mxu0 0.0
      %1073 = vmatmul.mubr.f32.gmra.mrb[0].mxu0 %v461
      %v1074 = vpop.f32.mrb[0].mxu0
      %v1075 = vadd.f32 0.0, %v1074
      %v1076 = vpop.f32.mrb[0].mxu0
      %1077 = vdwg.mxu0
      %v1078 = vld [vmem:[%s3] sm:$0x1]
      %v1079 = vld [vmem:[%s3 + $0x1] sm:$0x1]
      %v1080 = vld [vmem:[%s3 + $0x2] sm:$0x1]
      %v1081 = vld [vmem:[%s3 + $0x3] sm:$0x1]
      %v1082 = vld [vmem:[%s3 + $0x4] sm:$0x1]
      %v1083 = vld [vmem:[%s3 + $0x5] sm:$0x1]
      %v1084 = vld [vmem:[%s3 + $0x6] sm:$0x1]
      %v1085 = vld [vmem:[%s3 + $0x7] sm:$0x1]
      %v1094 = vlaneseq
      %v1095 = vshrl.u32 %v1094, 7
      %v1096 = vsub.s32 0, %v1095
      %v1097 = vrot.slane %v1078, %v1096
      %v1098 = vlaneseq
      %v1099 = vshrl.u32 %v1098, 7
      %v1100 = vsub.s32 0, %v1099
      %v1101 = vrot.slane %v1079, %v1100
      %v1102 = vlaneseq
      %v1103 = vshrl.u32 %v1102, 7
      %v1104 = vsub.s32 0, %v1103
      %v1105 = vrot.slane %v1080, %v1104
      %v1106 = vlaneseq
      %v1107 = vshrl.u32 %v1106, 7
      %v1108 = vsub.s32 0, %v1107
      %v1109 = vrot.slane %v1081, %v1108
      %v1110 = vlaneseq
      %v1111 = vshrl.u32 %v1110, 7
      %v1112 = vsub.s32 0, %v1111
      %v1113 = vrot.slane %v1082, %v1112
      %v1114 = vlaneseq
      %v1115 = vshrl.u32 %v1114, 7
      %v1116 = vsub.s32 0, %v1115
      %v1117 = vrot.slane %v1083, %v1116
      %v1118 = vlaneseq
      %v1119 = vshrl.u32 %v1118, 7
      %v1120 = vsub.s32 0, %v1119
      %v1121 = vrot.slane %v1084, %v1120
      %v1122 = vlaneseq
      %v1123 = vshrl.u32 %v1122, 7
      %v1124 = vsub.s32 0, %v1123
      %v1125 = vrot.slane %v1085, %v1124
      %1126 = vset.pattern.permute.xlu0 0
      %1127 = vperm.xlu0 %1126, %v1097
      %v1128 = vpop.permute.xlu0 %1127
      %1130 = vset.pattern.permute.xlu0 0
      %1131 = vperm.xlu0 %1130, %v1101
      %v1132 = vpop.permute.xlu0 %1131
      %1134 = vset.pattern.permute.xlu0 0
      %1135 = vperm.xlu0 %1134, %v1105
      %v1136 = vpop.permute.xlu0 %1135
      %1138 = vset.pattern.permute.xlu0 0
      %1139 = vperm.xlu0 %1138, %v1109
      %v1140 = vpop.permute.xlu0 %1139
      %1142 = vset.pattern.permute.xlu0 0
      %1143 = vperm.xlu0 %1142, %v1113
      %v1144 = vpop.permute.xlu0 %1143
      %1146 = vset.pattern.permute.xlu0 0
      %1147 = vperm.xlu0 %1146, %v1117
      %v1148 = vpop.permute.xlu0 %1147
      %1150 = vset.pattern.permute.xlu0 0
      %1151 = vperm.xlu0 %1150, %v1121
      %v1152 = vpop.permute.xlu0 %1151
      %1154 = vset.pattern.permute.xlu0 0
      %1155 = vperm.xlu0 %1154, %v1125
      %v1156 = vpop.permute.xlu0 %1155
      %v1158 = vmul.f32 %v545, %v1128
      %v1159 = vmul.f32 %v550, %v1128
      %v1160 = vmul.f32 %v620, %v1132
      %v1161 = vmul.f32 %v625, %v1132
      %v1162 = vmul.f32 %v695, %v1136
      %v1163 = vmul.f32 %v700, %v1136
      %v1164 = vmul.f32 %v770, %v1140
      %v1165 = vmul.f32 %v775, %v1140
      %v1166 = vmul.f32 %v845, %v1144
      %v1167 = vmul.f32 %v850, %v1144
      %v1168 = vmul.f32 %v920, %v1148
      %v1169 = vmul.f32 %v925, %v1148
      %v1170 = vmul.f32 %v995, %v1152
      %v1171 = vmul.f32 %v1000, %v1152
      %v1172 = vmul.f32 %v1070, %v1156
      %v1173 = vmul.f32 %v1075, %v1156
      %vm1174 = vcmask 130048
      %v1175 = vsel %vm1174, %v1158, -inf
      %1176 = vmax.xlane.f32.xlu0 %v1175
      %v1177 = vpop.xlane.xlu0 %1176
      %v1178 = vsel %vm1174, %v1159, -inf
      %1179 = vmax.xlane.f32.xlu0 %v1178
      %v1180 = vpop.xlane.xlu0 %1179
      %v1181 = vsel %vm1174, %v1160, -inf
      %1182 = vmax.xlane.f32.xlu0 %v1181
      %v1183 = vpop.xlane.xlu0 %1182
      %v1184 = vsel %vm1174, %v1161, -inf
      %1185 = vmax.xlane.f32.xlu0 %v1184
      %v1186 = vpop.xlane.xlu0 %1185
      %v1187 = vsel %vm1174, %v1162, -inf
      %1188 = vmax.xlane.f32.xlu0 %v1187
      %v1189 = vpop.xlane.xlu0 %1188
      %v1190 = vsel %vm1174, %v1163, -inf
      %1191 = vmax.xlane.f32.xlu0 %v1190
      %v1192 = vpop.xlane.xlu0 %1191
      %v1193 = vsel %vm1174, %v1164, -inf
      %1194 = vmax.xlane.f32.xlu0 %v1193
      %v1195 = vpop.xlane.xlu0 %1194
      %v1196 = vsel %vm1174, %v1165, -inf
      %1197 = vmax.xlane.f32.xlu0 %v1196
      %v1198 = vpop.xlane.xlu0 %1197
      %v1199 = vsel %vm1174, %v1166, -inf
      %1200 = vmax.xlane.f32.xlu0 %v1199
      %v1201 = vpop.xlane.xlu0 %1200
      %v1202 = vsel %vm1174, %v1167, -inf
      %1203 = vmax.xlane.f32.xlu0 %v1202
      %v1204 = vpop.xlane.xlu0 %1203
      %v1205 = vsel %vm1174, %v1168, -inf
      %1206 = vmax.xlane.f32.xlu0 %v1205
      %v1207 = vpop.xlane.xlu0 %1206
      %v1208 = vsel %vm1174, %v1169, -inf
      %1209 = vmax.xlane.f32.xlu0 %v1208
      %v1210 = vpop.xlane.xlu0 %1209
      %v1211 = vsel %vm1174, %v1170, -inf
      %1212 = vmax.xlane.f32.xlu0 %v1211
      %v1213 = vpop.xlane.xlu0 %1212
      %v1214 = vsel %vm1174, %v1171, -inf
      %1215 = vmax.xlane.f32.xlu0 %v1214
      %v1216 = vpop.xlane.xlu0 %1215
      %v1217 = vsel %vm1174, %v1172, -inf
      %1218 = vmax.xlane.f32.xlu0 %v1217
      %v1219 = vpop.xlane.xlu0 %1218
      %v1220 = vsel %vm1174, %v1173, -inf
      %1221 = vmax.xlane.f32.xlu0 %v1220
      %v1222 = vpop.xlane.xlu0 %1221
      %v1223 = vsub.f32 %v1158, %v1177
      %v1224 = vsub.f32 %v1159, %v1180
      %v1225 = vsub.f32 %v1160, %v1183
      %v1226 = vsub.f32 %v1161, %v1186
      %v1227 = vsub.f32 %v1162, %v1189
      %v1228 = vsub.f32 %v1163, %v1192
      %v1229 = vsub.f32 %v1164, %v1195
      %v1230 = vsub.f32 %v1165, %v1198
      %v1231 = vsub.f32 %v1166, %v1201
      %v1232 = vsub.f32 %v1167, %v1204
      %v1233 = vsub.f32 %v1168, %v1207
      %v1234 = vsub.f32 %v1169, %v1210
      %v1235 = vsub.f32 %v1170, %v1213
      %v1236 = vsub.f32 %v1171, %v1216
      %v1237 = vsub.f32 %v1172, %v1219
      %v1238 = vsub.f32 %v1173, %v1222
      %v1239 = vmul.f32 %v1223, 1.442695
      %v1240 = vpow.pop %v1239
      %v1241 = vmul.f32 %v1224, 1.442695
      %v1242 = vpow.pop %v1241
      %v1243 = vmul.f32 %v1225, 1.442695
      %v1244 = vpow.pop %v1243
      %v1245 = vmul.f32 %v1226, 1.442695
      %v1246 = vpow.pop %v1245
      %v1247 = vmul.f32 %v1227, 1.442695
      %v1248 = vpow.pop %v1247
      %v1249 = vmul.f32 %v1228, 1.442695
      %v1250 = vpow.pop %v1249
      %v1251 = vmul.f32 %v1229, 1.442695
      %v1252 = vpow.pop %v1251
      %v1253 = vmul.f32 %v1230, 1.442695
      %v1254 = vpow.pop %v1253
      %v1255 = vmul.f32 %v1231, 1.442695
      %v1256 = vpow.pop %v1255
      %v1257 = vmul.f32 %v1232, 1.442695
      %v1258 = vpow.pop %v1257
      %v1259 = vmul.f32 %v1233, 1.442695
      %v1260 = vpow.pop %v1259
      %v1261 = vmul.f32 %v1234, 1.442695
      %v1262 = vpow.pop %v1261
      %v1263 = vmul.f32 %v1235, 1.442695
      %v1264 = vpow.pop %v1263
      %v1265 = vmul.f32 %v1236, 1.442695
      %v1266 = vpow.pop %v1265
      %v1267 = vmul.f32 %v1237, 1.442695
      %v1268 = vpow.pop %v1267
      %v1269 = vmul.f32 %v1238, 1.442695
      %v1270 = vpow.pop %v1269
      %v1271 = vsel %vm1174, %v1240, 0.0
      %1272 = vadd.xlane.f32.xlu0 %v1271
      %v1273 = vpop.xlane.xlu0 %1272
      %v1274 = vsel %vm1174, %v1242, 0.0
      %1275 = vadd.xlane.f32.xlu0 %v1274
      %v1276 = vpop.xlane.xlu0 %1275
      %v1277 = vsel %vm1174, %v1244, 0.0
      %1278 = vadd.xlane.f32.xlu0 %v1277
      %v1279 = vpop.xlane.xlu0 %1278
      %v1280 = vsel %vm1174, %v1246, 0.0
      %1281 = vadd.xlane.f32.xlu0 %v1280
      %v1282 = vpop.xlane.xlu0 %1281
      %v1283 = vsel %vm1174, %v1248, 0.0
      %1284 = vadd.xlane.f32.xlu0 %v1283
      %v1285 = vpop.xlane.xlu0 %1284
      %v1286 = vsel %vm1174, %v1250, 0.0
      %1287 = vadd.xlane.f32.xlu0 %v1286
      %v1288 = vpop.xlane.xlu0 %1287
      %v1289 = vsel %vm1174, %v1252, 0.0
      %1290 = vadd.xlane.f32.xlu0 %v1289
      %v1291 = vpop.xlane.xlu0 %1290
      %v1292 = vsel %vm1174, %v1254, 0.0
      %1293 = vadd.xlane.f32.xlu0 %v1292
      %v1294 = vpop.xlane.xlu0 %1293
      %v1295 = vsel %vm1174, %v1256, 0.0
      %1296 = vadd.xlane.f32.xlu0 %v1295
      %v1297 = vpop.xlane.xlu0 %1296
      %v1298 = vsel %vm1174, %v1258, 0.0
      %1299 = vadd.xlane.f32.xlu0 %v1298
      %v1300 = vpop.xlane.xlu0 %1299
      %v1301 = vsel %vm1174, %v1260, 0.0
      %1302 = vadd.xlane.f32.xlu0 %v1301
      %v1303 = vpop.xlane.xlu0 %1302
      %v1304 = vsel %vm1174, %v1262, 0.0
      %1305 = vadd.xlane.f32.xlu0 %v1304
      %v1306 = vpop.xlane.xlu0 %1305
      %v1307 = vsel %vm1174, %v1264, 0.0
      %1308 = vadd.xlane.f32.xlu0 %v1307
      %v1309 = vpop.xlane.xlu0 %1308
      %v1310 = vsel %vm1174, %v1266, 0.0
      %1311 = vadd.xlane.f32.xlu0 %v1310
      %v1312 = vpop.xlane.xlu0 %1311
      %v1313 = vsel %vm1174, %v1268, 0.0
      %1314 = vadd.xlane.f32.xlu0 %v1313
      %v1315 = vpop.xlane.xlu0 %1314
      %v1316 = vsel %vm1174, %v1270, 0.0
      %1317 = vadd.xlane.f32.xlu0 %v1316
      %v1318 = vpop.xlane.xlu0 %1317
      %v1319 = vrcp.pop %v1273
      %v1320 = vmul.f32 %v1240, %v1319
      %v1321 = vrcp.pop %v1276
      %v1322 = vmul.f32 %v1242, %v1321
      %v1323 = vrcp.pop %v1279
      %v1324 = vmul.f32 %v1244, %v1323
      %v1325 = vrcp.pop %v1282
      %v1326 = vmul.f32 %v1246, %v1325
      %v1327 = vrcp.pop %v1285
      %v1328 = vmul.f32 %v1248, %v1327
      %v1329 = vrcp.pop %v1288
      %v1330 = vmul.f32 %v1250, %v1329
      %v1331 = vrcp.pop %v1291
      %v1332 = vmul.f32 %v1252, %v1331
      %v1333 = vrcp.pop %v1294
      %v1334 = vmul.f32 %v1254, %v1333
      %v1335 = vrcp.pop %v1297
      %v1336 = vmul.f32 %v1256, %v1335
      %v1337 = vrcp.pop %v1300
      %v1338 = vmul.f32 %v1258, %v1337
      %v1339 = vrcp.pop %v1303
      %v1340 = vmul.f32 %v1260, %v1339
      %v1341 = vrcp.pop %v1306
      %v1342 = vmul.f32 %v1262, %v1341
      %v1343 = vrcp.pop %v1309
      %v1344 = vmul.f32 %v1264, %v1343
      %v1345 = vrcp.pop %v1312
      %v1346 = vmul.f32 %v1266, %v1345
      %v1347 = vrcp.pop %v1315
      %v1348 = vmul.f32 %v1268, %v1347
      %v1349 = vrcp.pop %v1318
      %v1350 = vmul.f32 %v1270, %v1349
      %v1352 = vsel %vm1174, %v1320, 0
      %v1355 = vsel %vm1174, %v1322, 0
      %1357 = vmatprep.subr.mxu0 0.0
      %1358 = vmatpush1.msra.mxu0 %v270
      %1359 = vmatprep.subr.mxu0 0.0
      %1360 = vmatpush1.msra.mxu0 %v271
      %1361 = vmatprep.subr.mxu0 0.0
      %1362 = vmatpush1.msra.mxu0 0.0
      %1363 = vmatprep.subr.mxu0 0.0
      %1364 = vmatpush1.msra.mxu0 0.0
      %1365 = vmatprep.subr.mxu0 0.0
      %1366 = vmatpush1.msra.mxu0 0.0
      %1367 = vmatprep.subr.mxu0 0.0
      %1368 = vmatpush1.msra.mxu0 0.0
      %1369 = vmatprep.subr.mxu0 0.0
      %1370 = vmatpush1.msra.mxu0 0.0
      %1371 = vmatprep.subr.mxu0 0.0
      %1372 = vmatpush1.msra.mxu0 0.0
      %1373 = vmatprep.subr.mxu0 0.0
      %1374 = vmatpush1.msra.mxu0 0.0
      %1375 = vmatprep.subr.mxu0 0.0
      %1376 = vmatpush1.msra.mxu0 0.0
      %1377 = vmatprep.subr.mxu0 0.0
      %1378 = vmatpush1.msra.mxu0 0.0
      %1379 = vmatprep.subr.mxu0 0.0
      %1380 = vmatpush1.msra.mxu0 0.0
      %1381 = vmatprep.subr.mxu0 0.0
      %1382 = vmatpush1.msra.mxu0 0.0
      %1383 = vmatprep.subr.mxu0 0.0
      %1384 = vmatpush1.msra.mxu0 0.0
      %1385 = vmatprep.subr.mxu0 0.0
      %1386 = vmatpush1.msra.mxu0 0.0
      %1387 = vmatprep.subr.mxu0 0.0
      %1388 = vmatpush1.msra.mxu0 0.0
      %1389 = vmatprep.subr.mxu0 0.0
      %1390 = vmatpush1.msra.mxu0 0.0
      %1391 = vmatprep.subr.mxu0 0.0
      %1392 = vmatpush1.msra.mxu0 0.0
      %1393 = vmatprep.subr.mxu0 0.0
      %1394 = vmatpush1.msra.mxu0 0.0
      %1395 = vmatprep.subr.mxu0 0.0
      %1396 = vmatpush1.msra.mxu0 0.0
      %1397 = vmatprep.subr.mxu0 0.0
      %1398 = vmatpush1.msra.mxu0 0.0
      %1399 = vmatprep.subr.mxu0 0.0
      %1400 = vmatpush1.msra.mxu0 0.0
      %1401 = vmatprep.subr.mxu0 0.0
      %1402 = vmatpush1.msra.mxu0 0.0
      %1403 = vmatprep.subr.mxu0 0.0
      %1404 = vmatpush1.msra.mxu0 0.0
      %1405 = vmatprep.subr.mxu0 0.0
      %1406 = vmatpush1.msra.mxu0 0.0
      %1407 = vmatprep.subr.mxu0 0.0
      %1408 = vmatpush1.msra.mxu0 0.0
      %1409 = vmatprep.subr.mxu0 0.0
      %1410 = vmatpush1.msra.mxu0 0.0
      %1411 = vmatprep.subr.mxu0 0.0
      %1412 = vmatpush1.msra.mxu0 0.0
      %1413 = vmatprep.subr.mxu0 0.0
      %1414 = vmatpush1.msra.mxu0 0.0
      %1415 = vmatprep.subr.mxu0 0.0
      %1416 = vmatpush1.msra.mxu0 0.0
      %1417 = vmatprep.subr.mxu0 0.0
      %1418 = vmatpush1.msra.mxu0 0.0
      %1419 = vmatprep.subr.mxu0 0.0
      %1420 = vmatpush1.msra.mxu0 0.0
      %1421 = vmatprep.mubr.f32.mxu0 0.0
      %1422 = vmatmul.mubr.f32.gmra.mrb[0].mxu0 %v1352
      %v1423 = vpop.f32.mrb[0].mxu0
      %v1424 = vadd.f32 0.0, %v1423
      %v1425 = vpop.f32.mrb[0].mxu0
      %1426 = vmatprep.mubr.f32.mxu0 0.0
      %1427 = vmatmul.mubr.f32.gmra.mrb[0].mxu0 %v1355
      %v1428 = vpop.f32.mrb[0].mxu0
      %v1429 = vadd.f32 0.0, %v1428
      %v1430 = vpop.f32.mrb[0].mxu0
      %1431 = vdwg.mxu0
      %v1433 = vsel %vm1174, %v1324, 0
      %v1436 = vsel %vm1174, %v1326, 0
      %1438 = vmatprep.subr.mxu0 0.0
      %1439 = vmatpush1.msra.mxu0 %v272
      %1440 = vmatprep.subr.mxu0 0.0
      %1441 = vmatpush1.msra.mxu0 %v273
      %1442 = vmatprep.subr.mxu0 0.0
      %1443 = vmatpush1.msra.mxu0 0.0
      %1444 = vmatprep.subr.mxu0 0.0
      %1445 = vmatpush1.msra.mxu0 0.0
      %1446 = vmatprep.subr.mxu0 0.0
      %1447 = vmatpush1.msra.mxu0 0.0
      %1448 = vmatprep.subr.mxu0 0.0
      %1449 = vmatpush1.msra.mxu0 0.0
      %1450 = vmatprep.subr.mxu0 0.0
      %1451 = vmatpush1.msra.mxu0 0.0
      %1452 = vmatprep.subr.mxu0 0.0
      %1453 = vmatpush1.msra.mxu0 0.0
      %1454 = vmatprep.subr.mxu0 0.0
      %1455 = vmatpush1.msra.mxu0 0.0
      %1456 = vmatprep.subr.mxu0 0.0
      %1457 = vmatpush1.msra.mxu0 0.0
      %1458 = vmatprep.subr.mxu0 0.0
      %1459 = vmatpush1.msra.mxu0 0.0
      %1460 = vmatprep.subr.mxu0 0.0
      %1461 = vmatpush1.msra.mxu0 0.0
      %1462 = vmatprep.subr.mxu0 0.0
      %1463 = vmatpush1.msra.mxu0 0.0
      %1464 = vmatprep.subr.mxu0 0.0
      %1465 = vmatpush1.msra.mxu0 0.0
      %1466 = vmatprep.subr.mxu0 0.0
      %1467 = vmatpush1.msra.mxu0 0.0
      %1468 = vmatprep.subr.mxu0 0.0
      %1469 = vmatpush1.msra.mxu0 0.0
      %1470 = vmatprep.subr.mxu0 0.0
      %1471 = vmatpush1.msra.mxu0 0.0
      %1472 = vmatprep.subr.mxu0 0.0
      %1473 = vmatpush1.msra.mxu0 0.0
      %1474 = vmatprep.subr.mxu0 0.0
      %1475 = vmatpush1.msra.mxu0 0.0
      %1476 = vmatprep.subr.mxu0 0.0
      %1477 = vmatpush1.msra.mxu0 0.0
      %1478 = vmatprep.subr.mxu0 0.0
      %1479 = vmatpush1.msra.mxu0 0.0
      %1480 = vmatprep.subr.mxu0 0.0
      %1481 = vmatpush1.msra.mxu0 0.0
      %1482 = vmatprep.subr.mxu0 0.0
      %1483 = vmatpush1.msra.mxu0 0.0
      %1484 = vmatprep.subr.mxu0 0.0
      %1485 = vmatpush1.msra.mxu0 0.0
      %1486 = vmatprep.subr.mxu0 0.0
      %1487 = vmatpush1.msra.mxu0 0.0
      %1488 = vmatprep.subr.mxu0 0.0
      %1489 = vmatpush1.msra.mxu0 0.0
      %1490 = vmatprep.subr.mxu0 0.0
      %1491 = vmatpush1.msra.mxu0 0.0
      %1492 = vmatprep.subr.mxu0 0.0
      %1493 = vmatpush1.msra.mxu0 0.0
      %1494 = vmatprep.subr.mxu0 0.0
      %1495 = vmatpush1.msra.mxu0 0.0
      %1496 = vmatprep.subr.mxu0 0.0
      %1497 = vmatpush1.msra.mxu0 0.0
      %1498 = vmatprep.subr.mxu0 0.0
      %1499 = vmatpush1.msra.mxu0 0.0
      %1500 = vmatprep.subr.mxu0 0.0
      %1501 = vmatpush1.msra.mxu0 0.0
      %1502 = vmatprep.mubr.f32.mxu0 0.0
      %1503 = vmatmul.mubr.f32.gmra.mrb[0].mxu0 %v1433
      %v1504 = vpop.f32.mrb[0].mxu0
      %v1505 = vadd.f32 0.0, %v1504
      %v1506 = vpop.f32.mrb[0].mxu0
      %1507 = vmatprep.mubr.f32.mxu0 0.0
      %1508 = vmatmul.mubr.f32.gmra.mrb[0].mxu0 %v1436
      %v1509 = vpop.f32.mrb[0].mxu0
      %v1510 = vadd.f32 0.0, %v1509
      %v1511 = vpop.f32.mrb[0].mxu0
      %1512 = vdwg.mxu0
      %v1514 = vsel %vm1174, %v1328, 0
      %v1517 = vsel %vm1174, %v1330, 0
      %1519 = vmatprep.subr.mxu0 0.0
      %1520 = vmatpush1.msra.mxu0 %v274
      %1521 = vmatprep.subr.mxu0 0.0
      %1522 = vmatpush1.msra.mxu0 %v275
      %1523 = vmatprep.subr.mxu0 0.0
      %1524 = vmatpush1.msra.mxu0 0.0
      %1525 = vmatprep.subr.mxu0 0.0
      %1526 = vmatpush1.msra.mxu0 0.0
      %1527 = vmatprep.subr.mxu0 0.0
      %1528 = vmatpush1.msra.mxu0 0.0
      %1529 = vmatprep.subr.mxu0 0.0
      %1530 = vmatpush1.msra.mxu0 0.0
      %1531 = vmatprep.subr.mxu0 0.0
      %1532 = vmatpush1.msra.mxu0 0.0
      %1533 = vmatprep.subr.mxu0 0.0
      %1534 = vmatpush1.msra.mxu0 0.0
      %1535 = vmatprep.subr.mxu0 0.0
      %1536 = vmatpush1.msra.mxu0 0.0
      %1537 = vmatprep.subr.mxu0 0.0
      %1538 = vmatpush1.msra.mxu0 0.0
      %1539 = vmatprep.subr.mxu0 0.0
      %1540 = vmatpush1.msra.mxu0 0.0
      %1541 = vmatprep.subr.mxu0 0.0
      %1542 = vmatpush1.msra.mxu0 0.0
      %1543 = vmatprep.subr.mxu0 0.0
      %1544 = vmatpush1.msra.mxu0 0.0
      %1545 = vmatprep.subr.mxu0 0.0
      %1546 = vmatpush1.msra.mxu0 0.0
      %1547 = vmatprep.subr.mxu0 0.0
      %1548 = vmatpush1.msra.mxu0 0.0
      %1549 = vmatprep.subr.mxu0 0.0
      %1550 = vmatpush1.msra.mxu0 0.0
      %1551 = vmatprep.subr.mxu0 0.0
      %1552 = vmatpush1.msra.mxu0 0.0
      %1553 = vmatprep.subr.mxu0 0.0
      %1554 = vmatpush1.msra.mxu0 0.0
      %1555 = vmatprep.subr.mxu0 0.0
      %1556 = vmatpush1.msra.mxu0 0.0
      %1557 = vmatprep.subr.mxu0 0.0
      %1558 = vmatpush1.msra.mxu0 0.0
      %1559 = vmatprep.subr.mxu0 0.0
      %1560 = vmatpush1.msra.mxu0 0.0
      %1561 = vmatprep.subr.mxu0 0.0
      %1562 = vmatpush1.msra.mxu0 0.0
      %1563 = vmatprep.subr.mxu0 0.0
      %1564 = vmatpush1.msra.mxu0 0.0
      %1565 = vmatprep.subr.mxu0 0.0
      %1566 = vmatpush1.msra.mxu0 0.0
      %1567 = vmatprep.subr.mxu0 0.0
      %1568 = vmatpush1.msra.mxu0 0.0
      %1569 = vmatprep.subr.mxu0 0.0
      %1570 = vmatpush1.msra.mxu0 0.0
      %1571 = vmatprep.subr.mxu0 0.0
      %1572 = vmatpush1.msra.mxu0 0.0
      %1573 = vmatprep.subr.mxu0 0.0
      %1574 = vmatpush1.msra.mxu0 0.0
      %1575 = vmatprep.subr.mxu0 0.0
      %1576 = vmatpush1.msra.mxu0 0.0
      %1577 = vmatprep.subr.mxu0 0.0
      %1578 = vmatpush1.msra.mxu0 0.0
      %1579 = vmatprep.subr.mxu0 0.0
      %1580 = vmatpush1.msra.mxu0 0.0
      %1581 = vmatprep.subr.mxu0 0.0
      %1582 = vmatpush1.msra.mxu0 0.0
      %1583 = vmatprep.mubr.f32.mxu0 0.0
      %1584 = vmatmul.mubr.f32.gmra.mrb[0].mxu0 %v1514
      %v1585 = vpop.f32.mrb[0].mxu0
      %v1586 = vadd.f32 0.0, %v1585
      %v1587 = vpop.f32.mrb[0].mxu0
      %1588 = vmatprep.mubr.f32.mxu0 0.0
      %1589 = vmatmul.mubr.f32.gmra.mrb[0].mxu0 %v1517
      %v1590 = vpop.f32.mrb[0].mxu0
      %v1591 = vadd.f32 0.0, %v1590
      %v1592 = vpop.f32.mrb[0].mxu0
      %1593 = vdwg.mxu0
      %v1595 = vsel %vm1174, %v1332, 0
      %v1598 = vsel %vm1174, %v1334, 0
      %1600 = vmatprep.subr.mxu0 0.0
      %1601 = vmatpush1.msra.mxu0 %v276
      %1602 = vmatprep.subr.mxu0 0.0
      %1603 = vmatpush1.msra.mxu0 %v277
      %1604 = vmatprep.subr.mxu0 0.0
      %1605 = vmatpush1.msra.mxu0 0.0
      %1606 = vmatprep.subr.mxu0 0.0
      %1607 = vmatpush1.msra.mxu0 0.0
      %1608 = vmatprep.subr.mxu0 0.0
      %1609 = vmatpush1.msra.mxu0 0.0
      %1610 = vmatprep.subr.mxu0 0.0
      %1611 = vmatpush1.msra.mxu0 0.0
      %1612 = vmatprep.subr.mxu0 0.0
      %1613 = vmatpush1.msra.mxu0 0.0
      %1614 = vmatprep.subr.mxu0 0.0
      %1615 = vmatpush1.msra.mxu0 0.0
      %1616 = vmatprep.subr.mxu0 0.0
      %1617 = vmatpush1.msra.mxu0 0.0
      %1618 = vmatprep.subr.mxu0 0.0
      %1619 = vmatpush1.msra.mxu0 0.0
      %1620 = vmatprep.subr.mxu0 0.0
      %1621 = vmatpush1.msra.mxu0 0.0
      %1622 = vmatprep.subr.mxu0 0.0
      %1623 = vmatpush1.msra.mxu0 0.0
      %1624 = vmatprep.subr.mxu0 0.0
      %1625 = vmatpush1.msra.mxu0 0.0
      %1626 = vmatprep.subr.mxu0 0.0
      %1627 = vmatpush1.msra.mxu0 0.0
      %1628 = vmatprep.subr.mxu0 0.0
      %1629 = vmatpush1.msra.mxu0 0.0
      %1630 = vmatprep.subr.mxu0 0.0
      %1631 = vmatpush1.msra.mxu0 0.0
      %1632 = vmatprep.subr.mxu0 0.0
      %1633 = vmatpush1.msra.mxu0 0.0
      %1634 = vmatprep.subr.mxu0 0.0
      %1635 = vmatpush1.msra.mxu0 0.0
      %1636 = vmatprep.subr.mxu0 0.0
      %1637 = vmatpush1.msra.mxu0 0.0
      %1638 = vmatprep.subr.mxu0 0.0
      %1639 = vmatpush1.msra.mxu0 0.0
      %1640 = vmatprep.subr.mxu0 0.0
      %1641 = vmatpush1.msra.mxu0 0.0
      %1642 = vmatprep.subr.mxu0 0.0
      %1643 = vmatpush1.msra.mxu0 0.0
      %1644 = vmatprep.subr.mxu0 0.0
      %1645 = vmatpush1.msra.mxu0 0.0
      %1646 = vmatprep.subr.mxu0 0.0
      %1647 = vmatpush1.msra.mxu0 0.0
      %1648 = vmatprep.subr.mxu0 0.0
      %1649 = vmatpush1.msra.mxu0 0.0
      %1650 = vmatprep.subr.mxu0 0.0
      %1651 = vmatpush1.msra.mxu0 0.0
      %1652 = vmatprep.subr.mxu0 0.0
      %1653 = vmatpush1.msra.mxu0 0.0
      %1654 = vmatprep.subr.mxu0 0.0
      %1655 = vmatpush1.msra.mxu0 0.0
      %1656 = vmatprep.subr.mxu0 0.0
      %1657 = vmatpush1.msra.mxu0 0.0
      %1658 = vmatprep.subr.mxu0 0.0
      %1659 = vmatpush1.msra.mxu0 0.0
      %1660 = vmatprep.subr.mxu0 0.0
      %1661 = vmatpush1.msra.mxu0 0.0
      %1662 = vmatprep.subr.mxu0 0.0
      %1663 = vmatpush1.msra.mxu0 0.0
      %1664 = vmatprep.mubr.f32.mxu0 0.0
      %1665 = vmatmul.mubr.f32.gmra.mrb[0].mxu0 %v1595
      %v1666 = vpop.f32.mrb[0].mxu0
      %v1667 = vadd.f32 0.0, %v1666
      %v1668 = vpop.f32.mrb[0].mxu0
      %1669 = vmatprep.mubr.f32.mxu0 0.0
      %1670 = vmatmul.mubr.f32.gmra.mrb[0].mxu0 %v1598
      %v1671 = vpop.f32.mrb[0].mxu0
      %v1672 = vadd.f32 0.0, %v1671
      %v1673 = vpop.f32.mrb[0].mxu0
      %1674 = vdwg.mxu0
      %v1676 = vsel %vm1174, %v1336, 0
      %v1679 = vsel %vm1174, %v1338, 0
      %1681 = vmatprep.subr.mxu0 0.0
      %1682 = vmatpush1.msra.mxu0 %v278
      %1683 = vmatprep.subr.mxu0 0.0
      %1684 = vmatpush1.msra.mxu0 %v279
      %1685 = vmatprep.subr.mxu0 0.0
      %1686 = vmatpush1.msra.mxu0 0.0
      %1687 = vmatprep.subr.mxu0 0.0
      %1688 = vmatpush1.msra.mxu0 0.0
      %1689 = vmatprep.subr.mxu0 0.0
      %1690 = vmatpush1.msra.mxu0 0.0
      %1691 = vmatprep.subr.mxu0 0.0
      %1692 = vmatpush1.msra.mxu0 0.0
      %1693 = vmatprep.subr.mxu0 0.0
      %1694 = vmatpush1.msra.mxu0 0.0
      %1695 = vmatprep.subr.mxu0 0.0
      %1696 = vmatpush1.msra.mxu0 0.0
      %1697 = vmatprep.subr.mxu0 0.0
      %1698 = vmatpush1.msra.mxu0 0.0
      %1699 = vmatprep.subr.mxu0 0.0
      %1700 = vmatpush1.msra.mxu0 0.0
      %1701 = vmatprep.subr.mxu0 0.0
      %1702 = vmatpush1.msra.mxu0 0.0
      %1703 = vmatprep.subr.mxu0 0.0
      %1704 = vmatpush1.msra.mxu0 0.0
      %1705 = vmatprep.subr.mxu0 0.0
      %1706 = vmatpush1.msra.mxu0 0.0
      %1707 = vmatprep.subr.mxu0 0.0
      %1708 = vmatpush1.msra.mxu0 0.0
      %1709 = vmatprep.subr.mxu0 0.0
      %1710 = vmatpush1.msra.mxu0 0.0
      %1711 = vmatprep.subr.mxu0 0.0
      %1712 = vmatpush1.msra.mxu0 0.0
      %1713 = vmatprep.subr.mxu0 0.0
      %1714 = vmatpush1.msra.mxu0 0.0
      %1715 = vmatprep.subr.mxu0 0.0
      %1716 = vmatpush1.msra.mxu0 0.0
      %1717 = vmatprep.subr.mxu0 0.0
      %1718 = vmatpush1.msra.mxu0 0.0
      %1719 = vmatprep.subr.mxu0 0.0
      %1720 = vmatpush1.msra.mxu0 0.0
      %1721 = vmatprep.subr.mxu0 0.0
      %1722 = vmatpush1.msra.mxu0 0.0
      %1723 = vmatprep.subr.mxu0 0.0
      %1724 = vmatpush1.msra.mxu0 0.0
      %1725 = vmatprep.subr.mxu0 0.0
      %1726 = vmatpush1.msra.mxu0 0.0
      %1727 = vmatprep.subr.mxu0 0.0
      %1728 = vmatpush1.msra.mxu0 0.0
      %1729 = vmatprep.subr.mxu0 0.0
      %1730 = vmatpush1.msra.mxu0 0.0
      %1731 = vmatprep.subr.mxu0 0.0
      %1732 = vmatpush1.msra.mxu0 0.0
      %1733 = vmatprep.subr.mxu0 0.0
      %1734 = vmatpush1.msra.mxu0 0.0
      %1735 = vmatprep.subr.mxu0 0.0
      %1736 = vmatpush1.msra.mxu0 0.0
      %1737 = vmatprep.subr.mxu0 0.0
      %1738 = vmatpush1.msra.mxu0 0.0
      %1739 = vmatprep.subr.mxu0 0.0
      %1740 = vmatpush1.msra.mxu0 0.0
      %1741 = vmatprep.subr.mxu0 0.0
      %1742 = vmatpush1.msra.mxu0 0.0
      %1743 = vmatprep.subr.mxu0 0.0
      %1744 = vmatpush1.msra.mxu0 0.0
      %1745 = vmatprep.mubr.f32.mxu0 0.0
      %1746 = vmatmul.mubr.f32.gmra.mrb[0].mxu0 %v1676
      %v1747 = vpop.f32.mrb[0].mxu0
      %v1748 = vadd.f32 0.0, %v1747
      %v1749 = vpop.f32.mrb[0].mxu0
      %1750 = vmatprep.mubr.f32.mxu0 0.0
      %1751 = vmatmul.mubr.f32.gmra.mrb[0].mxu0 %v1679
      %v1752 = vpop.f32.mrb[0].mxu0
      %v1753 = vadd.f32 0.0, %v1752
      %v1754 = vpop.f32.mrb[0].mxu0
      %1755 = vdwg.mxu0
      %v1757 = vsel %vm1174, %v1340, 0
      %v1760 = vsel %vm1174, %v1342, 0
      %1762 = vmatprep.subr.mxu0 0.0
      %1763 = vmatpush1.msra.mxu0 %v280
      %1764 = vmatprep.subr.mxu0 0.0
      %1765 = vmatpush1.msra.mxu0 %v281
      %1766 = vmatprep.subr.mxu0 0.0
      %1767 = vmatpush1.msra.mxu0 0.0
      %1768 = vmatprep.subr.mxu0 0.0
      %1769 = vmatpush1.msra.mxu0 0.0
      %1770 = vmatprep.subr.mxu0 0.0
      %1771 = vmatpush1.msra.mxu0 0.0
      %1772 = vmatprep.subr.mxu0 0.0
      %1773 = vmatpush1.msra.mxu0 0.0
      %1774 = vmatprep.subr.mxu0 0.0
      %1775 = vmatpush1.msra.mxu0 0.0
      %1776 = vmatprep.subr.mxu0 0.0
      %1777 = vmatpush1.msra.mxu0 0.0
      %1778 = vmatprep.subr.mxu0 0.0
      %1779 = vmatpush1.msra.mxu0 0.0
      %1780 = vmatprep.subr.mxu0 0.0
      %1781 = vmatpush1.msra.mxu0 0.0
      %1782 = vmatprep.subr.mxu0 0.0
      %1783 = vmatpush1.msra.mxu0 0.0
      %1784 = vmatprep.subr.mxu0 0.0
      %1785 = vmatpush1.msra.mxu0 0.0
      %1786 = vmatprep.subr.mxu0 0.0
      %1787 = vmatpush1.msra.mxu0 0.0
      %1788 = vmatprep.subr.mxu0 0.0
      %1789 = vmatpush1.msra.mxu0 0.0
      %1790 = vmatprep.subr.mxu0 0.0
      %1791 = vmatpush1.msra.mxu0 0.0
      %1792 = vmatprep.subr.mxu0 0.0
      %1793 = vmatpush1.msra.mxu0 0.0
      %1794 = vmatprep.subr.mxu0 0.0
      %1795 = vmatpush1.msra.mxu0 0.0
      %1796 = vmatprep.subr.mxu0 0.0
      %1797 = vmatpush1.msra.mxu0 0.0
      %1798 = vmatprep.subr.mxu0 0.0
      %1799 = vmatpush1.msra.mxu0 0.0
      %1800 = vmatprep.subr.mxu0 0.0
      %1801 = vmatpush1.msra.mxu0 0.0
      %1802 = vmatprep.subr.mxu0 0.0
      %1803 = vmatpush1.msra.mxu0 0.0
      %1804 = vmatprep.subr.mxu0 0.0
      %1805 = vmatpush1.msra.mxu0 0.0
      %1806 = vmatprep.subr.mxu0 0.0
      %1807 = vmatpush1.msra.mxu0 0.0
      %1808 = vmatprep.subr.mxu0 0.0
      %1809 = vmatpush1.msra.mxu0 0.0
      %1810 = vmatprep.subr.mxu0 0.0
      %1811 = vmatpush1.msra.mxu0 0.0
      %1812 = vmatprep.subr.mxu0 0.0
      %1813 = vmatpush1.msra.mxu0 0.0
      %1814 = vmatprep.subr.mxu0 0.0
      %1815 = vmatpush1.msra.mxu0 0.0
      %1816 = vmatprep.subr.mxu0 0.0
      %1817 = vmatpush1.msra.mxu0 0.0
      %1818 = vmatprep.subr.mxu0 0.0
      %1819 = vmatpush1.msra.mxu0 0.0
      %1820 = vmatprep.subr.mxu0 0.0
      %1821 = vmatpush1.msra.mxu0 0.0
      %1822 = vmatprep.subr.mxu0 0.0
      %1823 = vmatpush1.msra.mxu0 0.0
      %1824 = vmatprep.subr.mxu0 0.0
      %1825 = vmatpush1.msra.mxu0 0.0
      %1826 = vmatprep.mubr.f32.mxu0 0.0
      %1827 = vmatmul.mubr.f32.gmra.mrb[0].mxu0 %v1757
      %v1828 = vpop.f32.mrb[0].mxu0
      %v1829 = vadd.f32 0.0, %v1828
      %v1830 = vpop.f32.mrb[0].mxu0
      %1831 = vmatprep.mubr.f32.mxu0 0.0
      %1832 = vmatmul.mubr.f32.gmra.mrb[0].mxu0 %v1760
      %v1833 = vpop.f32.mrb[0].mxu0
      %v1834 = vadd.f32 0.0, %v1833
      %v1835 = vpop.f32.mrb[0].mxu0
      %1836 = vdwg.mxu0
      %v1838 = vsel %vm1174, %v1344, 0
      %v1841 = vsel %vm1174, %v1346, 0
      %1843 = vmatprep.subr.mxu0 0.0
      %1844 = vmatpush1.msra.mxu0 %v282
      %1845 = vmatprep.subr.mxu0 0.0
      %1846 = vmatpush1.msra.mxu0 %v283
      %1847 = vmatprep.subr.mxu0 0.0
      %1848 = vmatpush1.msra.mxu0 0.0
      %1849 = vmatprep.subr.mxu0 0.0
      %1850 = vmatpush1.msra.mxu0 0.0
      %1851 = vmatprep.subr.mxu0 0.0
      %1852 = vmatpush1.msra.mxu0 0.0
      %1853 = vmatprep.subr.mxu0 0.0
      %1854 = vmatpush1.msra.mxu0 0.0
      %1855 = vmatprep.subr.mxu0 0.0
      %1856 = vmatpush1.msra.mxu0 0.0
      %1857 = vmatprep.subr.mxu0 0.0
      %1858 = vmatpush1.msra.mxu0 0.0
      %1859 = vmatprep.subr.mxu0 0.0
      %1860 = vmatpush1.msra.mxu0 0.0
      %1861 = vmatprep.subr.mxu0 0.0
      %1862 = vmatpush1.msra.mxu0 0.0
      %1863 = vmatprep.subr.mxu0 0.0
      %1864 = vmatpush1.msra.mxu0 0.0
      %1865 = vmatprep.subr.mxu0 0.0
      %1866 = vmatpush1.msra.mxu0 0.0
      %1867 = vmatprep.subr.mxu0 0.0
      %1868 = vmatpush1.msra.mxu0 0.0
      %1869 = vmatprep.subr.mxu0 0.0
      %1870 = vmatpush1.msra.mxu0 0.0
      %1871 = vmatprep.subr.mxu0 0.0
      %1872 = vmatpush1.msra.mxu0 0.0
      %1873 = vmatprep.subr.mxu0 0.0
      %1874 = vmatpush1.msra.mxu0 0.0
      %1875 = vmatprep.subr.mxu0 0.0
      %1876 = vmatpush1.msra.mxu0 0.0
      %1877 = vmatprep.subr.mxu0 0.0
      %1878 = vmatpush1.msra.mxu0 0.0
      %1879 = vmatprep.subr.mxu0 0.0
      %1880 = vmatpush1.msra.mxu0 0.0
      %1881 = vmatprep.subr.mxu0 0.0
      %1882 = vmatpush1.msra.mxu0 0.0
      %1883 = vmatprep.subr.mxu0 0.0
      %1884 = vmatpush1.msra.mxu0 0.0
      %1885 = vmatprep.subr.mxu0 0.0
      %1886 = vmatpush1.msra.mxu0 0.0
      %1887 = vmatprep.subr.mxu0 0.0
      %1888 = vmatpush1.msra.mxu0 0.0
      %1889 = vmatprep.subr.mxu0 0.0
      %1890 = vmatpush1.msra.mxu0 0.0
      %1891 = vmatprep.subr.mxu0 0.0
      %1892 = vmatpush1.msra.mxu0 0.0
      %1893 = vmatprep.subr.mxu0 0.0
      %1894 = vmatpush1.msra.mxu0 0.0
      %1895 = vmatprep.subr.mxu0 0.0
      %1896 = vmatpush1.msra.mxu0 0.0
      %1897 = vmatprep.subr.mxu0 0.0
      %1898 = vmatpush1.msra.mxu0 0.0
      %1899 = vmatprep.subr.mxu0 0.0
      %1900 = vmatpush1.msra.mxu0 0.0
      %1901 = vmatprep.subr.mxu0 0.0
      %1902 = vmatpush1.msra.mxu0 0.0
      %1903 = vmatprep.subr.mxu0 0.0
      %1904 = vmatpush1.msra.mxu0 0.0
      %1905 = vmatprep.subr.mxu0 0.0
      %1906 = vmatpush1.msra.mxu0 0.0
      %1907 = vmatprep.mubr.f32.mxu0 0.0
      %1908 = vmatmul.mubr.f32.gmra.mrb[0].mxu0 %v1838
      %v1909 = vpop.f32.mrb[0].mxu0
      %v1910 = vadd.f32 0.0, %v1909
      %v1911 = vpop.f32.mrb[0].mxu0
      %1912 = vmatprep.mubr.f32.mxu0 0.0
      %1913 = vmatmul.mubr.f32.gmra.mrb[0].mxu0 %v1841
      %v1914 = vpop.f32.mrb[0].mxu0
      %v1915 = vadd.f32 0.0, %v1914
      %v1916 = vpop.f32.mrb[0].mxu0
      %1917 = vdwg.mxu0
      %v1919 = vsel %vm1174, %v1348, 0
      %v1922 = vsel %vm1174, %v1350, 0
      %1924 = vmatprep.subr.mxu0 0.0
      %1925 = vmatpush1.msra.mxu0 %v284
      %1926 = vmatprep.subr.mxu0 0.0
      %1927 = vmatpush1.msra.mxu0 %v285
      %1928 = vmatprep.subr.mxu0 0.0
      %1929 = vmatpush1.msra.mxu0 0.0
      %1930 = vmatprep.subr.mxu0 0.0
      %1931 = vmatpush1.msra.mxu0 0.0
      %1932 = vmatprep.subr.mxu0 0.0
      %1933 = vmatpush1.msra.mxu0 0.0
      %1934 = vmatprep.subr.mxu0 0.0
      %1935 = vmatpush1.msra.mxu0 0.0
      %1936 = vmatprep.subr.mxu0 0.0
      %1937 = vmatpush1.msra.mxu0 0.0
      %1938 = vmatprep.subr.mxu0 0.0
      %1939 = vmatpush1.msra.mxu0 0.0
      %1940 = vmatprep.subr.mxu0 0.0
      %1941 = vmatpush1.msra.mxu0 0.0
      %1942 = vmatprep.subr.mxu0 0.0
      %1943 = vmatpush1.msra.mxu0 0.0
      %1944 = vmatprep.subr.mxu0 0.0
      %1945 = vmatpush1.msra.mxu0 0.0
      %1946 = vmatprep.subr.mxu0 0.0
      %1947 = vmatpush1.msra.mxu0 0.0
      %1948 = vmatprep.subr.mxu0 0.0
      %1949 = vmatpush1.msra.mxu0 0.0
      %1950 = vmatprep.subr.mxu0 0.0
      %1951 = vmatpush1.msra.mxu0 0.0
      %1952 = vmatprep.subr.mxu0 0.0
      %1953 = vmatpush1.msra.mxu0 0.0
      %1954 = vmatprep.subr.mxu0 0.0
      %1955 = vmatpush1.msra.mxu0 0.0
      %1956 = vmatprep.subr.mxu0 0.0
      %1957 = vmatpush1.msra.mxu0 0.0
      %1958 = vmatprep.subr.mxu0 0.0
      %1959 = vmatpush1.msra.mxu0 0.0
      %1960 = vmatprep.subr.mxu0 0.0
      %1961 = vmatpush1.msra.mxu0 0.0
      %1962 = vmatprep.subr.mxu0 0.0
      %1963 = vmatpush1.msra.mxu0 0.0
      %1964 = vmatprep.subr.mxu0 0.0
      %1965 = vmatpush1.msra.mxu0 0.0
      %1966 = vmatprep.subr.mxu0 0.0
      %1967 = vmatpush1.msra.mxu0 0.0
      %1968 = vmatprep.subr.mxu0 0.0
      %1969 = vmatpush1.msra.mxu0 0.0
      %1970 = vmatprep.subr.mxu0 0.0
      %1971 = vmatpush1.msra.mxu0 0.0
      %1972 = vmatprep.subr.mxu0 0.0
      %1973 = vmatpush1.msra.mxu0 0.0
      %1974 = vmatprep.subr.mxu0 0.0
      %1975 = vmatpush1.msra.mxu0 0.0
      %1976 = vmatprep.subr.mxu0 0.0
      %1977 = vmatpush1.msra.mxu0 0.0
      %1978 = vmatprep.subr.mxu0 0.0
      %1979 = vmatpush1.msra.mxu0 0.0
      %1980 = vmatprep.subr.mxu0 0.0
      %1981 = vmatpush1.msra.mxu0 0.0
      %1982 = vmatprep.subr.mxu0 0.0
      %1983 = vmatpush1.msra.mxu0 0.0
      %1984 = vmatprep.subr.mxu0 0.0
      %1985 = vmatpush1.msra.mxu0 0.0
      %1986 = vmatprep.subr.mxu0 0.0
      %1987 = vmatpush1.msra.mxu0 0.0
      %1988 = vmatprep.mubr.f32.mxu0 0.0
      %1989 = vmatmul.mubr.f32.gmra.mrb[0].mxu0 %v1919
      %v1990 = vpop.f32.mrb[0].mxu0
      %v1991 = vadd.f32 0.0, %v1990
      %v1992 = vpop.f32.mrb[0].mxu0
      %1993 = vmatprep.mubr.f32.mxu0 0.0
      %1994 = vmatmul.mubr.f32.gmra.mrb[0].mxu0 %v1922
      %v1995 = vpop.f32.mrb[0].mxu0
      %v1996 = vadd.f32 0.0, %v1995
      %v1997 = vpop.f32.mrb[0].mxu0
      %1998 = vdwg.mxu0
      %1999 = vst [vmem:[%s237] sm:$0xff] %v1424
      %2000 = vst [vmem:[%s237 + $0x8] sm:$0xff] %v1429
      %2001 = vst [vmem:[%s237 + $0x10] sm:$0xff] %v1505
      %2002 = vst [vmem:[%s237 + $0x18] sm:$0xff] %v1510
      %2003 = vst [vmem:[%s237 + $0x20] sm:$0xff] %v1586
      %2004 = vst [vmem:[%s237 + $0x28] sm:$0xff] %v1591
      %2005 = vst [vmem:[%s237 + $0x30] sm:$0xff] %v1667
      %2006 = vst [vmem:[%s237 + $0x38] sm:$0xff] %v1672
      %2007 = vst [vmem:[%s237 + $0x40] sm:$0xff] %v1748
      %2008 = vst [vmem:[%s237 + $0x48] sm:$0xff] %v1753
      %2009 = vst [vmem:[%s237 + $0x50] sm:$0xff] %v1829
      %2010 = vst [vmem:[%s237 + $0x58] sm:$0xff] %v1834
      %2011 = vst [vmem:[%s237 + $0x60] sm:$0xff] %v1910
      %2012 = vst [vmem:[%s237 + $0x68] sm:$0xff] %v1915
      %2013 = vst [vmem:[%s237 + $0x70] sm:$0xff] %v1991
      %2014 = vst [vmem:[%s237 + $0x78] sm:$0xff] %v1996
      %p2015 = scmp.lt.s32.totalorder %s15, 1
      %s2016 = scalar_select %p2015, %s15, 1
      %s2017 = smul.addr %s2016, 16
      %s2018 = smul.addr %s2017, 8
      %s2019 = scalar_lea.vmem %s4, %s2018
      // Predicated region
      $region37: #{xca_forward.4} parent=35 // pred_check
        %p2020 = pneg %p132
      $region38: #{xca_forward.4} parent=35 // pred_check_branch
        %2022 = sbr.rel (%p2020) target = $region40
      $region39: #{xca_forward.4} parent=35 // pred_region
        _
      $region40: #{xca_forward.4} parent=35 // pred_fallthru
        _
    $region36: #{xca_forward.4} parent=5 // pred_fallthru
      _
    %p2023 = scmp.le.s32.totalorder 2, %s10
    // Predicated region
    $region41: #{xca_forward.4} parent=5 // pred_check
      %p2024 = pneg %p2023
    $region42: #{xca_forward.4} parent=5 // pred_check_branch
      %2026 = sbr.rel (%p2024) target = $region44
    $region43: #{xca_forward.4} parent=5 // pred_region
      %s2027 = ssub.s32 %s10, 2
      // Predicated region
      $region45: #{xca_forward.4} parent=43 // pred_check
        %p2028 = pneg %p138
      $region46: #{xca_forward.4} parent=43 // pred_check_branch
        %2030 = sbr.rel (%p2028) target = $region48
      $region47: #{xca_forward.4} parent=43 // pred_region
        %p2031 = scmp.lt.s32.totalorder %s16, 1
        %s2032 = scalar_select %p2031, %s16, 1
        %s2033 = smul.addr %s2032, 16
        %s2034 = smul.addr %s2033, 8
        %s2035 = scalar_lea.vmem %s4, %s2034
      $region48: #{xca_forward.4} parent=43 // pred_fallthru
        _
    $region44: #{xca_forward.4} parent=5 // pred_fallthru
      _
  $region6: #{xca_forward.4} parent=0 // loop_footer
    %s14 = sadd.s32 1, %s10
  $region7: #{xca_forward.4} parent=0 // loop_footer_branch
    %9 = sbr.rel target = $region3
  $region8: #{xca_forward.4} parent=0 // loop_exit
    _

// kernel: xca_forward.5
$region0: #{xca_forward.5}
  #allocation0 [shape = 'u32[]', space=smem, size = 0x4, offset = 0x4, fixed_abs, tag = 'smem constant byte address 0x4 - core index']
  #allocation1 [shape = 'u32[144,128]{1,0:T(1,128)}', space=vmem, size = 0x12000, scoped, tag = 'internal scratch']
  #allocation2 [shape = 'f32[256,128]{1,0:T(8,128)}', space=vmem, size = 0x20000, scoped, tag = 'scratch operand']
  %s0 = inlined_call_operand.vmem [shape: f32[256,128], index: 0, kind: input, shape index: {}]
  %s1 = inlined_call_operand.vmem [shape: f32[128,128], index: 1, kind: input, shape index: {}]
  %s2 = inlined_call_operand.vmem [shape: f32[1,128], index: 2, kind: input, shape index: {}]
  %s3 = inlined_call_operand.hbm [shape: f32[256,128], index: 3, kind: output, shape index: {}]
  %s4 = sld [smem:[#allocation0]]
  $region30: #{xca_forward.5} parent=0
    _
  %s6 = ssub.s32 1, %s4
  %s7 = scalar_select 0, %s6, %s4
  $region1: #{xca_forward.5} parent=0
    #allocation3 [shape = 'u8[131072]{0}', space=vmem, size = 0x20000, scoped, tag = 'output window, operand 0, single buffered']
    #allocation4 [shape = 's32[1]{0}', space=sflag, size = 0x4, scoped, tag = 'scoped memory for xca_forward.5']
    %8 = vsyncpa [#allocation4], 0
    // Predicated region
    $region2: #{xca_forward.5} parent=1 // pred_check
      _
    $region3: #{xca_forward.5} parent=1 // pred_check_branch
      %10 = sbr.rel (0) target = $region5
    $region4: #{xca_forward.5} parent=1 // pred_region
      _
    $region5: #{xca_forward.5} parent=1 // pred_fallthru
      _
    // Predicated region
    $region6: #{xca_forward.5} parent=1 // pred_check
      _
    $region7: #{xca_forward.5} parent=1 // pred_check_branch
      %12 = sbr.rel (0) target = $region9
    $region8: #{xca_forward.5} parent=1 // pred_region
      _
    $region9: #{xca_forward.5} parent=1 // pred_fallthru
      _
    // Predicated region
    $region10: #{xca_forward.5} parent=1 // pred_check
      _
    $region11: #{xca_forward.5} parent=1 // pred_check_branch
      %14 = sbr.rel (0) target = $region13
    $region12: #{xca_forward.5} parent=1 // pred_region
      _
    $region13: #{xca_forward.5} parent=1 // pred_fallthru
      _
    %p15 = scmp.eq.s32.totalorder 0, 0
    // Predicated region
    $region14: #{xca_forward.5} parent=1 // pred_check
      %p16 = pneg %p15
    $region15: #{xca_forward.5} parent=1 // pred_check_branch
      %18 = sbr.rel (%p16) target = $region17
    $region16: #{xca_forward.5} parent=1 // pred_region
      %19 = vst [vmem:[#allocation2] sm:$0xff] 0.0
      %20 = vst [vmem:[#allocation2 + $0x8] sm:$0xff] 0.0
      %21 = vst [vmem:[#allocation2 + $0x10] sm:$0xff] 0.0
      %22 = vst [vmem:[#allocation2 + $0x18] sm:$0xff] 0.0
      %23 = vst [vmem:[#allocation2 + $0x20] sm:$0xff] 0.0
      %24 = vst [vmem:[#allocation2 + $0x28] sm:$0xff] 0.0
      %25 = vst [vmem:[#allocation2 + $0x30] sm:$0xff] 0.0
      %26 = vst [vmem:[#allocation2 + $0x38] sm:$0xff] 0.0
      %27 = vst [vmem:[#allocation2 + $0x40] sm:$0xff] 0.0
      %28 = vst [vmem:[#allocation2 + $0x48] sm:$0xff] 0.0
      %29 = vst [vmem:[#allocation2 + $0x50] sm:$0xff] 0.0
      %30 = vst [vmem:[#allocation2 + $0x58] sm:$0xff] 0.0
      %31 = vst [vmem:[#allocation2 + $0x60] sm:$0xff] 0.0
      %32 = vst [vmem:[#allocation2 + $0x68] sm:$0xff] 0.0
      %33 = vst [vmem:[#allocation2 + $0x70] sm:$0xff] 0.0
      %34 = vst [vmem:[#allocation2 + $0x78] sm:$0xff] 0.0
      %35 = vst [vmem:[#allocation2 + $0x80] sm:$0xff] 0.0
      %36 = vst [vmem:[#allocation2 + $0x88] sm:$0xff] 0.0
      %37 = vst [vmem:[#allocation2 + $0x90] sm:$0xff] 0.0
      %38 = vst [vmem:[#allocation2 + $0x98] sm:$0xff] 0.0
      %39 = vst [vmem:[#allocation2 + $0xa0] sm:$0xff] 0.0
      %40 = vst [vmem:[#allocation2 + $0xa8] sm:$0xff] 0.0
      %41 = vst [vmem:[#allocation2 + $0xb0] sm:$0xff] 0.0
      %42 = vst [vmem:[#allocation2 + $0xb8] sm:$0xff] 0.0
      %43 = vst [vmem:[#allocation2 + $0xc0] sm:$0xff] 0.0
      %44 = vst [vmem:[#allocation2 + $0xc8] sm:$0xff] 0.0
      %45 = vst [vmem:[#allocation2 + $0xd0] sm:$0xff] 0.0
      %46 = vst [vmem:[#allocation2 + $0xd8] sm:$0xff] 0.0
      %47 = vst [vmem:[#allocation2 + $0xe0] sm:$0xff] 0.0
      %48 = vst [vmem:[#allocation2 + $0xe8] sm:$0xff] 0.0
      %49 = vst [vmem:[#allocation2 + $0xf0] sm:$0xff] 0.0
      %50 = vst [vmem:[#allocation2 + $0xf8] sm:$0xff] 0.0
    $region17: #{xca_forward.5} parent=1 // pred_fallthru
      _
    %v51 = vld [vmem:[#allocation2] sm:$0xff]
    %v52 = vld [vmem:[#allocation2 + $0x8] sm:$0xff]
    %v53 = vld [vmem:[#allocation2 + $0x10] sm:$0xff]
    %v54 = vld [vmem:[#allocation2 + $0x18] sm:$0xff]
    %v55 = vld [vmem:[#allocation2 + $0x20] sm:$0xff]
    %v56 = vld [vmem:[#allocation2 + $0x28] sm:$0xff]
    %v57 = vld [vmem:[#allocation2 + $0x30] sm:$0xff]
    %v58 = vld [vmem:[#allocation2 + $0x38] sm:$0xff]
    %v59 = vld [vmem:[#allocation2 + $0x40] sm:$0xff]
    %v60 = vld [vmem:[#allocation2 + $0x48] sm:$0xff]
    %v61 = vld [vmem:[#allocation2 + $0x50] sm:$0xff]
    %v62 = vld [vmem:[#allocation2 + $0x58] sm:$0xff]
    %v63 = vld [vmem:[#allocation2 + $0x60] sm:$0xff]
    %v64 = vld [vmem:[#allocation2 + $0x68] sm:$0xff]
    %v65 = vld [vmem:[#allocation2 + $0x70] sm:$0xff]
    %v66 = vld [vmem:[#allocation2 + $0x78] sm:$0xff]
    %v67 = vld [vmem:[#allocation2 + $0x80] sm:$0xff]
    %v68 = vld [vmem:[#allocation2 + $0x88] sm:$0xff]
    %v69 = vld [vmem:[#allocation2 + $0x90] sm:$0xff]
    %v70 = vld [vmem:[#allocation2 + $0x98] sm:$0xff]
    %v71 = vld [vmem:[#allocation2 + $0xa0] sm:$0xff]
    %v72 = vld [vmem:[#allocation2 + $0xa8] sm:$0xff]
    %v73 = vld [vmem:[#allocation2 + $0xb0] sm:$0xff]
    %v74 = vld [vmem:[#allocation2 + $0xb8] sm:$0xff]
    %v75 = vld [vmem:[#allocation2 + $0xc0] sm:$0xff]
    %v76 = vld [vmem:[#allocation2 + $0xc8] sm:$0xff]
    %v77 = vld [vmem:[#allocation2 + $0xd0] sm:$0xff]
    %v78 = vld [vmem:[#allocation2 + $0xd8] sm:$0xff]
    %v79 = vld [vmem:[#allocation2 + $0xe0] sm:$0xff]
    %v80 = vld [vmem:[#allocation2 + $0xe8] sm:$0xff]
    %v81 = vld [vmem:[#allocation2 + $0xf0] sm:$0xff]
    %v82 = vld [vmem:[#allocation2 + $0xf8] sm:$0xff]
    %v83 = vld [vmem:[%s0] sm:$0xff]
    %v84 = vld [vmem:[%s0 + $0x8] sm:$0xff]
    %v85 = vld [vmem:[%s0 + $0x10] sm:$0xff]
    %v86 = vld [vmem:[%s0 + $0x18] sm:$0xff]
    %v87 = vld [vmem:[%s0 + $0x20] sm:$0xff]
    %v88 = vld [vmem:[%s0 + $0x28] sm:$0xff]
    %v89 = vld [vmem:[%s0 + $0x30] sm:$0xff]
    %v90 = vld [vmem:[%s0 + $0x38] sm:$0xff]
    %v91 = vld [vmem:[%s0 + $0x40] sm:$0xff]
    %v92 = vld [vmem:[%s0 + $0x48] sm:$0xff]
    %v93 = vld [vmem:[%s0 + $0x50] sm:$0xff]
    %v94 = vld [vmem:[%s0 + $0x58] sm:$0xff]
    %v95 = vld [vmem:[%s0 + $0x60] sm:$0xff]
    %v96 = vld [vmem:[%s0 + $0x68] sm:$0xff]
    %v97 = vld [vmem:[%s0 + $0x70] sm:$0xff]
    %v98 = vld [vmem:[%s0 + $0x78] sm:$0xff]
    %v99 = vld [vmem:[%s0 + $0x80] sm:$0xff]
    %v100 = vld [vmem:[%s0 + $0x88] sm:$0xff]
    %v101 = vld [vmem:[%s0 + $0x90] sm:$0xff]
    %v102 = vld [vmem:[%s0 + $0x98] sm:$0xff]
    %v103 = vld [vmem:[%s0 + $0xa0] sm:$0xff]
    %v104 = vld [vmem:[%s0 + $0xa8] sm:$0xff]
    %v105 = vld [vmem:[%s0 + $0xb0] sm:$0xff]
    %v106 = vld [vmem:[%s0 + $0xb8] sm:$0xff]
    %v107 = vld [vmem:[%s0 + $0xc0] sm:$0xff]
    %v108 = vld [vmem:[%s0 + $0xc8] sm:$0xff]
    %v109 = vld [vmem:[%s0 + $0xd0] sm:$0xff]
    %v110 = vld [vmem:[%s0 + $0xd8] sm:$0xff]
    %v111 = vld [vmem:[%s0 + $0xe0] sm:$0xff]
    %v112 = vld [vmem:[%s0 + $0xe8] sm:$0xff]
    %v113 = vld [vmem:[%s0 + $0xf0] sm:$0xff]
    %v114 = vld [vmem:[%s0 + $0xf8] sm:$0xff]
    %v115 = vld [vmem:[%s1] sm:$0xff]
    %v116 = vld [vmem:[%s1 + $0x8] sm:$0xff]
    %v117 = vld [vmem:[%s1 + $0x10] sm:$0xff]
    %v118 = vld [vmem:[%s1 + $0x18] sm:$0xff]
    %v119 = vld [vmem:[%s1 + $0x20] sm:$0xff]
    %v120 = vld [vmem:[%s1 + $0x28] sm:$0xff]
    %v121 = vld [vmem:[%s1 + $0x30] sm:$0xff]
    %v122 = vld [vmem:[%s1 + $0x38] sm:$0xff]
    %v123 = vld [vmem:[%s1 + $0x40] sm:$0xff]
    %v124 = vld [vmem:[%s1 + $0x48] sm:$0xff]
    %v125 = vld [vmem:[%s1 + $0x50] sm:$0xff]
    %v126 = vld [vmem:[%s1 + $0x58] sm:$0xff]
    %v127 = vld [vmem:[%s1 + $0x60] sm:$0xff]
    %v128 = vld [vmem:[%s1 + $0x68] sm:$0xff]
    %v129 = vld [vmem:[%s1 + $0x70] sm:$0xff]
    %v130 = vld [vmem:[%s1 + $0x78] sm:$0xff]
    %131 = vmatprep.subr.mxu0 0.0
    %132 = vmatpush1.msra.mxu0 %v115
    %133 = vmatprep.subr.mxu0 0.0
    %134 = vmatpush1.msra.mxu0 %v116
    %135 = vmatprep.subr.mxu0 0.0
    %136 = vmatpush1.msra.mxu0 %v117
    %137 = vmatprep.subr.mxu0 0.0
    %138 = vmatpush1.msra.mxu0 %v118
    %139 = vmatprep.subr.mxu0 0.0
    %140 = vmatpush1.msra.mxu0 %v119
    %141 = vmatprep.subr.mxu0 0.0
    %142 = vmatpush1.msra.mxu0 %v120
    %143 = vmatprep.subr.mxu0 0.0
    %144 = vmatpush1.msra.mxu0 %v121
    %145 = vmatprep.subr.mxu0 0.0
    %146 = vmatpush1.msra.mxu0 %v122
    %147 = vmatprep.subr.mxu0 0.0
    %148 = vmatpush1.msra.mxu0 %v123
    %149 = vmatprep.subr.mxu0 0.0
    %150 = vmatpush1.msra.mxu0 %v124
    %151 = vmatprep.subr.mxu0 0.0
    %152 = vmatpush1.msra.mxu0 %v125
    %153 = vmatprep.subr.mxu0 0.0
    %154 = vmatpush1.msra.mxu0 %v126
    %155 = vmatprep.subr.mxu0 0.0
    %156 = vmatpush1.msra.mxu0 %v127
    %157 = vmatprep.subr.mxu0 0.0
    %158 = vmatpush1.msra.mxu0 %v128
    %159 = vmatprep.subr.mxu0 0.0
    %160 = vmatpush1.msra.mxu0 %v129
    %161 = vmatprep.subr.mxu0 0.0
    %162 = vmatpush1.msra.mxu0 %v130
    %163 = vmatprep.subr.mxu0 0.0
    %164 = vmatpush1.msra.mxu0 0.0
    %165 = vmatprep.subr.mxu0 0.0
    %166 = vmatpush1.msra.mxu0 0.0
    %167 = vmatprep.subr.mxu0 0.0
    %168 = vmatpush1.msra.mxu0 0.0
    %169 = vmatprep.subr.mxu0 0.0
    %170 = vmatpush1.msra.mxu0 0.0
    %171 = vmatprep.subr.mxu0 0.0
    %172 = vmatpush1.msra.mxu0 0.0
    %173 = vmatprep.subr.mxu0 0.0
    %174 = vmatpush1.msra.mxu0 0.0
    %175 = vmatprep.subr.mxu0 0.0
    %176 = vmatpush1.msra.mxu0 0.0
    %177 = vmatprep.subr.mxu0 0.0
    %178 = vmatpush1.msra.mxu0 0.0
    %179 = vmatprep.subr.mxu0 0.0
    %180 = vmatpush1.msra.mxu0 0.0
    %181 = vmatprep.subr.mxu0 0.0
    %182 = vmatpush1.msra.mxu0 0.0
    %183 = vmatprep.subr.mxu0 0.0
    %184 = vmatpush1.msra.mxu0 0.0
    %185 = vmatprep.subr.mxu0 0.0
    %186 = vmatpush1.msra.mxu0 0.0
    %187 = vmatprep.subr.mxu0 0.0
    %188 = vmatpush1.msra.mxu0 0.0
    %189 = vmatprep.subr.mxu0 0.0
    %190 = vmatpush1.msra.mxu0 0.0
    %191 = vmatprep.subr.mxu0 0.0
    %192 = vmatpush1.msra.mxu0 0.0
    %193 = vmatprep.subr.mxu0 0.0
    %194 = vmatpush1.msra.mxu0 0.0
    %195 = vmatprep.mubr.f32.mxu0 0.0
    %196 = vmatmul.mubr.f32.gmra.mrb[0].mxu0 %v83
    %v197 = vpop.f32.mrb[0].mxu0
    %v198 = vadd.f32 0.0, %v197
    %v199 = vpop.f32.mrb[0].mxu0
    %200 = vmatprep.mubr.f32.mxu0 0.0
    %201 = vmatmul.mubr.f32.gmra.mrb[0].mxu0 %v84
    %v202 = vpop.f32.mrb[0].mxu0
    %v203 = vadd.f32 0.0, %v202
    %v204 = vpop.f32.mrb[0].mxu0
    %205 = vmatprep.mubr.f32.mxu0 0.0
    %206 = vmatmul.mubr.f32.gmra.mrb[0].mxu0 %v85
    %v207 = vpop.f32.mrb[0].mxu0
    %v208 = vadd.f32 0.0, %v207
    %v209 = vpop.f32.mrb[0].mxu0
    %210 = vmatprep.mubr.f32.mxu0 0.0
    %211 = vmatmul.mubr.f32.gmra.mrb[0].mxu0 %v86
    %v212 = vpop.f32.mrb[0].mxu0
    %v213 = vadd.f32 0.0, %v212
    %v214 = vpop.f32.mrb[0].mxu0
    %215 = vmatprep.mubr.f32.mxu0 0.0
    %216 = vmatmul.mubr.f32.gmra.mrb[0].mxu0 %v87
    %v217 = vpop.f32.mrb[0].mxu0
    %v218 = vadd.f32 0.0, %v217
    %v219 = vpop.f32.mrb[0].mxu0
    %220 = vmatprep.mubr.f32.mxu0 0.0
    %221 = vmatmul.mubr.f32.gmra.mrb[0].mxu0 %v88
    %v222 = vpop.f32.mrb[0].mxu0
    %v223 = vadd.f32 0.0, %v222
    %v224 = vpop.f32.mrb[0].mxu0
    %225 = vmatprep.mubr.f32.mxu0 0.0
    %226 = vmatmul.mubr.f32.gmra.mrb[0].mxu0 %v89
    %v227 = vpop.f32.mrb[0].mxu0
    %v228 = vadd.f32 0.0, %v227
    %v229 = vpop.f32.mrb[0].mxu0
    %230 = vmatprep.mubr.f32.mxu0 0.0
    %231 = vmatmul.mubr.f32.gmra.mrb[0].mxu0 %v90
    %v232 = vpop.f32.mrb[0].mxu0
    %v233 = vadd.f32 0.0, %v232
    %v234 = vpop.f32.mrb[0].mxu0
    %235 = vmatprep.mubr.f32.mxu0 0.0
    %236 = vmatmul.mubr.f32.gmra.mrb[0].mxu0 %v91
    %v237 = vpop.f32.mrb[0].mxu0
    %v238 = vadd.f32 0.0, %v237
    %v239 = vpop.f32.mrb[0].mxu0
    %240 = vmatprep.mubr.f32.mxu0 0.0
    %241 = vmatmul.mubr.f32.gmra.mrb[0].mxu0 %v92
    %v242 = vpop.f32.mrb[0].mxu0
    %v243 = vadd.f32 0.0, %v242
    %v244 = vpop.f32.mrb[0].mxu0
    %245 = vmatprep.mubr.f32.mxu0 0.0
    %246 = vmatmul.mubr.f32.gmra.mrb[0].mxu0 %v93
    %v247 = vpop.f32.mrb[0].mxu0
    %v248 = vadd.f32 0.0, %v247
    %v249 = vpop.f32.mrb[0].mxu0
    %250 = vmatprep.mubr.f32.mxu0 0.0
    %251 = vmatmul.mubr.f32.gmra.mrb[0].mxu0 %v94
    %v252 = vpop.f32.mrb[0].mxu0
    %v253 = vadd.f32 0.0, %v252
    %v254 = vpop.f32.mrb[0].mxu0
    %255 = vmatprep.mubr.f32.mxu0 0.0
    %256 = vmatmul.mubr.f32.gmra.mrb[0].mxu0 %v95
    %v257 = vpop.f32.mrb[0].mxu0
    %v258 = vadd.f32 0.0, %v257
    %v259 = vpop.f32.mrb[0].mxu0
    %260 = vmatprep.mubr.f32.mxu0 0.0
    %261 = vmatmul.mubr.f32.gmra.mrb[0].mxu0 %v96
    %v262 = vpop.f32.mrb[0].mxu0
    %v263 = vadd.f32 0.0, %v262
    %v264 = vpop.f32.mrb[0].mxu0
    %265 = vmatprep.mubr.f32.mxu0 0.0
    %266 = vmatmul.mubr.f32.gmra.mrb[0].mxu0 %v97
    %v267 = vpop.f32.mrb[0].mxu0
    %v268 = vadd.f32 0.0, %v267
    %v269 = vpop.f32.mrb[0].mxu0
    %270 = vmatprep.mubr.f32.mxu0 0.0
    %271 = vmatmul.mubr.f32.gmra.mrb[0].mxu0 %v98
    %v272 = vpop.f32.mrb[0].mxu0
    %v273 = vadd.f32 0.0, %v272
    %v274 = vpop.f32.mrb[0].mxu0
    %275 = vmatprep.mubr.f32.mxu0 0.0
    %276 = vmatmul.mubr.f32.gmra.mrb[0].mxu0 %v99
    %v277 = vpop.f32.mrb[0].mxu0
    %v278 = vadd.f32 0.0, %v277
    %v279 = vpop.f32.mrb[0].mxu0
    %280 = vmatprep.mubr.f32.mxu0 0.0
    %281 = vmatmul.mubr.f32.gmra.mrb[0].mxu0 %v100
    %v282 = vpop.f32.mrb[0].mxu0
    %v283 = vadd.f32 0.0, %v282
    %v284 = vpop.f32.mrb[0].mxu0
    %285 = vmatprep.mubr.f32.mxu0 0.0
    %286 = vmatmul.mubr.f32.gmra.mrb[0].mxu0 %v101
    %v287 = vpop.f32.mrb[0].mxu0
    %v288 = vadd.f32 0.0, %v287
    %v289 = vpop.f32.mrb[0].mxu0
    %290 = vmatprep.mubr.f32.mxu0 0.0
    %291 = vmatmul.mubr.f32.gmra.mrb[0].mxu0 %v102
    %v292 = vpop.f32.mrb[0].mxu0
    %v293 = vadd.f32 0.0, %v292
    %v294 = vpop.f32.mrb[0].mxu0
    %295 = vmatprep.mubr.f32.mxu0 0.0
    %296 = vmatmul.mubr.f32.gmra.mrb[0].mxu0 %v103
    %v297 = vpop.f32.mrb[0].mxu0
    %v298 = vadd.f32 0.0, %v297
    %v299 = vpop.f32.mrb[0].mxu0
    %300 = vmatprep.mubr.f32.mxu0 0.0
    %301 = vmatmul.mubr.f32.gmra.mrb[0].mxu0 %v104
    %v302 = vpop.f32.mrb[0].mxu0
    %v303 = vadd.f32 0.0, %v302
    %v304 = vpop.f32.mrb[0].mxu0
    %305 = vmatprep.mubr.f32.mxu0 0.0
    %306 = vmatmul.mubr.f32.gmra.mrb[0].mxu0 %v105
    %v307 = vpop.f32.mrb[0].mxu0
    %v308 = vadd.f32 0.0, %v307
    %v309 = vpop.f32.mrb[0].mxu0
    %310 = vmatprep.mubr.f32.mxu0 0.0
    %311 = vmatmul.mubr.f32.gmra.mrb[0].mxu0 %v106
    %v312 = vpop.f32.mrb[0].mxu0
    %v313 = vadd.f32 0.0, %v312
    %v314 = vpop.f32.mrb[0].mxu0
    %315 = vmatprep.mubr.f32.mxu0 0.0
    %316 = vmatmul.mubr.f32.gmra.mrb[0].mxu0 %v107
    %v317 = vpop.f32.mrb[0].mxu0
    %v318 = vadd.f32 0.0, %v317
    %v319 = vpop.f32.mrb[0].mxu0
    %320 = vmatprep.mubr.f32.mxu0 0.0
    %321 = vmatmul.mubr.f32.gmra.mrb[0].mxu0 %v108
    %v322 = vpop.f32.mrb[0].mxu0
    %v323 = vadd.f32 0.0, %v322
    %v324 = vpop.f32.mrb[0].mxu0
    %325 = vmatprep.mubr.f32.mxu0 0.0
    %326 = vmatmul.mubr.f32.gmra.mrb[0].mxu0 %v109
    %v327 = vpop.f32.mrb[0].mxu0
    %v328 = vadd.f32 0.0, %v327
    %v329 = vpop.f32.mrb[0].mxu0
    %330 = vmatprep.mubr.f32.mxu0 0.0
    %331 = vmatmul.mubr.f32.gmra.mrb[0].mxu0 %v110
    %v332 = vpop.f32.mrb[0].mxu0
    %v333 = vadd.f32 0.0, %v332
    %v334 = vpop.f32.mrb[0].mxu0
    %335 = vmatprep.mubr.f32.mxu0 0.0
    %336 = vmatmul.mubr.f32.gmra.mrb[0].mxu0 %v111
    %v337 = vpop.f32.mrb[0].mxu0
    %v338 = vadd.f32 0.0, %v337
    %v339 = vpop.f32.mrb[0].mxu0
    %340 = vmatprep.mubr.f32.mxu0 0.0
    %341 = vmatmul.mubr.f32.gmra.mrb[0].mxu0 %v112
    %v342 = vpop.f32.mrb[0].mxu0
    %v343 = vadd.f32 0.0, %v342
    %v344 = vpop.f32.mrb[0].mxu0
    %345 = vmatprep.mubr.f32.mxu0 0.0
    %346 = vmatmul.mubr.f32.gmra.mrb[0].mxu0 %v113
    %v347 = vpop.f32.mrb[0].mxu0
    %v348 = vadd.f32 0.0, %v347
    %v349 = vpop.f32.mrb[0].mxu0
    %350 = vmatprep.mubr.f32.mxu0 0.0
    %351 = vmatmul.mubr.f32.gmra.mrb[0].mxu0 %v114
    %v352 = vpop.f32.mrb[0].mxu0
    %v353 = vadd.f32 0.0, %v352
    %v354 = vpop.f32.mrb[0].mxu0
    %355 = vdwg.mxu0
    %v356 = vadd.f32 %v51, %v198
    %v357 = vadd.f32 %v52, %v203
    %v358 = vadd.f32 %v53, %v208
    %v359 = vadd.f32 %v54, %v213
    %v360 = vadd.f32 %v55, %v218
    %v361 = vadd.f32 %v56, %v223
    %v362 = vadd.f32 %v57, %v228
    %v363 = vadd.f32 %v58, %v233
    %v364 = vadd.f32 %v59, %v238
    %v365 = vadd.f32 %v60, %v243
    %v366 = vadd.f32 %v61, %v248
    %v367 = vadd.f32 %v62, %v253
    %v368 = vadd.f32 %v63, %v258
    %v369 = vadd.f32 %v64, %v263
    %v370 = vadd.f32 %v65, %v268
    %v371 = vadd.f32 %v66, %v273
    %v372 = vadd.f32 %v67, %v278
    %v373 = vadd.f32 %v68, %v283
    %v374 = vadd.f32 %v69, %v288
    %v375 = vadd.f32 %v70, %v293
    %v376 = vadd.f32 %v71, %v298
    %v377 = vadd.f32 %v72, %v303
    %v378 = vadd.f32 %v73, %v308
    %v379 = vadd.f32 %v74, %v313
    %v380 = vadd.f32 %v75, %v318
    %v381 = vadd.f32 %v76, %v323
    %v382 = vadd.f32 %v77, %v328
    %v383 = vadd.f32 %v78, %v333
    %v384 = vadd.f32 %v79, %v338
    %v385 = vadd.f32 %v80, %v343
    %v386 = vadd.f32 %v81, %v348
    %v387 = vadd.f32 %v82, %v353
    %388 = vst [vmem:[#allocation2] sm:$0xff] %v356
    %389 = vst [vmem:[#allocation2 + $0x8] sm:$0xff] %v357
    %390 = vst [vmem:[#allocation2 + $0x10] sm:$0xff] %v358
    %391 = vst [vmem:[#allocation2 + $0x18] sm:$0xff] %v359
    %392 = vst [vmem:[#allocation2 + $0x20] sm:$0xff] %v360
    %393 = vst [vmem:[#allocation2 + $0x28] sm:$0xff] %v361
    %394 = vst [vmem:[#allocation2 + $0x30] sm:$0xff] %v362
    %395 = vst [vmem:[#allocation2 + $0x38] sm:$0xff] %v363
    %396 = vst [vmem:[#allocation2 + $0x40] sm:$0xff] %v364
    %397 = vst [vmem:[#allocation2 + $0x48] sm:$0xff] %v365
    %398 = vst [vmem:[#allocation2 + $0x50] sm:$0xff] %v366
    %399 = vst [vmem:[#allocation2 + $0x58] sm:$0xff] %v367
    %400 = vst [vmem:[#allocation2 + $0x60] sm:$0xff] %v368
    %401 = vst [vmem:[#allocation2 + $0x68] sm:$0xff] %v369
    %402 = vst [vmem:[#allocation2 + $0x70] sm:$0xff] %v370
    %403 = vst [vmem:[#allocation2 + $0x78] sm:$0xff] %v371
    %404 = vst [vmem:[#allocation2 + $0x80] sm:$0xff] %v372
    %405 = vst [vmem:[#allocation2 + $0x88] sm:$0xff] %v373
    %406 = vst [vmem:[#allocation2 + $0x90] sm:$0xff] %v374
    %407 = vst [vmem:[#allocation2 + $0x98] sm:$0xff] %v375
    %408 = vst [vmem:[#allocation2 + $0xa0] sm:$0xff] %v376
    %409 = vst [vmem:[#allocation2 + $0xa8] sm:$0xff] %v377
    %410 = vst [vmem:[#allocation2 + $0xb0] sm:$0xff] %v378
    %411 = vst [vmem:[#allocation2 + $0xb8] sm:$0xff] %v379
    %412 = vst [vmem:[#allocation2 + $0xc0] sm:$0xff] %v380
    %413 = vst [vmem:[#allocation2 + $0xc8] sm:$0xff] %v381
    %414 = vst [vmem:[#allocation2 + $0xd0] sm:$0xff] %v382
    %415 = vst [vmem:[#allocation2 + $0xd8] sm:$0xff] %v383
    %416 = vst [vmem:[#allocation2 + $0xe0] sm:$0xff] %v384
    %417 = vst [vmem:[#allocation2 + $0xe8] sm:$0xff] %v385
    %418 = vst [vmem:[#allocation2 + $0xf0] sm:$0xff] %v386
    %419 = vst [vmem:[#allocation2 + $0xf8] sm:$0xff] %v387
    // Predicated region
    $region18: #{xca_forward.5} parent=1 // pred_check
      %p420 = pneg %p15
    $region19: #{xca_forward.5} parent=1 // pred_check_branch
      %422 = sbr.rel (%p420) target = $region21
    $region20: #{xca_forward.5} parent=1 // pred_region
      %v423 = vld [vmem:[#allocation2] sm:$0xff]
      %v424 = vld [vmem:[#allocation2 + $0x8] sm:$0xff]
      %v425 = vld [vmem:[#allocation2 + $0x10] sm:$0xff]
      %v426 = vld [vmem:[#allocation2 + $0x18] sm:$0xff]
      %v427 = vld [vmem:[#allocation2 + $0x20] sm:$0xff]
      %v428 = vld [vmem:[#allocation2 + $0x28] sm:$0xff]
      %v429 = vld [vmem:[#allocation2 + $0x30] sm:$0xff]
      %v430 = vld [vmem:[#allocation2 + $0x38] sm:$0xff]
      %v431 = vld [vmem:[#allocation2 + $0x40] sm:$0xff]
      %v432 = vld [vmem:[#allocation2 + $0x48] sm:$0xff]
      %v433 = vld [vmem:[#allocation2 + $0x50] sm:$0xff]
      %v434 = vld [vmem:[#allocation2 + $0x58] sm:$0xff]
      %v435 = vld [vmem:[#allocation2 + $0x60] sm:$0xff]
      %v436 = vld [vmem:[#allocation2 + $0x68] sm:$0xff]
      %v437 = vld [vmem:[#allocation2 + $0x70] sm:$0xff]
      %v438 = vld [vmem:[#allocation2 + $0x78] sm:$0xff]
      %v439 = vld [vmem:[#allocation2 + $0x80] sm:$0xff]
      %v440 = vld [vmem:[#allocation2 + $0x88] sm:$0xff]
      %v441 = vld [vmem:[#allocation2 + $0x90] sm:$0xff]
      %v442 = vld [vmem:[#allocation2 + $0x98] sm:$0xff]
      %v443 = vld [vmem:[#allocation2 + $0xa0] sm:$0xff]
      %v444 = vld [vmem:[#allocation2 + $0xa8] sm:$0xff]
      %v445 = vld [vmem:[#allocation2 + $0xb0] sm:$0xff]
      %v446 = vld [vmem:[#allocation2 + $0xb8] sm:$0xff]
      %v447 = vld [vmem:[#allocation2 + $0xc0] sm:$0xff]
      %v448 = vld [vmem:[#allocation2 + $0xc8] sm:$0xff]
      %v449 = vld [vmem:[#allocation2 + $0xd0] sm:$0xff]
      %v450 = vld [vmem:[#allocation2 + $0xd8] sm:$0xff]
      %v451 = vld [vmem:[#allocation2 + $0xe0] sm:$0xff]
      %v452 = vld [vmem:[#allocation2 + $0xe8] sm:$0xff]
      %v453 = vld [vmem:[#allocation2 + $0xf0] sm:$0xff]
      %v454 = vld [vmem:[#allocation2 + $0xf8] sm:$0xff]
      %v455 = vld [vmem:[%s2] sm:$0x1]
      %v457 = vlaneseq
      %v458 = vshrl.u32 %v457, 7
      %v459 = vsub.s32 0, %v458
      %v460 = vrot.slane %v455, %v459
      %v462 = vadd.f32 %v423, %v460
      %v463 = vadd.f32 %v424, %v460
      %v464 = vadd.f32 %v425, %v460
      %v465 = vadd.f32 %v426, %v460
      %v466 = vadd.f32 %v427, %v460
      %v467 = vadd.f32 %v428, %v460
      %v468 = vadd.f32 %v429, %v460
      %v469 = vadd.f32 %v430, %v460
      %v470 = vadd.f32 %v431, %v460
      %v471 = vadd.f32 %v432, %v460
      %v472 = vadd.f32 %v433, %v460
      %v473 = vadd.f32 %v434, %v460
      %v474 = vadd.f32 %v435, %v460
      %v475 = vadd.f32 %v436, %v460
      %v476 = vadd.f32 %v437, %v460
      %v477 = vadd.f32 %v438, %v460
      %v478 = vadd.f32 %v439, %v460
      %v479 = vadd.f32 %v440, %v460
      %v480 = vadd.f32 %v441, %v460
      %v481 = vadd.f32 %v442, %v460
      %v482 = vadd.f32 %v443, %v460
      %v483 = vadd.f32 %v444, %v460
      %v484 = vadd.f32 %v445, %v460
      %v485 = vadd.f32 %v446, %v460
      %v486 = vadd.f32 %v447, %v460
      %v487 = vadd.f32 %v448, %v460
      %v488 = vadd.f32 %v449, %v460
      %v489 = vadd.f32 %v450, %v460
      %v490 = vadd.f32 %v451, %v460
      %v491 = vadd.f32 %v452, %v460
      %v492 = vadd.f32 %v453, %v460
      %v493 = vadd.f32 %v454, %v460
      %494 = vst [vmem:[#allocation3] sm:$0xff] %v462
      %495 = vst [vmem:[#allocation3 + $0x8] sm:$0xff] %v463
      %496 = vst [vmem:[#allocation3 + $0x10] sm:$0xff] %v464
      %497 = vst [vmem:[#allocation3 + $0x18] sm:$0xff] %v465
      %498 = vst [vmem:[#allocation3 + $0x20] sm:$0xff] %v466
      %499 = vst [vmem:[#allocation3 + $0x28] sm:$0xff] %v467
      %500 = vst [vmem:[#allocation3 + $0x30] sm:$0xff] %v468
      %501 = vst [vmem:[#allocation3 + $0x38] sm:$0xff] %v469
      %502 = vst [vmem:[#allocation3 + $0x40] sm:$0xff] %v470
      %503 = vst [vmem:[#allocation3 + $0x48] sm:$0xff] %v471
      %504 = vst [vmem:[#allocation3 + $0x50] sm:$0xff] %v472
      %505 = vst [vmem:[#allocation3 + $0x58] sm:$0xff] %v473
      %506 = vst [vmem:[#allocation3 + $0x60] sm:$0xff] %v474
      %507 = vst [vmem:[#allocation3 + $0x68] sm:$0xff] %v475
      %508 = vst [vmem:[#allocation3 + $0x70] sm:$0xff] %v476
      %509 = vst [vmem:[#allocation3 + $0x78] sm:$0xff] %v477
      %510 = vst [vmem:[#allocation3 + $0x80] sm:$0xff] %v478
      %511 = vst [vmem:[#allocation3 + $0x88] sm:$0xff] %v479
      %512 = vst [vmem:[#allocation3 + $0x90] sm:$0xff] %v480
      %513 = vst [vmem:[#allocation3 + $0x98] sm:$0xff] %v481
      %514 = vst [vmem:[#allocation3 + $0xa0] sm:$0xff] %v482
      %515 = vst [vmem:[#allocation3 + $0xa8] sm:$0xff] %v483
      %516 = vst [vmem:[#allocation3 + $0xb0] sm:$0xff] %v484
      %517 = vst [vmem:[#allocation3 + $0xb8] sm:$0xff] %v485
      %518 = vst [vmem:[#allocation3 + $0xc0] sm:$0xff] %v486
      %519 = vst [vmem:[#allocation3 + $0xc8] sm:$0xff] %v487
      %520 = vst [vmem:[#allocation3 + $0xd0] sm:$0xff] %v488
      %521 = vst [vmem:[#allocation3 + $0xd8] sm:$0xff] %v489
      %522 = vst [vmem:[#allocation3 + $0xe0] sm:$0xff] %v490
      %523 = vst [vmem:[#allocation3 + $0xe8] sm:$0xff] %v491
      %524 = vst [vmem:[#allocation3 + $0xf0] sm:$0xff] %v492
      %525 = vst [vmem:[#allocation3 + $0xf8] sm:$0xff] %v493
    $region21: #{xca_forward.5} parent=1 // pred_fallthru
      _
    // Predicated region
    $region22: #{xca_forward.5} parent=1 // pred_check
      _
    $region23: #{xca_forward.5} parent=1 // pred_check_branch
      %527 = sbr.rel (0) target = $region25
    $region24: #{xca_forward.5} parent=1 // pred_region
      %s529 = ssub.s32 4096, 4096
      %530 = vsyncadd [#allocation4], %s529
      %s531 = sshll.u32 [#allocation3], 4
      %s532 = int_to_ptr.vmem [resolvable:$true] %s531
      %537 = dma.vmem_to_hbm [thread:$0]  %s532, 4096, %s3, [#allocation4], 128, 128, 8
    $region25: #{xca_forward.5} parent=1 // pred_fallthru
      _
    // Predicated region
    $region26: #{xca_forward.5} parent=1 // pred_check
      _
    $region27: #{xca_forward.5} parent=1 // pred_check_branch
      %539 = sbr.rel (0) target = $region29
    $region28: #{xca_forward.5} parent=1 // pred_region
      %540 = dma.done [#allocation4], 4096
    $region29: #{xca_forward.5} parent=1 // pred_fallthru
      _
    %541 = vsyncpa [#allocation4], 1

</llo_original>
